<compile_context>
chip_gen: v7x
topology: tpu7x:2x2x1
jax: 0.10.0
libtpu: 0.0.40
codegen_flags: <defaults>
</compile_context>

<pallas_src>
import jax
import jax.numpy as jnp
import numpy as np
from jax.experimental import pallas as pl
from jax.experimental.pallas import tpu as pltpu

# ----------------------------- configuration --------------------------------
FEATURE_DIM = 8
EMBED_DIMS = (4, 4, 4, 4, 4, 2, 2)          # 7 categorical embeddings (sum=24)
N2V_DIM = 32                                 # Node2Vec embedding_dim=32
TOTAL_D = FEATURE_DIM + sum(EMBED_DIMS) + N2V_DIM   # total_embed_dim = 64
NUM_HEADS = 4
HEAD_DIM = TOTAL_D // NUM_HEADS
D_FF = 64                                    # PositionwiseFeedForward d_ff
OUTPUT_DIM = 8
WINDOW = 5
MID = WINDOW // 2                            # middleOfTheWindow
EPS = 1e-6                                   # LayerNorm eps
NUM_NODES = 17

EMBED_VOCABS = (22, 7, 8, 9, 2, 17, 17)

assert D_FF == TOTAL_D, "weight-slab packing below assumes d_ff == total_embed_dim"


def _round_up(x, m):
    return ((x + m - 1) // m) * m


# ------------------------------- Pallas kernel ------------------------------
def ci_encoder_kernel(x_ref, wqkv_ref, bqkv_ref, redh_ref, exph_ref,
                      wmid_ref, bmid_ref, lnab_ref, wl_ref, bl_ref, o_ref):
    W, TB, D = x_ref.shape                              # (5, TILE_B, 64)

    # ---- fused QKV projection: one big MXU matmul over the whole tile ----
    x2 = x_ref[...].reshape(W * TB, D)                  # bf16, sublane-aligned reshape
    qkv = jnp.dot(x2, wqkv_ref[...],
                  preferred_element_type=jnp.float32) + bqkv_ref[...]   # (W*TB, 3D) f32

    Q = qkv[MID * TB:(MID + 1) * TB, 0:D]               # (TB, D) projected query heads

    red = redh_ref[...]                                 # (D, H) block-diag, scale folded in
    exp = exph_ref[...]                                 # (H, D) block-diag ones

    # ---- per-head scores via (K ⊙ Q) @ block-diag on the MXU ----
    scores = []
    for w in range(W):                                  # static unroll, W == 5
        Kw = qkv[w * TB:(w + 1) * TB, D:2 * D]          # (TB, D)
        scores.append(jnp.dot(Kw * Q, red,
                              preferred_element_type=jnp.float32))      # (TB, H)

    # ---- softmax over the 5 window positions ----
    m = scores[0]
    for w in range(1, W):
        m = jnp.maximum(m, scores[w])
    exps = [jnp.exp(s - m) for s in scores]
    den = exps[0]
    for w in range(1, W):
        den = den + exps[w]
    inv_den = pl.reciprocal(den, approx=True)           # EUP; uniform scale error only

    # ---- weighted sum of V, probability broadcast back to 64 lanes via MXU ----
    attn = None
    for w in range(W):
        p_full = jnp.dot(exps[w] * inv_den, exp,
                         preferred_element_type=jnp.float32)            # (TB, D)
        Vw = qkv[w * TB:(w + 1) * TB, 2 * D:3 * D]
        term = p_full * Vw
        attn = term if attn is None else attn + term

    # ---- unpack consolidated slabs ----
    wo = wmid_ref[:, 0:D]
    w1 = wmid_ref[:, D:D + D_FF]
    w2 = wmid_ref[:, D + D_FF:D + D_FF + D]
    bo = bmid_ref[:, 0:D]
    b1 = bmid_ref[:, D:D + D_FF]
    b2 = bmid_ref[:, D + D_FF:D + D_FF + D]
    ln_a = lnab_ref[0:1, :]
    ln_b = lnab_ref[1:2, :]

    attn = jnp.dot(attn, wo, preferred_element_type=jnp.float32) + bo   # (TB, D)

    def layer_norm(v):
        # matches torch: std is unbiased (N-1); denominator is (std + eps)
        mean = jnp.mean(v, axis=-1, keepdims=True)
        var = jnp.sum((v - mean) ** 2, axis=-1, keepdims=True) * (1.0 / (D - 1))
        std = jnp.sqrt(var)
        return ln_a * (v - mean) / (std + EPS) + ln_b

    # residual uses the raw (pre-projection) middle-of-window features
    q_res = x_ref[MID].astype(jnp.float32)              # (TB, D)
    y = layer_norm(q_res + attn)

    # positionwise feed-forward: Linear -> ReLU -> Linear, residual + norm
    h1 = jnp.maximum(
        jnp.dot(y, w1, preferred_element_type=jnp.float32) + b1, 0.0)
    ff = jnp.dot(h1, w2, preferred_element_type=jnp.float32) + b2
    y2 = layer_norm(y + ff)

    # output head + Softplus
    out = jnp.dot(y2, wl_ref[...],
                  preferred_element_type=jnp.float32) + bl_ref[...]     # (TB, 8)
    o_ref[...] = jnp.maximum(out, 0.0) + jnp.log(1.0 + jnp.exp(-jnp.abs(out)))


# ------------------------------ wrapper / packing ----------------------------
def _head_matrices():
    lane = np.arange(TOTAL_D)[:, None] // HEAD_DIM      # (64, 1)
    head = np.arange(NUM_HEADS)[None, :]                # (1, 4)
    blockdiag = (lane == head).astype(np.float32)       # (64, 4)
    reduce_heads = blockdiag / np.sqrt(HEAD_DIM)        # score scale folded in
    expand_heads = blockdiag.T.copy()                   # (4, 64)
    return jnp.asarray(reduce_heads), jnp.asarray(expand_heads)


def _pack_params(p):
    w_qkv = jnp.concatenate([p['wq_t'], p['wk_t'], p['wv_t']],
                            axis=1).astype(jnp.bfloat16)                # (64, 192)
    b_qkv = jnp.concatenate([p['bq'], p['bk'], p['bv']],
                            axis=1).astype(jnp.float32)                 # (1, 192)
    w_mid = jnp.concatenate([p['wo_t'], p['w1_t'], p['w2_t']],
                            axis=1).astype(jnp.float32)                 # (64, 192)
    b_mid = jnp.concatenate([p['bo'], p['b1'], p['b2']],
                            axis=1).astype(jnp.float32)                 # (1, 192)
    ln_ab = jnp.concatenate([p['ln_a'], p['ln_b']],
                            axis=0).astype(jnp.float32)                 # (2, 64)
    return w_qkv, b_qkv, w_mid, b_mid, ln_ab, p['wl_t'], p['bl']


def ci_encoder_pallas(x_cat, params, tile_b=None):
    """x_cat: (B, W, TOTAL_D) float32 -> (B, OUTPUT_DIM) float32."""
    B = x_cat.shape[0]
    if tile_b is None:
        tile_b = min(1024, _round_up(B, 128))   # review: 512-2048; stays well under VMEM
    tile_b = _round_up(tile_b, 128)             # keeps M = 5*tile_b a multiple of 128/256
    Bp = _round_up(B, tile_b)
    grid = (Bp // tile_b,)

    # (B, W, D) -> (W, Bp, D): window-major ordering keeps per-position K/V
    # slabs contiguous along sublanes inside the kernel.
    x_t = jnp.transpose(x_cat, (1, 0, 2))
    x_t = jnp.pad(x_t, ((0, 0), (0, Bp - B), (0, 0)))
    x_bf = x_t.astype(jnp.bfloat16)

    w_qkv, b_qkv, w_mid, b_mid, ln_ab, wl, bl = _pack_params(params)
    red_h, exp_h = _head_matrices()

    weights = (w_qkv, b_qkv, red_h, exp_h, w_mid, b_mid, ln_ab, wl, bl)
    in_specs = [pl.BlockSpec((WINDOW, tile_b, TOTAL_D), lambda i: (0, i, 0))]
    in_specs += [pl.BlockSpec(w.shape, lambda i: (0, 0)) for w in weights]

    out = pl.pallas_call(
        ci_encoder_kernel,
        out_shape=jax.ShapeDtypeStruct((Bp, OUTPUT_DIM), jnp.float32),
        grid=grid,
        in_specs=in_specs,
        out_specs=pl.BlockSpec((tile_b, OUTPUT_DIM), lambda i: (i, 0)),
        compiler_params=pltpu.CompilerParams(
            dimension_semantics=("parallel",)),     # lets v7x shard batch tiles over 2 TCs
    )(x_bf, *weights)
    return out[:B]


# ------------------------------- plain-JAX glue ------------------------------
def init_params(key):
    keys = jax.random.split(key, 32)

    def nrm(k, shape, scale=0.1):
        return (scale * jax.random.normal(k, shape)).astype(jnp.float32)

    D = TOTAL_D
    p = {}
    p['emb_tables'] = [nrm(keys[i], (EMBED_VOCABS[i], EMBED_DIMS[i]))
                       for i in range(7)]
    p['n2v_table'] = nrm(keys[7], (NUM_NODES, N2V_DIM))
    p['wq_t'] = nrm(keys[8], (D, D))
    p['wk_t'] = nrm(keys[9], (D, D))
    p['wv_t'] = nrm(keys[10], (D, D))
    p['bq'] = nrm(keys[11], (1, D))
    p['bk'] = nrm(keys[12], (1, D))
    p['bv'] = nrm(keys[13], (1, D))
    p['wo_t'] = nrm(keys[14], (D, D))
    p['bo'] = nrm(keys[15], (1, D))
    p['ln_a'] = jnp.ones((1, D), jnp.float32)     # LayerNorm a_2 = ones
    p['ln_b'] = jnp.zeros((1, D), jnp.float32)    # LayerNorm b_2 = zeros
    p['w1_t'] = nrm(keys[16], (D, D_FF))
    p['b1'] = nrm(keys[17], (1, D_FF))
    p['w2_t'] = nrm(keys[18], (D_FF, D))
    p['b2'] = nrm(keys[19], (1, D))
    p['wl_t'] = nrm(keys[20], (D, OUTPUT_DIM))
    p['bl'] = nrm(keys[21], (1, OUTPUT_DIM))
    return p


def embed_and_concat(x, c, ids, p):
    """x: (B,W,FEATURE_DIM) float, c: (B,7,W) int, ids: (B,W) int -> (B,W,D)."""
    parts = [x]
    for k in range(7):
        parts.append(jnp.take(p['emb_tables'][k], c[:, k, :], axis=0))
    parts.append(jnp.take(p['n2v_table'], ids, axis=0))
    return jnp.concatenate(parts, axis=-1).astype(jnp.float32)


def reference(x_cat, p):
    """Pure-JAX reference of the attention/norm/FFN/head path.

    Uses the same bf16 rounding of x and the QKV weights that the kernel uses
    (everything else, including all accumulation, stays f32)."""
    xr = x_cat.astype(jnp.bfloat16).astype(jnp.float32)
    wq = p['wq_t'].astype(jnp.bfloat16).astype(jnp.float32)
    wk = p['wk_t'].astype(jnp.bfloat16).astype(jnp.float32)
    wv = p['wv_t'].astype(jnp.bfloat16).astype(jnp.float32)

    B = xr.shape[0]
    q_in = xr[:, MID, :]                                       # (B, D)
    Q = q_in @ wq + p['bq']
    K = xr @ wk + p['bk']
    V = xr @ wv + p['bv']
    Qh = Q.reshape(B, NUM_HEADS, HEAD_DIM)
    Kh = K.reshape(B, WINDOW, NUM_HEADS, HEAD_DIM)
    Vh = V.reshape(B, WINDOW, NUM_HEADS, HEAD_DIM)
    s = jnp.einsum('bhd,bwhd->bhw', Qh, Kh) / (HEAD_DIM ** 0.5)
    pw = jax.nn.softmax(s, axis=-1)
    o = jnp.einsum('bhw,bwhd->bhd', pw, Vh).reshape(B, TOTAL_D)
    attn = o @ p['wo_t'] + p['bo']

    def ln(v):
        mean = jnp.mean(v, -1, keepdims=True)
        std = jnp.sqrt(jnp.sum((v - mean) ** 2, -1, keepdims=True) / (TOTAL_D - 1))
        return p['ln_a'] * (v - mean) / (std + EPS) + p['ln_b']

    y = ln(q_in + attn)
    ff = jnp.maximum(y @ p['w1_t'] + p['b1'], 0.0) @ p['w2_t'] + p['b2']
    y2 = ln(y + ff)
    out = y2 @ p['wl_t'] + p['bl']
    return jnp.maximum(out, 0.0) + jnp.log(1.0 + jnp.exp(-jnp.abs(out)))


# ----------------------------------- main ------------------------------------
if __name__ == "__main__":
    key = jax.random.PRNGKey(0)
    kp, kx, kc, kid = jax.random.split(key, 4)
    params = init_params(kp)

    # Small demo batch; tile_b=128 forces a 3-step grid with a padded tail
    # (production default would be tile_b=1024 per the perf review).
    B = 300
    x = (0.5 * jax.random.normal(kx, (B, WINDOW, FEATURE_DIM))).astype(jnp.float32)
    ckeys = jax.random.split(kc, 7)
    c = jnp.stack(
        [jax.random.randint(ckeys[k], (B, WINDOW), 0, EMBED_VOCABS[k])
         for k in range(7)], axis=1).astype(jnp.int32)          # (B, 7, W)
    ids = jax.random.randint(kid, (B, WINDOW), 0, NUM_NODES).astype(jnp.int32)

    x_cat = embed_and_concat(x, c, ids, params)                 # (B, W, 64)
    out = ci_encoder_pallas(x_cat, params, tile_b=128)          # (B, 8)
    out = jax.block_until_ready(out)

    ref = reference(x_cat, params)
    np.testing.assert_allclose(np.asarray(out), np.asarray(ref),
                               atol=2e-3, rtol=2e-3)
    print("KERNEL_OK")
</pallas_src>

<mosaic_0001>
module attributes {stable_mosaic.version = 11 : i64} {
  func.func @ci_encoder_kernel(%arg0: i32, %arg1: memref<5x128x64xbf16, #tpu.memory_space<vmem>>, %arg2: memref<64x192xbf16, #tpu.memory_space<vmem>>, %arg3: memref<1x192xf32, #tpu.memory_space<vmem>>, %arg4: memref<64x4xf32, #tpu.memory_space<vmem>>, %arg5: memref<4x64xf32, #tpu.memory_space<vmem>>, %arg6: memref<64x192xf32, #tpu.memory_space<vmem>>, %arg7: memref<1x192xf32, #tpu.memory_space<vmem>>, %arg8: memref<2x64xf32, #tpu.memory_space<vmem>>, %arg9: memref<64x8xf32, #tpu.memory_space<vmem>>, %arg10: memref<1x8xf32, #tpu.memory_space<vmem>>, %arg11: memref<128x8xf32, #tpu.memory_space<vmem>>) attributes {dimension_semantics = [#tpu.dimension_semantics<parallel>], iteration_bounds = array<i64: 3>, scalar_prefetch = 0 : i64, scratch_operands = 0 : i64, tpu.core_type = #tpu.core_type<tc>, window_params = [{transform_indices = @transform_0, window_bounds = array<i64: 5, 128, 64>}, {pipeline_mode = #tpu.pipeline_mode<synchronous>, transform_indices = @transform_1, window_bounds = array<i64: 64, 192>}, {pipeline_mode = #tpu.pipeline_mode<synchronous>, transform_indices = @transform_2, window_bounds = array<i64: 1, 192>}, {pipeline_mode = #tpu.pipeline_mode<synchronous>, transform_indices = @transform_3, window_bounds = array<i64: 64, 4>}, {pipeline_mode = #tpu.pipeline_mode<synchronous>, transform_indices = @transform_4, window_bounds = array<i64: 4, 64>}, {pipeline_mode = #tpu.pipeline_mode<synchronous>, transform_indices = @transform_5, window_bounds = array<i64: 64, 192>}, {pipeline_mode = #tpu.pipeline_mode<synchronous>, transform_indices = @transform_6, window_bounds = array<i64: 1, 192>}, {pipeline_mode = #tpu.pipeline_mode<synchronous>, transform_indices = @transform_7, window_bounds = array<i64: 2, 64>}, {pipeline_mode = #tpu.pipeline_mode<synchronous>, transform_indices = @transform_8, window_bounds = array<i64: 64, 8>}, {pipeline_mode = #tpu.pipeline_mode<synchronous>, transform_indices = @transform_9, window_bounds = array<i64: 1, 8>}, {transform_indices = @transform_10, window_bounds = array<i64: 128, 8>}]} {
    %c0 = arith.constant 0 : index
    %c0_0 = arith.constant 0 : index
    %c0_1 = arith.constant 0 : index
    %0 = vector.load %arg1[%c0, %c0_0, %c0_1] : memref<5x128x64xbf16, #tpu.memory_space<vmem>>, vector<5x128x64xbf16>
    %1 = vector.shape_cast %0 : vector<5x128x64xbf16> to vector<640x64xbf16>
    %c0_2 = arith.constant 0 : index
    %c0_3 = arith.constant 0 : index
    %2 = vector.load %arg2[%c0_2, %c0_3] : memref<64x192xbf16, #tpu.memory_space<vmem>>, vector<64x192xbf16>
    %cst = arith.constant dense<0.000000e+00> : vector<640x192xf32>
    %3 = tpu.matmul %1, %2, %cst {dimension_numbers = #tpu.dot_dimension_numbers<[1], [0], [0], [1], [0, 0, 1, 1], [], []>} : vector<640x64xbf16>, vector<64x192xbf16>, vector<640x192xf32> -> vector<640x192xf32>
    %c0_4 = arith.constant 0 : index
    %c0_5 = arith.constant 0 : index
    %4 = vector.load %arg3[%c0_4, %c0_5] : memref<1x192xf32, #tpu.memory_space<vmem>>, vector<1x192xf32>
    %5 = vector.broadcast %4 : vector<1x192xf32> to vector<640x192xf32>
    %6 = arith.addf %3, %5 : vector<640x192xf32>
    %7 = vector.extract_strided_slice %6 {offsets = [256, 0], sizes = [128, 64], strides = [1, 1]} : vector<640x192xf32> to vector<128x64xf32>
    %c0_6 = arith.constant 0 : index
    %c0_7 = arith.constant 0 : index
    %8 = vector.load %arg4[%c0_6, %c0_7] : memref<64x4xf32, #tpu.memory_space<vmem>>, vector<64x4xf32>
    %c0_8 = arith.constant 0 : index
    %c0_9 = arith.constant 0 : index
    %9 = vector.load %arg5[%c0_8, %c0_9] : memref<4x64xf32, #tpu.memory_space<vmem>>, vector<4x64xf32>
    %10 = vector.extract_strided_slice %6 {offsets = [0, 64], sizes = [128, 64], strides = [1, 1]} : vector<640x192xf32> to vector<128x64xf32>
    %11 = arith.mulf %10, %7 : vector<128x64xf32>
    %cst_10 = arith.constant dense<0.000000e+00> : vector<128x4xf32>
    %12 = tpu.matmul %11, %8, %cst_10 {dimension_numbers = #tpu.dot_dimension_numbers<[1], [0], [0], [1], [0, 0, 1, 1], [], []>} : vector<128x64xf32>, vector<64x4xf32>, vector<128x4xf32> -> vector<128x4xf32>
    %13 = vector.extract_strided_slice %6 {offsets = [128, 64], sizes = [128, 64], strides = [1, 1]} : vector<640x192xf32> to vector<128x64xf32>
    %14 = arith.mulf %13, %7 : vector<128x64xf32>
    %cst_11 = arith.constant dense<0.000000e+00> : vector<128x4xf32>
    %15 = tpu.matmul %14, %8, %cst_11 {dimension_numbers = #tpu.dot_dimension_numbers<[1], [0], [0], [1], [0, 0, 1, 1], [], []>} : vector<128x64xf32>, vector<64x4xf32>, vector<128x4xf32> -> vector<128x4xf32>
    %16 = vector.extract_strided_slice %6 {offsets = [256, 64], sizes = [128, 64], strides = [1, 1]} : vector<640x192xf32> to vector<128x64xf32>
    %17 = arith.mulf %16, %7 : vector<128x64xf32>
    %cst_12 = arith.constant dense<0.000000e+00> : vector<128x4xf32>
    %18 = tpu.matmul %17, %8, %cst_12 {dimension_numbers = #tpu.dot_dimension_numbers<[1], [0], [0], [1], [0, 0, 1, 1], [], []>} : vector<128x64xf32>, vector<64x4xf32>, vector<128x4xf32> -> vector<128x4xf32>
    %19 = vector.extract_strided_slice %6 {offsets = [384, 64], sizes = [128, 64], strides = [1, 1]} : vector<640x192xf32> to vector<128x64xf32>
    %20 = arith.mulf %19, %7 : vector<128x64xf32>
    %cst_13 = arith.constant dense<0.000000e+00> : vector<128x4xf32>
    %21 = tpu.matmul %20, %8, %cst_13 {dimension_numbers = #tpu.dot_dimension_numbers<[1], [0], [0], [1], [0, 0, 1, 1], [], []>} : vector<128x64xf32>, vector<64x4xf32>, vector<128x4xf32> -> vector<128x4xf32>
    %22 = vector.extract_strided_slice %6 {offsets = [512, 64], sizes = [128, 64], strides = [1, 1]} : vector<640x192xf32> to vector<128x64xf32>
    %23 = arith.mulf %22, %7 : vector<128x64xf32>
    %cst_14 = arith.constant dense<0.000000e+00> : vector<128x4xf32>
    %24 = tpu.matmul %23, %8, %cst_14 {dimension_numbers = #tpu.dot_dimension_numbers<[1], [0], [0], [1], [0, 0, 1, 1], [], []>} : vector<128x64xf32>, vector<64x4xf32>, vector<128x4xf32> -> vector<128x4xf32>
    %25 = arith.maximumf %12, %15 : vector<128x4xf32>
    %26 = arith.maximumf %25, %18 : vector<128x4xf32>
    %27 = arith.maximumf %26, %21 : vector<128x4xf32>
    %28 = arith.maximumf %27, %24 : vector<128x4xf32>
    %29 = arith.subf %12, %28 : vector<128x4xf32>
    %30 = math.exp %29 : vector<128x4xf32>
    %31 = arith.subf %15, %28 : vector<128x4xf32>
    %32 = math.exp %31 : vector<128x4xf32>
    %33 = arith.subf %18, %28 : vector<128x4xf32>
    %34 = math.exp %33 : vector<128x4xf32>
    %35 = arith.subf %21, %28 : vector<128x4xf32>
    %36 = math.exp %35 : vector<128x4xf32>
    %37 = arith.subf %24, %28 : vector<128x4xf32>
    %38 = math.exp %37 : vector<128x4xf32>
    %39 = arith.addf %30, %32 : vector<128x4xf32>
    %40 = arith.addf %39, %34 : vector<128x4xf32>
    %41 = arith.addf %40, %36 : vector<128x4xf32>
    %42 = arith.addf %41, %38 : vector<128x4xf32>
    %43 = tpu.reciprocal %42 {approx = true} : vector<128x4xf32> -> vector<128x4xf32>
    %44 = arith.mulf %30, %43 : vector<128x4xf32>
    %cst_15 = arith.constant dense<0.000000e+00> : vector<128x64xf32>
    %45 = tpu.matmul %44, %9, %cst_15 {dimension_numbers = #tpu.dot_dimension_numbers<[1], [0], [0], [1], [0, 0, 1, 1], [], []>} : vector<128x4xf32>, vector<4x64xf32>, vector<128x64xf32> -> vector<128x64xf32>
    %46 = vector.extract_strided_slice %6 {offsets = [0, 128], sizes = [128, 64], strides = [1, 1]} : vector<640x192xf32> to vector<128x64xf32>
    %47 = arith.mulf %45, %46 : vector<128x64xf32>
    %48 = arith.mulf %32, %43 : vector<128x4xf32>
    %cst_16 = arith.constant dense<0.000000e+00> : vector<128x64xf32>
    %49 = tpu.matmul %48, %9, %cst_16 {dimension_numbers = #tpu.dot_dimension_numbers<[1], [0], [0], [1], [0, 0, 1, 1], [], []>} : vector<128x4xf32>, vector<4x64xf32>, vector<128x64xf32> -> vector<128x64xf32>
    %50 = vector.extract_strided_slice %6 {offsets = [128, 128], sizes = [128, 64], strides = [1, 1]} : vector<640x192xf32> to vector<128x64xf32>
    %51 = arith.mulf %49, %50 : vector<128x64xf32>
    %52 = arith.addf %47, %51 : vector<128x64xf32>
    %53 = arith.mulf %34, %43 : vector<128x4xf32>
    %cst_17 = arith.constant dense<0.000000e+00> : vector<128x64xf32>
    %54 = tpu.matmul %53, %9, %cst_17 {dimension_numbers = #tpu.dot_dimension_numbers<[1], [0], [0], [1], [0, 0, 1, 1], [], []>} : vector<128x4xf32>, vector<4x64xf32>, vector<128x64xf32> -> vector<128x64xf32>
    %55 = vector.extract_strided_slice %6 {offsets = [256, 128], sizes = [128, 64], strides = [1, 1]} : vector<640x192xf32> to vector<128x64xf32>
    %56 = arith.mulf %54, %55 : vector<128x64xf32>
    %57 = arith.addf %52, %56 : vector<128x64xf32>
    %58 = arith.mulf %36, %43 : vector<128x4xf32>
    %cst_18 = arith.constant dense<0.000000e+00> : vector<128x64xf32>
    %59 = tpu.matmul %58, %9, %cst_18 {dimension_numbers = #tpu.dot_dimension_numbers<[1], [0], [0], [1], [0, 0, 1, 1], [], []>} : vector<128x4xf32>, vector<4x64xf32>, vector<128x64xf32> -> vector<128x64xf32>
    %60 = vector.extract_strided_slice %6 {offsets = [384, 128], sizes = [128, 64], strides = [1, 1]} : vector<640x192xf32> to vector<128x64xf32>
    %61 = arith.mulf %59, %60 : vector<128x64xf32>
    %62 = arith.addf %57, %61 : vector<128x64xf32>
    %63 = arith.mulf %38, %43 : vector<128x4xf32>
    %cst_19 = arith.constant dense<0.000000e+00> : vector<128x64xf32>
    %64 = tpu.matmul %63, %9, %cst_19 {dimension_numbers = #tpu.dot_dimension_numbers<[1], [0], [0], [1], [0, 0, 1, 1], [], []>} : vector<128x4xf32>, vector<4x64xf32>, vector<128x64xf32> -> vector<128x64xf32>
    %65 = vector.extract_strided_slice %6 {offsets = [512, 128], sizes = [128, 64], strides = [1, 1]} : vector<640x192xf32> to vector<128x64xf32>
    %66 = arith.mulf %64, %65 : vector<128x64xf32>
    %67 = arith.addf %62, %66 : vector<128x64xf32>
    %c0_20 = arith.constant 0 : index
    %c0_21 = arith.constant 0 : index
    %68 = vector.load %arg6[%c0_20, %c0_21] : memref<64x192xf32, #tpu.memory_space<vmem>>, vector<64x64xf32>
    %c0_22 = arith.constant 0 : index
    %c64 = arith.constant 64 : index
    %69 = vector.load %arg6[%c0_22, %c64] : memref<64x192xf32, #tpu.memory_space<vmem>>, vector<64x64xf32>
    %c0_23 = arith.constant 0 : index
    %c128 = arith.constant 128 : index
    %70 = vector.load %arg6[%c0_23, %c128] : memref<64x192xf32, #tpu.memory_space<vmem>>, vector<64x64xf32>
    %c0_24 = arith.constant 0 : index
    %c0_25 = arith.constant 0 : index
    %71 = vector.load %arg7[%c0_24, %c0_25] : memref<1x192xf32, #tpu.memory_space<vmem>>, vector<1x64xf32>
    %c0_26 = arith.constant 0 : index
    %c64_27 = arith.constant 64 : index
    %72 = vector.load %arg7[%c0_26, %c64_27] : memref<1x192xf32, #tpu.memory_space<vmem>>, vector<1x64xf32>
    %c0_28 = arith.constant 0 : index
    %c128_29 = arith.constant 128 : index
    %73 = vector.load %arg7[%c0_28, %c128_29] : memref<1x192xf32, #tpu.memory_space<vmem>>, vector<1x64xf32>
    %c0_30 = arith.constant 0 : index
    %c0_31 = arith.constant 0 : index
    %74 = vector.load %arg8[%c0_30, %c0_31] : memref<2x64xf32, #tpu.memory_space<vmem>>, vector<1x64xf32>
    %c1 = arith.constant 1 : index
    %c0_32 = arith.constant 0 : index
    %75 = vector.load %arg8[%c1, %c0_32] : memref<2x64xf32, #tpu.memory_space<vmem>>, vector<1x64xf32>
    %cst_33 = arith.constant dense<0.000000e+00> : vector<128x64xf32>
    %76 = tpu.matmul %67, %68, %cst_33 {dimension_numbers = #tpu.dot_dimension_numbers<[1], [0], [0], [1], [0, 0, 1, 1], [], []>} : vector<128x64xf32>, vector<64x64xf32>, vector<128x64xf32> -> vector<128x64xf32>
    %77 = vector.broadcast %71 : vector<1x64xf32> to vector<128x64xf32>
    %78 = arith.addf %76, %77 : vector<128x64xf32>
    %c2 = arith.constant 2 : index
    %c0_34 = arith.constant 0 : index
    %c0_35 = arith.constant 0 : index
    %79 = vector.load %arg1[%c2, %c0_34, %c0_35] : memref<5x128x64xbf16, #tpu.memory_space<vmem>>, vector<1x128x64xbf16>
    %80 = vector.shape_cast %79 : vector<1x128x64xbf16> to vector<128x64xbf16>
    %81 = arith.extf %80 : vector<128x64xbf16> to vector<128x64xf32>
    %82 = arith.addf %81, %78 : vector<128x64xf32>
    %cst_36 = arith.constant dense<0.000000e+00> : vector<128xf32>
    %83 = vector.multi_reduction <add>, %82, %cst_36 [1] : vector<128x64xf32> to vector<128xf32>
    %84 = vector.shape_cast %83 : vector<128xf32> to vector<128x1xf32>
    %cst_37 = arith.constant 6.400000e+01 : f32
    %85 = vector.broadcast %cst_37 : f32 to vector<128x1xf32>
    %86 = arith.divf %84, %85 : vector<128x1xf32>
    %87 = vector.broadcast %86 : vector<128x1xf32> to vector<128x64xf32>
    %88 = arith.subf %82, %87 : vector<128x64xf32>
    %89 = arith.mulf %88, %88 : vector<128x64xf32>
    %cst_38 = arith.constant dense<0.000000e+00> : vector<128xf32>
    %90 = vector.multi_reduction <add>, %89, %cst_38 [1] : vector<128x64xf32> to vector<128xf32>
    %91 = vector.shape_cast %90 : vector<128xf32> to vector<128x1xf32>
    %cst_39 = arith.constant 0.0158730168 : f32
    %92 = vector.broadcast %cst_39 : f32 to vector<128x1xf32>
    %93 = arith.mulf %91, %92 : vector<128x1xf32>
    %94 = math.sqrt %93 : vector<128x1xf32>
    %95 = vector.broadcast %86 : vector<128x1xf32> to vector<128x64xf32>
    %96 = arith.subf %82, %95 : vector<128x64xf32>
    %97 = vector.broadcast %74 : vector<1x64xf32> to vector<128x64xf32>
    %98 = arith.mulf %97, %96 : vector<128x64xf32>
    %cst_40 = arith.constant 9.99999997E-7 : f32
    %99 = vector.broadcast %cst_40 : f32 to vector<128x1xf32>
    %100 = arith.addf %94, %99 : vector<128x1xf32>
    %101 = vector.broadcast %100 : vector<128x1xf32> to vector<128x64xf32>
    %102 = arith.divf %98, %101 : vector<128x64xf32>
    %103 = vector.broadcast %75 : vector<1x64xf32> to vector<128x64xf32>
    %104 = arith.addf %102, %103 : vector<128x64xf32>
    %cst_41 = arith.constant dense<0.000000e+00> : vector<128x64xf32>
    %105 = tpu.matmul %104, %69, %cst_41 {dimension_numbers = #tpu.dot_dimension_numbers<[1], [0], [0], [1], [0, 0, 1, 1], [], []>} : vector<128x64xf32>, vector<64x64xf32>, vector<128x64xf32> -> vector<128x64xf32>
    %106 = vector.broadcast %72 : vector<1x64xf32> to vector<128x64xf32>
    %107 = arith.addf %105, %106 : vector<128x64xf32>
    %cst_42 = arith.constant 0.000000e+00 : f32
    %108 = vector.broadcast %cst_42 : f32 to vector<128x64xf32>
    %109 = arith.maximumf %107, %108 : vector<128x64xf32>
    %cst_43 = arith.constant dense<0.000000e+00> : vector<128x64xf32>
    %110 = tpu.matmul %109, %70, %cst_43 {dimension_numbers = #tpu.dot_dimension_numbers<[1], [0], [0], [1], [0, 0, 1, 1], [], []>} : vector<128x64xf32>, vector<64x64xf32>, vector<128x64xf32> -> vector<128x64xf32>
    %111 = vector.broadcast %73 : vector<1x64xf32> to vector<128x64xf32>
    %112 = arith.addf %110, %111 : vector<128x64xf32>
    %113 = arith.addf %104, %112 : vector<128x64xf32>
    %cst_44 = arith.constant dense<0.000000e+00> : vector<128xf32>
    %114 = vector.multi_reduction <add>, %113, %cst_44 [1] : vector<128x64xf32> to vector<128xf32>
    %115 = vector.shape_cast %114 : vector<128xf32> to vector<128x1xf32>
    %cst_45 = arith.constant 6.400000e+01 : f32
    %116 = vector.broadcast %cst_45 : f32 to vector<128x1xf32>
    %117 = arith.divf %115, %116 : vector<128x1xf32>
    %118 = vector.broadcast %117 : vector<128x1xf32> to vector<128x64xf32>
    %119 = arith.subf %113, %118 : vector<128x64xf32>
    %120 = arith.mulf %119, %119 : vector<128x64xf32>
    %cst_46 = arith.constant dense<0.000000e+00> : vector<128xf32>
    %121 = vector.multi_reduction <add>, %120, %cst_46 [1] : vector<128x64xf32> to vector<128xf32>
    %122 = vector.shape_cast %121 : vector<128xf32> to vector<128x1xf32>
    %cst_47 = arith.constant 0.0158730168 : f32
    %123 = vector.broadcast %cst_47 : f32 to vector<128x1xf32>
    %124 = arith.mulf %122, %123 : vector<128x1xf32>
    %125 = math.sqrt %124 : vector<128x1xf32>
    %126 = vector.broadcast %117 : vector<128x1xf32> to vector<128x64xf32>
    %127 = arith.subf %113, %126 : vector<128x64xf32>
    %128 = vector.broadcast %74 : vector<1x64xf32> to vector<128x64xf32>
    %129 = arith.mulf %128, %127 : vector<128x64xf32>
    %cst_48 = arith.constant 9.99999997E-7 : f32
    %130 = vector.broadcast %cst_48 : f32 to vector<128x1xf32>
    %131 = arith.addf %125, %130 : vector<128x1xf32>
    %132 = vector.broadcast %131 : vector<128x1xf32> to vector<128x64xf32>
    %133 = arith.divf %129, %132 : vector<128x64xf32>
    %134 = vector.broadcast %75 : vector<1x64xf32> to vector<128x64xf32>
    %135 = arith.addf %133, %134 : vector<128x64xf32>
    %c0_49 = arith.constant 0 : index
    %c0_50 = arith.constant 0 : index
    %136 = vector.load %arg9[%c0_49, %c0_50] : memref<64x8xf32, #tpu.memory_space<vmem>>, vector<64x8xf32>
    %cst_51 = arith.constant dense<0.000000e+00> : vector<128x8xf32>
    %137 = tpu.matmul %135, %136, %cst_51 {dimension_numbers = #tpu.dot_dimension_numbers<[1], [0], [0], [1], [0, 0, 1, 1], [], []>} : vector<128x64xf32>, vector<64x8xf32>, vector<128x8xf32> -> vector<128x8xf32>
    %c0_52 = arith.constant 0 : index
    %c0_53 = arith.constant 0 : index
    %138 = vector.load %arg10[%c0_52, %c0_53] : memref<1x8xf32, #tpu.memory_space<vmem>>, vector<1x8xf32>
    %139 = vector.broadcast %138 : vector<1x8xf32> to vector<128x8xf32>
    %140 = arith.addf %137, %139 : vector<128x8xf32>
    %cst_54 = arith.constant 0.000000e+00 : f32
    %141 = vector.broadcast %cst_54 : f32 to vector<128x8xf32>
    %142 = arith.maximumf %140, %141 : vector<128x8xf32>
    %143 = math.absf %140 : vector<128x8xf32>
    %cst_55 = arith.constant 0.000000e+00 : f32
    %144 = vector.broadcast %cst_55 : f32 to vector<128x8xf32>
    %145 = arith.subf %144, %143 : vector<128x8xf32>
    %146 = math.exp %145 : vector<128x8xf32>
    %cst_56 = arith.constant 1.000000e+00 : f32
    %147 = vector.broadcast %cst_56 : f32 to vector<128x8xf32>
    %148 = arith.addf %147, %146 : vector<128x8xf32>
    %149 = math.log %148 : vector<128x8xf32>
    %150 = arith.addf %142, %149 : vector<128x8xf32>
    %c0_57 = arith.constant 0 : index
    %c0_58 = arith.constant 0 : index
    %151 = vector.load %arg11[%c0_57, %c0_58] : memref<128x8xf32, #tpu.memory_space<vmem>>, vector<128x8xf32>
    tpu.vector_store %arg11[%c0_57, %c0_58], %150 {strides = array<i32>} : memref<128x8xf32, #tpu.memory_space<vmem>>, vector<128x8xf32>,
    return
  }
  func.func @transform_0(%arg0: i32) -> (i32, i32, i32) {
    %c0_i32 = arith.constant 0 : i32
    %c0_i32_0 = arith.constant 0 : i32
    %c0_i32_1 = arith.constant 0 : i32
    return %c0_i32, %arg0, %c0_i32_0 : i32, i32, i32
  }
  func.func @transform_1(%arg0: i32) -> (i32, i32) {
    %c0_i32 = arith.constant 0 : i32
    %c0_i32_0 = arith.constant 0 : i32
    %c0_i32_1 = arith.constant 0 : i32
    return %c0_i32, %c0_i32_0 : i32, i32
  }
  func.func @transform_2(%arg0: i32) -> (i32, i32) {
    %c0_i32 = arith.constant 0 : i32
    %c0_i32_0 = arith.constant 0 : i32
    %c0_i32_1 = arith.constant 0 : i32
    return %c0_i32, %c0_i32_0 : i32, i32
  }
  func.func @transform_3(%arg0: i32) -> (i32, i32) {
    %c0_i32 = arith.constant 0 : i32
    %c0_i32_0 = arith.constant 0 : i32
    %c0_i32_1 = arith.constant 0 : i32
    return %c0_i32, %c0_i32_0 : i32, i32
  }
  func.func @transform_4(%arg0: i32) -> (i32, i32) {
    %c0_i32 = arith.constant 0 : i32
    %c0_i32_0 = arith.constant 0 : i32
    %c0_i32_1 = arith.constant 0 : i32
    return %c0_i32, %c0_i32_0 : i32, i32
  }
  func.func @transform_5(%arg0: i32) -> (i32, i32) {
    %c0_i32 = arith.constant 0 : i32
    %c0_i32_0 = arith.constant 0 : i32
    %c0_i32_1 = arith.constant 0 : i32
    return %c0_i32, %c0_i32_0 : i32, i32
  }
  func.func @transform_6(%arg0: i32) -> (i32, i32) {
    %c0_i32 = arith.constant 0 : i32
    %c0_i32_0 = arith.constant 0 : i32
    %c0_i32_1 = arith.constant 0 : i32
    return %c0_i32, %c0_i32_0 : i32, i32
  }
  func.func @transform_7(%arg0: i32) -> (i32, i32) {
    %c0_i32 = arith.constant 0 : i32
    %c0_i32_0 = arith.constant 0 : i32
    %c0_i32_1 = arith.constant 0 : i32
    return %c0_i32, %c0_i32_0 : i32, i32
  }
  func.func @transform_8(%arg0: i32) -> (i32, i32) {
    %c0_i32 = arith.constant 0 : i32
    %c0_i32_0 = arith.constant 0 : i32
    %c0_i32_1 = arith.constant 0 : i32
    return %c0_i32, %c0_i32_0 : i32, i32
  }
  func.func @transform_9(%arg0: i32) -> (i32, i32) {
    %c0_i32 = arith.constant 0 : i32
    %c0_i32_0 = arith.constant 0 : i32
    %c0_i32_1 = arith.constant 0 : i32
    return %c0_i32, %c0_i32_0 : i32, i32
  }
  func.func @transform_10(%arg0: i32) -> (i32, i32) {
    %c0_i32 = arith.constant 0 : i32
    %c0_i32_0 = arith.constant 0 : i32
    return %arg0, %c0_i32 : i32, i32
  }
}

</mosaic_0001>

<llo_original>
// kernel: tpu_custom_call.1
$region0: #{tpu_custom_call.1}
  #allocation0 [shape = 'u32[]', space=smem, size = 0x4, offset = 0x4, fixed_abs, tag = 'smem constant byte address 0x4 - core index']
  #allocation1 [shape = 'u32[144,128]{1,0:T(1,128)}', space=vmem, size = 0x12000, scoped, tag = 'internal scratch']
  %s0 = inlined_call_operand.vmem [shape: bf16[5,384,64], index: 0, kind: input, shape index: {}]
  %s1 = inlined_call_operand.vmem [shape: bf16[64,192], index: 1, kind: input, shape index: {}]
  %s2 = inlined_call_operand.vmem [shape: f32[1,192], index: 2, kind: input, shape index: {}]
  %s3 = inlined_call_operand.vmem [shape: f32[64,4], index: 3, kind: input, shape index: {}]
  %s4 = inlined_call_operand.vmem [shape: f32[4,64], index: 4, kind: input, shape index: {}]
  %s5 = inlined_call_operand.vmem [shape: f32[64,192], index: 5, kind: input, shape index: {}]
  %s6 = inlined_call_operand.vmem [shape: f32[1,192], index: 6, kind: input, shape index: {}]
  %s7 = inlined_call_operand.vmem [shape: f32[2,64], index: 7, kind: input, shape index: {}]
  %s8 = inlined_call_operand.vmem [shape: f32[64,8], index: 8, kind: input, shape index: {}]
  %s9 = inlined_call_operand.vmem [shape: f32[1,8], index: 9, kind: input, shape index: {}]
  %s10 = inlined_call_operand.vmem [shape: f32[384,8], index: 10, kind: output, shape index: {}]
  %s11 = sld [smem:[#allocation0]]
  $region114: #{tpu_custom_call.1} parent=0
    _
  %s13 = ssub.s32 1, %s11
  %s14 = scalar_select 0, %s13, %s11
  $region1: #{tpu_custom_call.1} parent=0
    #allocation2 [shape = 'u8[327680]{0}', space=vmem, size = 0x50000, scoped, tag = 'input window, operand 0']
    loop: start=0, step=1, limit=5
    $region2: #{tpu_custom_call.1} parent=1 // loop_pre_header
      _
    $region3: #{tpu_custom_call.1} parent=1 // loop_header
      %s16 = sphi 0, %s20
      %p17 = scmp.ge.s32.totalorder %s16, 5
      %s26 = sphi 0, %s28
      %s29 = sphi 0, %s26
      %s30 = sphi 0, %s29
      %s46 = sphi 0, %s30
      %s50 = sphi 0, %s50
      %s52 = sphi 0, %s50
      %s53 = sphi 0, %s52
      %s67 = sphi 0, %s53
      %s71 = sphi 0, %s71
      %s73 = sphi 0, %s71
      %s74 = sphi 0, %s73
      %s88 = sphi 0, %s74
      %s92 = sphi 0, %s92
      %s94 = sphi 0, %s92
      %s95 = sphi 0, %s94
      %s109 = sphi 0, %s95
      %s113 = sphi 0, %s113
      %s115 = sphi 0, %s113
      %s116 = sphi 0, %s115
      %s130 = sphi 0, %s116
      %s134 = sphi 0, %s134
      %s136 = sphi 0, %s134
      %s137 = sphi 0, %s136
      %s151 = sphi 0, %s137
      %s155 = sphi 0, %s155
      %s157 = sphi 0, %s155
      %s158 = sphi 0, %s157
      %s172 = sphi 0, %s158
      %s176 = sphi 0, %s176
      %s178 = sphi 0, %s176
      %s179 = sphi 0, %s178
      %s193 = sphi 0, %s179
      %s197 = sphi 0, %s197
      %s199 = sphi 0, %s197
      %s200 = sphi 0, %s199
      %s214 = sphi 0, %s200
      %s218 = sphi 0, %s218
      %s220 = sphi 0, %s218
      %s221 = sphi 0, %s220
      %s235 = sphi 0, %s221
      %s241 = sphi 0, %s243
      %s244 = sphi 0, %s241
      %s245 = sphi 0, %s244
      %s261 = sphi 0, %s245
    $region4: #{tpu_custom_call.1} parent=1 // loop_header_branch
      %19 = sbr.rel (%p17) target = $region8
    $region5: #{tpu_custom_call.1} parent=1 // loop_body
      %s21 = ssub.s32 %s16, 1
      %s22 = ssub.s32 %s16, 2
      %s23 = sadd.s32 %s16, 1
      %s24 = ssub.s32 %s16, %s23
      %p25 = scmp.eq.s32.totalorder %s24, 0
      %s27 = sadd.s32 %s26, 1
      %s28 = scalar_select %p25, %s26, %s27
      %p31 = pneg %p25
      %p32 = scmp.eq.s32.totalorder %s16, 2
      %p33 = por %p31, %p32
      %p34 = scmp.ne.s32.totalorder %s26, %s29
      %p35 = scmp.eq.s32.totalorder %s16, 0
      %p36 = por %p34, %p35
      %p37 = scmp.ne.s32.totalorder %s26, %s29
      %p38 = scmp.eq.s32.totalorder %s21, 2
      %p39 = por %p37, %p38
      %p40 = scmp.ne.s32.totalorder %s29, %s30
      %p41 = scmp.eq.s32.totalorder %s21, 0
      %p42 = por %p40, %p41
      %p43 = scmp.ne.s32.totalorder %s29, %s30
      %p44 = scmp.eq.s32.totalorder %s22, 2
      %p45 = por %p43, %p44
      %p47 = scmp.ne.s32.totalorder %s30, %s46
      %p48 = scmp.eq.s32.totalorder %s22, 0
      %p49 = por %p47, %p48
      %s51 = sadd.s32 %s50, 1
      %p54 = scmp.eq.s32.totalorder %s16, 2
      %p55 = scmp.ne.s32.totalorder %s50, %s52
      %p56 = scmp.eq.s32.totalorder %s16, 0
      %p57 = por %p55, %p56
      %p58 = scmp.ne.s32.totalorder %s50, %s52
      %p59 = scmp.eq.s32.totalorder %s21, 2
      %p60 = por %p58, %p59
      %p61 = scmp.ne.s32.totalorder %s52, %s53
      %p62 = scmp.eq.s32.totalorder %s21, 0
      %p63 = por %p61, %p62
      %p64 = scmp.ne.s32.totalorder %s52, %s53
      %p65 = scmp.eq.s32.totalorder %s22, 2
      %p66 = por %p64, %p65
      %p68 = scmp.ne.s32.totalorder %s53, %s67
      %p69 = scmp.eq.s32.totalorder %s22, 0
      %p70 = por %p68, %p69
      %s72 = sadd.s32 %s71, 1
      %p75 = scmp.eq.s32.totalorder %s16, 2
      %p76 = scmp.ne.s32.totalorder %s71, %s73
      %p77 = scmp.eq.s32.totalorder %s16, 0
      %p78 = por %p76, %p77
      %p79 = scmp.ne.s32.totalorder %s71, %s73
      %p80 = scmp.eq.s32.totalorder %s21, 2
      %p81 = por %p79, %p80
      %p82 = scmp.ne.s32.totalorder %s73, %s74
      %p83 = scmp.eq.s32.totalorder %s21, 0
      %p84 = por %p82, %p83
      %p85 = scmp.ne.s32.totalorder %s73, %s74
      %p86 = scmp.eq.s32.totalorder %s22, 2
      %p87 = por %p85, %p86
      %p89 = scmp.ne.s32.totalorder %s74, %s88
      %p90 = scmp.eq.s32.totalorder %s22, 0
      %p91 = por %p89, %p90
      %s93 = sadd.s32 %s92, 1
      %p96 = scmp.eq.s32.totalorder %s16, 2
      %p97 = scmp.ne.s32.totalorder %s92, %s94
      %p98 = scmp.eq.s32.totalorder %s16, 0
      %p99 = por %p97, %p98
      %p100 = scmp.ne.s32.totalorder %s92, %s94
      %p101 = scmp.eq.s32.totalorder %s21, 2
      %p102 = por %p100, %p101
      %p103 = scmp.ne.s32.totalorder %s94, %s95
      %p104 = scmp.eq.s32.totalorder %s21, 0
      %p105 = por %p103, %p104
      %p106 = scmp.ne.s32.totalorder %s94, %s95
      %p107 = scmp.eq.s32.totalorder %s22, 2
      %p108 = por %p106, %p107
      %p110 = scmp.ne.s32.totalorder %s95, %s109
      %p111 = scmp.eq.s32.totalorder %s22, 0
      %p112 = por %p110, %p111
      %s114 = sadd.s32 %s113, 1
      %p117 = scmp.eq.s32.totalorder %s16, 2
      %p118 = scmp.ne.s32.totalorder %s113, %s115
      %p119 = scmp.eq.s32.totalorder %s16, 0
      %p120 = por %p118, %p119
      %p121 = scmp.ne.s32.totalorder %s113, %s115
      %p122 = scmp.eq.s32.totalorder %s21, 2
      %p123 = por %p121, %p122
      %p124 = scmp.ne.s32.totalorder %s115, %s116
      %p125 = scmp.eq.s32.totalorder %s21, 0
      %p126 = por %p124, %p125
      %p127 = scmp.ne.s32.totalorder %s115, %s116
      %p128 = scmp.eq.s32.totalorder %s22, 2
      %p129 = por %p127, %p128
      %p131 = scmp.ne.s32.totalorder %s116, %s130
      %p132 = scmp.eq.s32.totalorder %s22, 0
      %p133 = por %p131, %p132
      %s135 = sadd.s32 %s134, 1
      %p138 = scmp.eq.s32.totalorder %s16, 2
      %p139 = scmp.ne.s32.totalorder %s134, %s136
      %p140 = scmp.eq.s32.totalorder %s16, 0
      %p141 = por %p139, %p140
      %p142 = scmp.ne.s32.totalorder %s134, %s136
      %p143 = scmp.eq.s32.totalorder %s21, 2
      %p144 = por %p142, %p143
      %p145 = scmp.ne.s32.totalorder %s136, %s137
      %p146 = scmp.eq.s32.totalorder %s21, 0
      %p147 = por %p145, %p146
      %p148 = scmp.ne.s32.totalorder %s136, %s137
      %p149 = scmp.eq.s32.totalorder %s22, 2
      %p150 = por %p148, %p149
      %p152 = scmp.ne.s32.totalorder %s137, %s151
      %p153 = scmp.eq.s32.totalorder %s22, 0
      %p154 = por %p152, %p153
      %s156 = sadd.s32 %s155, 1
      %p159 = scmp.eq.s32.totalorder %s16, 2
      %p160 = scmp.ne.s32.totalorder %s155, %s157
      %p161 = scmp.eq.s32.totalorder %s16, 0
      %p162 = por %p160, %p161
      %p163 = scmp.ne.s32.totalorder %s155, %s157
      %p164 = scmp.eq.s32.totalorder %s21, 2
      %p165 = por %p163, %p164
      %p166 = scmp.ne.s32.totalorder %s157, %s158
      %p167 = scmp.eq.s32.totalorder %s21, 0
      %p168 = por %p166, %p167
      %p169 = scmp.ne.s32.totalorder %s157, %s158
      %p170 = scmp.eq.s32.totalorder %s22, 2
      %p171 = por %p169, %p170
      %p173 = scmp.ne.s32.totalorder %s158, %s172
      %p174 = scmp.eq.s32.totalorder %s22, 0
      %p175 = por %p173, %p174
      %s177 = sadd.s32 %s176, 1
      %p180 = scmp.eq.s32.totalorder %s16, 2
      %p181 = scmp.ne.s32.totalorder %s176, %s178
      %p182 = scmp.eq.s32.totalorder %s16, 0
      %p183 = por %p181, %p182
      %p184 = scmp.ne.s32.totalorder %s176, %s178
      %p185 = scmp.eq.s32.totalorder %s21, 2
      %p186 = por %p184, %p185
      %p187 = scmp.ne.s32.totalorder %s178, %s179
      %p188 = scmp.eq.s32.totalorder %s21, 0
      %p189 = por %p187, %p188
      %p190 = scmp.ne.s32.totalorder %s178, %s179
      %p191 = scmp.eq.s32.totalorder %s22, 2
      %p192 = por %p190, %p191
      %p194 = scmp.ne.s32.totalorder %s179, %s193
      %p195 = scmp.eq.s32.totalorder %s22, 0
      %p196 = por %p194, %p195
      %s198 = sadd.s32 %s197, 1
      %p201 = scmp.eq.s32.totalorder %s16, 2
      %p202 = scmp.ne.s32.totalorder %s197, %s199
      %p203 = scmp.eq.s32.totalorder %s16, 0
      %p204 = por %p202, %p203
      %p205 = scmp.ne.s32.totalorder %s197, %s199
      %p206 = scmp.eq.s32.totalorder %s21, 2
      %p207 = por %p205, %p206
      %p208 = scmp.ne.s32.totalorder %s199, %s200
      %p209 = scmp.eq.s32.totalorder %s21, 0
      %p210 = por %p208, %p209
      %p211 = scmp.ne.s32.totalorder %s199, %s200
      %p212 = scmp.eq.s32.totalorder %s22, 2
      %p213 = por %p211, %p212
      %p215 = scmp.ne.s32.totalorder %s200, %s214
      %p216 = scmp.eq.s32.totalorder %s22, 0
      %p217 = por %p215, %p216
      %s219 = sadd.s32 %s218, 1
      %p222 = scmp.eq.s32.totalorder %s16, 2
      %p223 = scmp.ne.s32.totalorder %s218, %s220
      %p224 = scmp.eq.s32.totalorder %s16, 0
      %p225 = por %p223, %p224
      %p226 = scmp.ne.s32.totalorder %s218, %s220
      %p227 = scmp.eq.s32.totalorder %s21, 2
      %p228 = por %p226, %p227
      %p229 = scmp.ne.s32.totalorder %s220, %s221
      %p230 = scmp.eq.s32.totalorder %s21, 0
      %p231 = por %p229, %p230
      %p232 = scmp.ne.s32.totalorder %s220, %s221
      %p233 = scmp.eq.s32.totalorder %s22, 2
      %p234 = por %p232, %p233
      %p236 = scmp.ne.s32.totalorder %s221, %s235
      %p237 = scmp.eq.s32.totalorder %s22, 0
      %p238 = por %p236, %p237
      %s239 = ssub.s32 %s16, %s23
      %p240 = scmp.eq.s32.totalorder %s239, 0
      %s242 = sadd.s32 %s241, 1
      %s243 = scalar_select %p240, %s241, %s242
      %p246 = pneg %p240
      %p247 = scmp.eq.s32.totalorder %s16, 2
      %p248 = por %p246, %p247
      %p249 = scmp.ne.s32.totalorder %s241, %s244
      %p250 = scmp.eq.s32.totalorder %s16, 0
      %p251 = por %p249, %p250
      %p252 = scmp.ne.s32.totalorder %s241, %s244
      %p253 = scmp.eq.s32.totalorder %s21, 2
      %p254 = por %p252, %p253
      %p255 = scmp.ne.s32.totalorder %s244, %s245
      %p256 = scmp.eq.s32.totalorder %s21, 0
      %p257 = por %p255, %p256
      %p258 = scmp.ne.s32.totalorder %s244, %s245
      %p259 = scmp.eq.s32.totalorder %s22, 2
      %p260 = por %p258, %p259
      %p262 = scmp.ne.s32.totalorder %s245, %s261
      %p263 = scmp.eq.s32.totalorder %s22, 0
      %p264 = por %p262, %p263
      %p265 = scmp.le.s32.totalorder 1, %s16
      %p266 = scmp.lt.s32.totalorder %s16, 4
      %p267 = pnand %p265, %p266
      %p268 = pneg %p267
      // Predicated region
      $region9: #{tpu_custom_call.1} parent=5 // pred_check
        _
      $region10: #{tpu_custom_call.1} parent=5 // pred_check_branch
        %270 = sbr.rel (%p267) target = $region12
      $region11: #{tpu_custom_call.1} parent=5 // pred_region
        %s271 = ssub.s32 %s16, 1
        // Predicated region
        $region13: #{tpu_custom_call.1} parent=11 // pred_check
          %p272 = pneg %p63
        $region14: #{tpu_custom_call.1} parent=11 // pred_check_branch
          %274 = sbr.rel (%p272) target = $region16
        $region15: #{tpu_custom_call.1} parent=11 // pred_region
          _
        $region16: #{tpu_custom_call.1} parent=11 // pred_fallthru
          _
        // Predicated region
        $region17: #{tpu_custom_call.1} parent=11 // pred_check
          %p275 = pneg %p84
        $region18: #{tpu_custom_call.1} parent=11 // pred_check_branch
          %277 = sbr.rel (%p275) target = $region20
        $region19: #{tpu_custom_call.1} parent=11 // pred_region
          _
        $region20: #{tpu_custom_call.1} parent=11 // pred_fallthru
          _
        // Predicated region
        $region21: #{tpu_custom_call.1} parent=11 // pred_check
          %p278 = pneg %p105
        $region22: #{tpu_custom_call.1} parent=11 // pred_check_branch
          %280 = sbr.rel (%p278) target = $region24
        $region23: #{tpu_custom_call.1} parent=11 // pred_region
          _
        $region24: #{tpu_custom_call.1} parent=11 // pred_fallthru
          _
        // Predicated region
        $region25: #{tpu_custom_call.1} parent=11 // pred_check
          %p281 = pneg %p126
        $region26: #{tpu_custom_call.1} parent=11 // pred_check_branch
          %283 = sbr.rel (%p281) target = $region28
        $region27: #{tpu_custom_call.1} parent=11 // pred_region
          _
        $region28: #{tpu_custom_call.1} parent=11 // pred_fallthru
          _
        // Predicated region
        $region29: #{tpu_custom_call.1} parent=11 // pred_check
          %p284 = pneg %p147
        $region30: #{tpu_custom_call.1} parent=11 // pred_check_branch
          %286 = sbr.rel (%p284) target = $region32
        $region31: #{tpu_custom_call.1} parent=11 // pred_region
          _
        $region32: #{tpu_custom_call.1} parent=11 // pred_fallthru
          _
        // Predicated region
        $region33: #{tpu_custom_call.1} parent=11 // pred_check
          %p287 = pneg %p168
        $region34: #{tpu_custom_call.1} parent=11 // pred_check_branch
          %289 = sbr.rel (%p287) target = $region36
        $region35: #{tpu_custom_call.1} parent=11 // pred_region
          _
        $region36: #{tpu_custom_call.1} parent=11 // pred_fallthru
          _
        // Predicated region
        $region37: #{tpu_custom_call.1} parent=11 // pred_check
          %p290 = pneg %p189
        $region38: #{tpu_custom_call.1} parent=11 // pred_check_branch
          %292 = sbr.rel (%p290) target = $region40
        $region39: #{tpu_custom_call.1} parent=11 // pred_region
          _
        $region40: #{tpu_custom_call.1} parent=11 // pred_fallthru
          _
        // Predicated region
        $region41: #{tpu_custom_call.1} parent=11 // pred_check
          %p293 = pneg %p210
        $region42: #{tpu_custom_call.1} parent=11 // pred_check_branch
          %295 = sbr.rel (%p293) target = $region44
        $region43: #{tpu_custom_call.1} parent=11 // pred_region
          _
        $region44: #{tpu_custom_call.1} parent=11 // pred_fallthru
          _
        // Predicated region
        $region45: #{tpu_custom_call.1} parent=11 // pred_check
          %p296 = pneg %p231
        $region46: #{tpu_custom_call.1} parent=11 // pred_check_branch
          %298 = sbr.rel (%p296) target = $region48
        $region47: #{tpu_custom_call.1} parent=11 // pred_region
          _
        $region48: #{tpu_custom_call.1} parent=11 // pred_fallthru
          _
      $region12: #{tpu_custom_call.1} parent=5 // pred_fallthru
        _
      %p299 = scmp.lt.s32.totalorder %s16, 3
      // Predicated region
      $region49: #{tpu_custom_call.1} parent=5 // pred_check
        %p300 = pneg %p299
      $region50: #{tpu_custom_call.1} parent=5 // pred_check_branch
        %302 = sbr.rel (%p300) target = $region52
      $region51: #{tpu_custom_call.1} parent=5 // pred_region
        // Predicated region
        $region53: #{tpu_custom_call.1} parent=51 // pred_check
          %p303 = pneg %p36
        $region54: #{tpu_custom_call.1} parent=51 // pred_check_branch
          %305 = sbr.rel (%p303) target = $region56
        $region55: #{tpu_custom_call.1} parent=51 // pred_region
          %s306 = sand.u32 %s26, 1
          %s307 = sand.u32 %s26, 1
          %s308 = smul.addr %s307, 320
          %s309 = scalar_lea.vmem [#allocation2], %s308
          %s310 = smul.u32 16, %s16
          %s311 = smul.addr %s310, 4
          %s312 = scalar_lea.vmem %s0, %s311
          // Predicated region
          $region57: #{tpu_custom_call.1} parent=55 // pred_check
            _
          $region58: #{tpu_custom_call.1} parent=55 // pred_check_branch
            %314 = sbr.rel (0) target = $region60
          $region59: #{tpu_custom_call.1} parent=55 // pred_region
            // Predicated region
            $region61: #{tpu_custom_call.1} parent=59 // pred_check
              _
            $region62: #{tpu_custom_call.1} parent=59 // pred_check_branch
              %316 = sbr.rel target = $region64
            $region63: #{tpu_custom_call.1} parent=59 // pred_region
              // Predicated region
              $region76: #{tpu_custom_call.1} parent=63 // pred_check
                _
              $region77: #{tpu_custom_call.1} parent=63 // pred_check_branch
                %489 = sbr.rel (0) target = $region79
              $region78: #{tpu_custom_call.1} parent=63 // pred_region
                loop: start=0, step=1, limit=1
                $region80: #{tpu_custom_call.1} parent=78 // loop_pre_header
                  _
                $region81: #{tpu_custom_call.1} parent=78 // loop_header
                  %s491 = sphi 0, %s495
                  %p492 = scmp.ge.s32.totalorder %s491, 1
                  %s496 = sphi %s312, %s312
                  %s497 = sphi %s309, %s309
                $region82: #{tpu_custom_call.1} parent=78 // loop_header_branch
                  %494 = sbr.rel (%p492) target = $region86
                $region83: #{tpu_custom_call.1} parent=78 // loop_body
                  _
                $region84: #{tpu_custom_call.1} parent=78 // loop_footer
                  %s495 = sadd.s32 1, %s491
                $region85: #{tpu_custom_call.1} parent=78 // loop_footer_branch
                  %490 = sbr.rel target = $region81
                $region86: #{tpu_custom_call.1} parent=78 // loop_exit
                  _
                loop: start=0, step=1, limit=1
                $region87: #{tpu_custom_call.1} parent=78 // loop_pre_header
                  _
                $region88: #{tpu_custom_call.1} parent=78 // loop_header
                  %s500 = sphi 0, %s504
                  %p501 = scmp.ge.s32.totalorder %s500, 1
                  %s505 = sphi %s312, %s312
                  %s506 = sphi %s309, %s309
                $region89: #{tpu_custom_call.1} parent=78 // loop_header_branch
                  %503 = sbr.rel (%p501) target = $region93
                $region90: #{tpu_custom_call.1} parent=78 // loop_body
                  %v507 = vld [vmem:[%s505] sm:$0xf]
                  %508 = vst [vmem:[%s506] sm:$0xf] %v507
                  %v509 = vld [vmem:[%s505 + $0x4] sm:$0xf]
                  %510 = vst [vmem:[%s506 + $0x4] sm:$0xf] %v509
                  %v511 = vld [vmem:[%s505 + $0x8] sm:$0xf]
                  %512 = vst [vmem:[%s506 + $0x8] sm:$0xf] %v511
                  %v513 = vld [vmem:[%s505 + $0xc] sm:$0xf]
                  %514 = vst [vmem:[%s506 + $0xc] sm:$0xf] %v513
                  %v515 = vld [vmem:[%s505 + $0x10] sm:$0xf]
                  %516 = vst [vmem:[%s506 + $0x10] sm:$0xf] %v515
                  %v517 = vld [vmem:[%s505 + $0x14] sm:$0xf]
                  %518 = vst [vmem:[%s506 + $0x14] sm:$0xf] %v517
                  %v519 = vld [vmem:[%s505 + $0x18] sm:$0xf]
                  %520 = vst [vmem:[%s506 + $0x18] sm:$0xf] %v519
                  %v521 = vld [vmem:[%s505 + $0x1c] sm:$0xf]
                  %522 = vst [vmem:[%s506 + $0x1c] sm:$0xf] %v521
                  %v523 = vld [vmem:[%s505 + $0x20] sm:$0xf]
                  %524 = vst [vmem:[%s506 + $0x20] sm:$0xf] %v523
                  %v525 = vld [vmem:[%s505 + $0x24] sm:$0xf]
                  %526 = vst [vmem:[%s506 + $0x24] sm:$0xf] %v525
                  %v527 = vld [vmem:[%s505 + $0x28] sm:$0xf]
                  %528 = vst [vmem:[%s506 + $0x28] sm:$0xf] %v527
                  %v529 = vld [vmem:[%s505 + $0x2c] sm:$0xf]
                  %530 = vst [vmem:[%s506 + $0x2c] sm:$0xf] %v529
                  %v531 = vld [vmem:[%s505 + $0x30] sm:$0xf]
                  %532 = vst [vmem:[%s506 + $0x30] sm:$0xf] %v531
                  %v533 = vld [vmem:[%s505 + $0x34] sm:$0xf]
                  %534 = vst [vmem:[%s506 + $0x34] sm:$0xf] %v533
                  %v535 = vld [vmem:[%s505 + $0x38] sm:$0xf]
                  %536 = vst [vmem:[%s506 + $0x38] sm:$0xf] %v535
                  %v537 = vld [vmem:[%s505 + $0x3c] sm:$0xf]
                  %538 = vst [vmem:[%s506 + $0x3c] sm:$0xf] %v537
                  %v539 = vld [vmem:[%s505 + $0xc0] sm:$0xf]
                  %540 = vst [vmem:[%s506 + $0x40] sm:$0xf] %v539
                  %v541 = vld [vmem:[%s505 + $0xc4] sm:$0xf]
                  %542 = vst [vmem:[%s506 + $0x44] sm:$0xf] %v541
                  %v543 = vld [vmem:[%s505 + $0xc8] sm:$0xf]
                  %544 = vst [vmem:[%s506 + $0x48] sm:$0xf] %v543
                  %v545 = vld [vmem:[%s505 + $0xcc] sm:$0xf]
                  %546 = vst [vmem:[%s506 + $0x4c] sm:$0xf] %v545
                  %v547 = vld [vmem:[%s505 + $0xd0] sm:$0xf]
                  %548 = vst [vmem:[%s506 + $0x50] sm:$0xf] %v547
                  %v549 = vld [vmem:[%s505 + $0xd4] sm:$0xf]
                  %550 = vst [vmem:[%s506 + $0x54] sm:$0xf] %v549
                  %v551 = vld [vmem:[%s505 + $0xd8] sm:$0xf]
                  %552 = vst [vmem:[%s506 + $0x58] sm:$0xf] %v551
                  %v553 = vld [vmem:[%s505 + $0xdc] sm:$0xf]
                  %554 = vst [vmem:[%s506 + $0x5c] sm:$0xf] %v553
                  %v555 = vld [vmem:[%s505 + $0xe0] sm:$0xf]
                  %556 = vst [vmem:[%s506 + $0x60] sm:$0xf] %v555
                  %v557 = vld [vmem:[%s505 + $0xe4] sm:$0xf]
                  %558 = vst [vmem:[%s506 + $0x64] sm:$0xf] %v557
                  %v559 = vld [vmem:[%s505 + $0xe8] sm:$0xf]
                  %560 = vst [vmem:[%s506 + $0x68] sm:$0xf] %v559
                  %v561 = vld [vmem:[%s505 + $0xec] sm:$0xf]
                  %562 = vst [vmem:[%s506 + $0x6c] sm:$0xf] %v561
                  %v563 = vld [vmem:[%s505 + $0xf0] sm:$0xf]
                  %564 = vst [vmem:[%s506 + $0x70] sm:$0xf] %v563
                  %v565 = vld [vmem:[%s505 + $0xf4] sm:$0xf]
                  %566 = vst [vmem:[%s506 + $0x74] sm:$0xf] %v565
                  %v567 = vld [vmem:[%s505 + $0xf8] sm:$0xf]
                  %568 = vst [vmem:[%s506 + $0x78] sm:$0xf] %v567
                  %v569 = vld [vmem:[%s505 + $0xfc] sm:$0xf]
                  %570 = vst [vmem:[%s506 + $0x7c] sm:$0xf] %v569
                  %v571 = vld [vmem:[%s505 + $0x180] sm:$0xf]
                  %572 = vst [vmem:[%s506 + $0x80] sm:$0xf] %v571
                  %v573 = vld [vmem:[%s505 + $0x184] sm:$0xf]
                  %574 = vst [vmem:[%s506 + $0x84] sm:$0xf] %v573
                  %v575 = vld [vmem:[%s505 + $0x188] sm:$0xf]
                  %576 = vst [vmem:[%s506 + $0x88] sm:$0xf] %v575
                  %v577 = vld [vmem:[%s505 + $0x18c] sm:$0xf]
                  %578 = vst [vmem:[%s506 + $0x8c] sm:$0xf] %v577
                  %v579 = vld [vmem:[%s505 + $0x190] sm:$0xf]
                  %580 = vst [vmem:[%s506 + $0x90] sm:$0xf] %v579
                  %v581 = vld [vmem:[%s505 + $0x194] sm:$0xf]
                  %582 = vst [vmem:[%s506 + $0x94] sm:$0xf] %v581
                  %v583 = vld [vmem:[%s505 + $0x198] sm:$0xf]
                  %584 = vst [vmem:[%s506 + $0x98] sm:$0xf] %v583
                  %v585 = vld [vmem:[%s505 + $0x19c] sm:$0xf]
                  %586 = vst [vmem:[%s506 + $0x9c] sm:$0xf] %v585
                  %v587 = vld [vmem:[%s505 + $0x1a0] sm:$0xf]
                  %588 = vst [vmem:[%s506 + $0xa0] sm:$0xf] %v587
                  %v589 = vld [vmem:[%s505 + $0x1a4] sm:$0xf]
                  %590 = vst [vmem:[%s506 + $0xa4] sm:$0xf] %v589
                  %v591 = vld [vmem:[%s505 + $0x1a8] sm:$0xf]
                  %592 = vst [vmem:[%s506 + $0xa8] sm:$0xf] %v591
                  %v593 = vld [vmem:[%s505 + $0x1ac] sm:$0xf]
                  %594 = vst [vmem:[%s506 + $0xac] sm:$0xf] %v593
                  %v595 = vld [vmem:[%s505 + $0x1b0] sm:$0xf]
                  %596 = vst [vmem:[%s506 + $0xb0] sm:$0xf] %v595
                  %v597 = vld [vmem:[%s505 + $0x1b4] sm:$0xf]
                  %598 = vst [vmem:[%s506 + $0xb4] sm:$0xf] %v597
                  %v599 = vld [vmem:[%s505 + $0x1b8] sm:$0xf]
                  %600 = vst [vmem:[%s506 + $0xb8] sm:$0xf] %v599
                  %v601 = vld [vmem:[%s505 + $0x1bc] sm:$0xf]
                  %602 = vst [vmem:[%s506 + $0xbc] sm:$0xf] %v601
                  %v603 = vld [vmem:[%s505 + $0x240] sm:$0xf]
                  %604 = vst [vmem:[%s506 + $0xc0] sm:$0xf] %v603
                  %v605 = vld [vmem:[%s505 + $0x244] sm:$0xf]
                  %606 = vst [vmem:[%s506 + $0xc4] sm:$0xf] %v605
                  %v607 = vld [vmem:[%s505 + $0x248] sm:$0xf]
                  %608 = vst [vmem:[%s506 + $0xc8] sm:$0xf] %v607
                  %v609 = vld [vmem:[%s505 + $0x24c] sm:$0xf]
                  %610 = vst [vmem:[%s506 + $0xcc] sm:$0xf] %v609
                  %v611 = vld [vmem:[%s505 + $0x250] sm:$0xf]
                  %612 = vst [vmem:[%s506 + $0xd0] sm:$0xf] %v611
                  %v613 = vld [vmem:[%s505 + $0x254] sm:$0xf]
                  %614 = vst [vmem:[%s506 + $0xd4] sm:$0xf] %v613
                  %v615 = vld [vmem:[%s505 + $0x258] sm:$0xf]
                  %616 = vst [vmem:[%s506 + $0xd8] sm:$0xf] %v615
                  %v617 = vld [vmem:[%s505 + $0x25c] sm:$0xf]
                  %618 = vst [vmem:[%s506 + $0xdc] sm:$0xf] %v617
                  %v619 = vld [vmem:[%s505 + $0x260] sm:$0xf]
                  %620 = vst [vmem:[%s506 + $0xe0] sm:$0xf] %v619
                  %v621 = vld [vmem:[%s505 + $0x264] sm:$0xf]
                  %622 = vst [vmem:[%s506 + $0xe4] sm:$0xf] %v621
                  %v623 = vld [vmem:[%s505 + $0x268] sm:$0xf]
                  %624 = vst [vmem:[%s506 + $0xe8] sm:$0xf] %v623
                  %v625 = vld [vmem:[%s505 + $0x26c] sm:$0xf]
                  %626 = vst [vmem:[%s506 + $0xec] sm:$0xf] %v625
                  %v627 = vld [vmem:[%s505 + $0x270] sm:$0xf]
                  %628 = vst [vmem:[%s506 + $0xf0] sm:$0xf] %v627
                  %v629 = vld [vmem:[%s505 + $0x274] sm:$0xf]
                  %630 = vst [vmem:[%s506 + $0xf4] sm:$0xf] %v629
                  %v631 = vld [vmem:[%s505 + $0x278] sm:$0xf]
                  %632 = vst [vmem:[%s506 + $0xf8] sm:$0xf] %v631
                  %v633 = vld [vmem:[%s505 + $0x27c] sm:$0xf]
                  %634 = vst [vmem:[%s506 + $0xfc] sm:$0xf] %v633
                  %v635 = vld [vmem:[%s505 + $0x300] sm:$0xf]
                  %636 = vst [vmem:[%s506 + $0x100] sm:$0xf] %v635
                  %v637 = vld [vmem:[%s505 + $0x304] sm:$0xf]
                  %638 = vst [vmem:[%s506 + $0x104] sm:$0xf] %v637
                  %v639 = vld [vmem:[%s505 + $0x308] sm:$0xf]
                  %640 = vst [vmem:[%s506 + $0x108] sm:$0xf] %v639
                  %v641 = vld [vmem:[%s505 + $0x30c] sm:$0xf]
                  %642 = vst [vmem:[%s506 + $0x10c] sm:$0xf] %v641
                  %v643 = vld [vmem:[%s505 + $0x310] sm:$0xf]
                  %644 = vst [vmem:[%s506 + $0x110] sm:$0xf] %v643
                  %v645 = vld [vmem:[%s505 + $0x314] sm:$0xf]
                  %646 = vst [vmem:[%s506 + $0x114] sm:$0xf] %v645
                  %v647 = vld [vmem:[%s505 + $0x318] sm:$0xf]
                  %648 = vst [vmem:[%s506 + $0x118] sm:$0xf] %v647
                  %v649 = vld [vmem:[%s505 + $0x31c] sm:$0xf]
                  %650 = vst [vmem:[%s506 + $0x11c] sm:$0xf] %v649
                  %v651 = vld [vmem:[%s505 + $0x320] sm:$0xf]
                  %652 = vst [vmem:[%s506 + $0x120] sm:$0xf] %v651
                  %v653 = vld [vmem:[%s505 + $0x324] sm:$0xf]
                  %654 = vst [vmem:[%s506 + $0x124] sm:$0xf] %v653
                  %v655 = vld [vmem:[%s505 + $0x328] sm:$0xf]
                  %656 = vst [vmem:[%s506 + $0x128] sm:$0xf] %v655
                  %v657 = vld [vmem:[%s505 + $0x32c] sm:$0xf]
                  %658 = vst [vmem:[%s506 + $0x12c] sm:$0xf] %v657
                  %v659 = vld [vmem:[%s505 + $0x330] sm:$0xf]
                  %660 = vst [vmem:[%s506 + $0x130] sm:$0xf] %v659
                  %v661 = vld [vmem:[%s505 + $0x334] sm:$0xf]
                  %662 = vst [vmem:[%s506 + $0x134] sm:$0xf] %v661
                  %v663 = vld [vmem:[%s505 + $0x338] sm:$0xf]
                  %664 = vst [vmem:[%s506 + $0x138] sm:$0xf] %v663
                  %v665 = vld [vmem:[%s505 + $0x33c] sm:$0xf]
                  %666 = vst [vmem:[%s506 + $0x13c] sm:$0xf] %v665
                $region91: #{tpu_custom_call.1} parent=78 // loop_footer
                  %s504 = sadd.s32 1, %s500
                $region92: #{tpu_custom_call.1} parent=78 // loop_footer_branch
                  %499 = sbr.rel target = $region88
                $region93: #{tpu_custom_call.1} parent=78 // loop_exit
                  _
              $region79: #{tpu_custom_call.1} parent=63 // pred_fallthru
                _
            $region64: #{tpu_custom_call.1} parent=59 // pred_fallthru
              _
            // Predicated region
            $region65: #{tpu_custom_call.1} parent=59 // pred_check
              _
            $region66: #{tpu_custom_call.1} parent=59 // pred_check_branch
              %318 = sbr.rel (0) target = $region68
            $region67: #{tpu_custom_call.1} parent=59 // pred_region
              loop: start=0, step=1, limit=1
              $region69: #{tpu_custom_call.1} parent=67 // loop_pre_header
                _
              $region70: #{tpu_custom_call.1} parent=67 // loop_header
                %s321 = sphi 0, %s325
                %p322 = scmp.ge.s32.totalorder %s321, 1
                %s326 = sphi %s312, %s312
                %s327 = sphi %s309, %s309
              $region71: #{tpu_custom_call.1} parent=67 // loop_header_branch
                %324 = sbr.rel (%p322) target = $region75
              $region72: #{tpu_custom_call.1} parent=67 // loop_body
                %v328 = vld [vmem:[%s326] sm:$0xf]
                %329 = vst [vmem:[%s327] sm:$0xf] %v328
                %v330 = vld [vmem:[%s326 + $0x4] sm:$0xf]
                %331 = vst [vmem:[%s327 + $0x4] sm:$0xf] %v330
                %v332 = vld [vmem:[%s326 + $0x8] sm:$0xf]
                %333 = vst [vmem:[%s327 + $0x8] sm:$0xf] %v332
                %v334 = vld [vmem:[%s326 + $0xc] sm:$0xf]
                %335 = vst [vmem:[%s327 + $0xc] sm:$0xf] %v334
                %v336 = vld [vmem:[%s326 + $0x10] sm:$0xf]
                %337 = vst [vmem:[%s327 + $0x10] sm:$0xf] %v336
                %v338 = vld [vmem:[%s326 + $0x14] sm:$0xf]
                %339 = vst [vmem:[%s327 + $0x14] sm:$0xf] %v338
                %v340 = vld [vmem:[%s326 + $0x18] sm:$0xf]
                %341 = vst [vmem:[%s327 + $0x18] sm:$0xf] %v340
                %v342 = vld [vmem:[%s326 + $0x1c] sm:$0xf]
                %343 = vst [vmem:[%s327 + $0x1c] sm:$0xf] %v342
                %v344 = vld [vmem:[%s326 + $0x20] sm:$0xf]
                %345 = vst [vmem:[%s327 + $0x20] sm:$0xf] %v344
                %v346 = vld [vmem:[%s326 + $0x24] sm:$0xf]
                %347 = vst [vmem:[%s327 + $0x24] sm:$0xf] %v346
                %v348 = vld [vmem:[%s326 + $0x28] sm:$0xf]
                %349 = vst [vmem:[%s327 + $0x28] sm:$0xf] %v348
                %v350 = vld [vmem:[%s326 + $0x2c] sm:$0xf]
                %351 = vst [vmem:[%s327 + $0x2c] sm:$0xf] %v350
                %v352 = vld [vmem:[%s326 + $0x30] sm:$0xf]
                %353 = vst [vmem:[%s327 + $0x30] sm:$0xf] %v352
                %v354 = vld [vmem:[%s326 + $0x34] sm:$0xf]
                %355 = vst [vmem:[%s327 + $0x34] sm:$0xf] %v354
                %v356 = vld [vmem:[%s326 + $0x38] sm:$0xf]
                %357 = vst [vmem:[%s327 + $0x38] sm:$0xf] %v356
                %v358 = vld [vmem:[%s326 + $0x3c] sm:$0xf]
                %359 = vst [vmem:[%s327 + $0x3c] sm:$0xf] %v358
                %v360 = vld [vmem:[%s326 + $0xc0] sm:$0xf]
                %361 = vst [vmem:[%s327 + $0x40] sm:$0xf] %v360
                %v362 = vld [vmem:[%s326 + $0xc4] sm:$0xf]
                %363 = vst [vmem:[%s327 + $0x44] sm:$0xf] %v362
                %v364 = vld [vmem:[%s326 + $0xc8] sm:$0xf]
                %365 = vst [vmem:[%s327 + $0x48] sm:$0xf] %v364
                %v366 = vld [vmem:[%s326 + $0xcc] sm:$0xf]
                %367 = vst [vmem:[%s327 + $0x4c] sm:$0xf] %v366
                %v368 = vld [vmem:[%s326 + $0xd0] sm:$0xf]
                %369 = vst [vmem:[%s327 + $0x50] sm:$0xf] %v368
                %v370 = vld [vmem:[%s326 + $0xd4] sm:$0xf]
                %371 = vst [vmem:[%s327 + $0x54] sm:$0xf] %v370
                %v372 = vld [vmem:[%s326 + $0xd8] sm:$0xf]
                %373 = vst [vmem:[%s327 + $0x58] sm:$0xf] %v372
                %v374 = vld [vmem:[%s326 + $0xdc] sm:$0xf]
                %375 = vst [vmem:[%s327 + $0x5c] sm:$0xf] %v374
                %v376 = vld [vmem:[%s326 + $0xe0] sm:$0xf]
                %377 = vst [vmem:[%s327 + $0x60] sm:$0xf] %v376
                %v378 = vld [vmem:[%s326 + $0xe4] sm:$0xf]
                %379 = vst [vmem:[%s327 + $0x64] sm:$0xf] %v378
                %v380 = vld [vmem:[%s326 + $0xe8] sm:$0xf]
                %381 = vst [vmem:[%s327 + $0x68] sm:$0xf] %v380
                %v382 = vld [vmem:[%s326 + $0xec] sm:$0xf]
                %383 = vst [vmem:[%s327 + $0x6c] sm:$0xf] %v382
                %v384 = vld [vmem:[%s326 + $0xf0] sm:$0xf]
                %385 = vst [vmem:[%s327 + $0x70] sm:$0xf] %v384
                %v386 = vld [vmem:[%s326 + $0xf4] sm:$0xf]
                %387 = vst [vmem:[%s327 + $0x74] sm:$0xf] %v386
                %v388 = vld [vmem:[%s326 + $0xf8] sm:$0xf]
                %389 = vst [vmem:[%s327 + $0x78] sm:$0xf] %v388
                %v390 = vld [vmem:[%s326 + $0xfc] sm:$0xf]
                %391 = vst [vmem:[%s327 + $0x7c] sm:$0xf] %v390
                %v392 = vld [vmem:[%s326 + $0x180] sm:$0xf]
                %393 = vst [vmem:[%s327 + $0x80] sm:$0xf] %v392
                %v394 = vld [vmem:[%s326 + $0x184] sm:$0xf]
                %395 = vst [vmem:[%s327 + $0x84] sm:$0xf] %v394
                %v396 = vld [vmem:[%s326 + $0x188] sm:$0xf]
                %397 = vst [vmem:[%s327 + $0x88] sm:$0xf] %v396
                %v398 = vld [vmem:[%s326 + $0x18c] sm:$0xf]
                %399 = vst [vmem:[%s327 + $0x8c] sm:$0xf] %v398
                %v400 = vld [vmem:[%s326 + $0x190] sm:$0xf]
                %401 = vst [vmem:[%s327 + $0x90] sm:$0xf] %v400
                %v402 = vld [vmem:[%s326 + $0x194] sm:$0xf]
                %403 = vst [vmem:[%s327 + $0x94] sm:$0xf] %v402
                %v404 = vld [vmem:[%s326 + $0x198] sm:$0xf]
                %405 = vst [vmem:[%s327 + $0x98] sm:$0xf] %v404
                %v406 = vld [vmem:[%s326 + $0x19c] sm:$0xf]
                %407 = vst [vmem:[%s327 + $0x9c] sm:$0xf] %v406
                %v408 = vld [vmem:[%s326 + $0x1a0] sm:$0xf]
                %409 = vst [vmem:[%s327 + $0xa0] sm:$0xf] %v408
                %v410 = vld [vmem:[%s326 + $0x1a4] sm:$0xf]
                %411 = vst [vmem:[%s327 + $0xa4] sm:$0xf] %v410
                %v412 = vld [vmem:[%s326 + $0x1a8] sm:$0xf]
                %413 = vst [vmem:[%s327 + $0xa8] sm:$0xf] %v412
                %v414 = vld [vmem:[%s326 + $0x1ac] sm:$0xf]
                %415 = vst [vmem:[%s327 + $0xac] sm:$0xf] %v414
                %v416 = vld [vmem:[%s326 + $0x1b0] sm:$0xf]
                %417 = vst [vmem:[%s327 + $0xb0] sm:$0xf] %v416
                %v418 = vld [vmem:[%s326 + $0x1b4] sm:$0xf]
                %419 = vst [vmem:[%s327 + $0xb4] sm:$0xf] %v418
                %v420 = vld [vmem:[%s326 + $0x1b8] sm:$0xf]
                %421 = vst [vmem:[%s327 + $0xb8] sm:$0xf] %v420
                %v422 = vld [vmem:[%s326 + $0x1bc] sm:$0xf]
                %423 = vst [vmem:[%s327 + $0xbc] sm:$0xf] %v422
                %v424 = vld [vmem:[%s326 + $0x240] sm:$0xf]
                %425 = vst [vmem:[%s327 + $0xc0] sm:$0xf] %v424
                %v426 = vld [vmem:[%s326 + $0x244] sm:$0xf]
                %427 = vst [vmem:[%s327 + $0xc4] sm:$0xf] %v426
                %v428 = vld [vmem:[%s326 + $0x248] sm:$0xf]
                %429 = vst [vmem:[%s327 + $0xc8] sm:$0xf] %v428
                %v430 = vld [vmem:[%s326 + $0x24c] sm:$0xf]
                %431 = vst [vmem:[%s327 + $0xcc] sm:$0xf] %v430
                %v432 = vld [vmem:[%s326 + $0x250] sm:$0xf]
                %433 = vst [vmem:[%s327 + $0xd0] sm:$0xf] %v432
                %v434 = vld [vmem:[%s326 + $0x254] sm:$0xf]
                %435 = vst [vmem:[%s327 + $0xd4] sm:$0xf] %v434
                %v436 = vld [vmem:[%s326 + $0x258] sm:$0xf]
                %437 = vst [vmem:[%s327 + $0xd8] sm:$0xf] %v436
                %v438 = vld [vmem:[%s326 + $0x25c] sm:$0xf]
                %439 = vst [vmem:[%s327 + $0xdc] sm:$0xf] %v438
                %v440 = vld [vmem:[%s326 + $0x260] sm:$0xf]
                %441 = vst [vmem:[%s327 + $0xe0] sm:$0xf] %v440
                %v442 = vld [vmem:[%s326 + $0x264] sm:$0xf]
                %443 = vst [vmem:[%s327 + $0xe4] sm:$0xf] %v442
                %v444 = vld [vmem:[%s326 + $0x268] sm:$0xf]
                %445 = vst [vmem:[%s327 + $0xe8] sm:$0xf] %v444
                %v446 = vld [vmem:[%s326 + $0x26c] sm:$0xf]
                %447 = vst [vmem:[%s327 + $0xec] sm:$0xf] %v446
                %v448 = vld [vmem:[%s326 + $0x270] sm:$0xf]
                %449 = vst [vmem:[%s327 + $0xf0] sm:$0xf] %v448
                %v450 = vld [vmem:[%s326 + $0x274] sm:$0xf]
                %451 = vst [vmem:[%s327 + $0xf4] sm:$0xf] %v450
                %v452 = vld [vmem:[%s326 + $0x278] sm:$0xf]
                %453 = vst [vmem:[%s327 + $0xf8] sm:$0xf] %v452
                %v454 = vld [vmem:[%s326 + $0x27c] sm:$0xf]
                %455 = vst [vmem:[%s327 + $0xfc] sm:$0xf] %v454
                %v456 = vld [vmem:[%s326 + $0x300] sm:$0xf]
                %457 = vst [vmem:[%s327 + $0x100] sm:$0xf] %v456
                %v458 = vld [vmem:[%s326 + $0x304] sm:$0xf]
                %459 = vst [vmem:[%s327 + $0x104] sm:$0xf] %v458
                %v460 = vld [vmem:[%s326 + $0x308] sm:$0xf]
                %461 = vst [vmem:[%s327 + $0x108] sm:$0xf] %v460
                %v462 = vld [vmem:[%s326 + $0x30c] sm:$0xf]
                %463 = vst [vmem:[%s327 + $0x10c] sm:$0xf] %v462
                %v464 = vld [vmem:[%s326 + $0x310] sm:$0xf]
                %465 = vst [vmem:[%s327 + $0x110] sm:$0xf] %v464
                %v466 = vld [vmem:[%s326 + $0x314] sm:$0xf]
                %467 = vst [vmem:[%s327 + $0x114] sm:$0xf] %v466
                %v468 = vld [vmem:[%s326 + $0x318] sm:$0xf]
                %469 = vst [vmem:[%s327 + $0x118] sm:$0xf] %v468
                %v470 = vld [vmem:[%s326 + $0x31c] sm:$0xf]
                %471 = vst [vmem:[%s327 + $0x11c] sm:$0xf] %v470
                %v472 = vld [vmem:[%s326 + $0x320] sm:$0xf]
                %473 = vst [vmem:[%s327 + $0x120] sm:$0xf] %v472
                %v474 = vld [vmem:[%s326 + $0x324] sm:$0xf]
                %475 = vst [vmem:[%s327 + $0x124] sm:$0xf] %v474
                %v476 = vld [vmem:[%s326 + $0x328] sm:$0xf]
                %477 = vst [vmem:[%s327 + $0x128] sm:$0xf] %v476
                %v478 = vld [vmem:[%s326 + $0x32c] sm:$0xf]
                %479 = vst [vmem:[%s327 + $0x12c] sm:$0xf] %v478
                %v480 = vld [vmem:[%s326 + $0x330] sm:$0xf]
                %481 = vst [vmem:[%s327 + $0x130] sm:$0xf] %v480
                %v482 = vld [vmem:[%s326 + $0x334] sm:$0xf]
                %483 = vst [vmem:[%s327 + $0x134] sm:$0xf] %v482
                %v484 = vld [vmem:[%s326 + $0x338] sm:$0xf]
                %485 = vst [vmem:[%s327 + $0x138] sm:$0xf] %v484
                %v486 = vld [vmem:[%s326 + $0x33c] sm:$0xf]
                %487 = vst [vmem:[%s327 + $0x13c] sm:$0xf] %v486
              $region73: #{tpu_custom_call.1} parent=67 // loop_footer
                %s325 = sadd.s32 1, %s321
              $region74: #{tpu_custom_call.1} parent=67 // loop_footer_branch
                %320 = sbr.rel target = $region70
              $region75: #{tpu_custom_call.1} parent=67 // loop_exit
                _
            $region68: #{tpu_custom_call.1} parent=59 // pred_fallthru
              _
          $region60: #{tpu_custom_call.1} parent=55 // pred_fallthru
            _
          %667 = vnop
        $region56: #{tpu_custom_call.1} parent=51 // pred_fallthru
          _
      $region52: #{tpu_custom_call.1} parent=5 // pred_fallthru
        _
      %p668 = scmp.le.s32.totalorder 1, %s16
      %p669 = scmp.lt.s32.totalorder %s16, 4
      %p670 = pnand %p668, %p669
      %p671 = pneg %p670
      // Predicated region
      $region94: #{tpu_custom_call.1} parent=5 // pred_check
        _
      $region95: #{tpu_custom_call.1} parent=5 // pred_check_branch
        %673 = sbr.rel (%p670) target = $region97
      $region96: #{tpu_custom_call.1} parent=5 // pred_region
        %s674 = ssub.s32 %s16, 1
        %s675 = sand.u32 %s29, 1
        %s676 = sand.u32 %s29, 1
        %s677 = smul.addr %s676, 320
        %s678 = scalar_lea.vmem [#allocation2], %s677
        // Predicated region
        $region98: #{tpu_custom_call.1} parent=96 // pred_check
          %p679 = pneg %p42
        $region99: #{tpu_custom_call.1} parent=96 // pred_check_branch
          %681 = sbr.rel (%p679) target = $region101
        $region100: #{tpu_custom_call.1} parent=96 // pred_region
          _
        $region101: #{tpu_custom_call.1} parent=96 // pred_fallthru
          _
        %s682 = sand.u32 %s29, 1
        %s683 = sand.u32 %s29, 1
        %s684 = smul.addr %s683, 320
        %s685 = scalar_lea.vmem [#allocation2], %s684
        %p686 = pneg %p42
        %p687 = pneg %p39
        %p688 = pneg %p63
        %p689 = pneg %p60
        %p690 = pneg %p84
        %p691 = pneg %p81
        %p692 = pneg %p105
        %p693 = pneg %p102
        %p694 = pneg %p126
        %p695 = pneg %p123
        %p696 = pneg %p147
        %p697 = pneg %p144
        %p698 = pneg %p168
        %p699 = pneg %p165
        %p700 = pneg %p189
        %p701 = pneg %p186
        %p702 = pneg %p210
        %p703 = pneg %p207
        %p704 = pneg %p231
        %p705 = pneg %p228
        %p706 = pneg %p257
        %p707 = pneg %p254
        %s708 = smul.u32 16, %s21
        %p709 = scmp.lt.s32.totalorder %s708, 47
        %s710 = scalar_select %p709, %s708, 47
        %s711 = smul.addr %s710, 8
        %s712 = scalar_lea.vmem %s10, %s711
        %s713 = smul.u32 16, %s21
        %s714 = smul.u32 16, %s21
        %p715 = scmp.lt.s32.totalorder %s714, 47
        %s716 = scalar_select %p715, %s714, 47
        %s717 = smul.addr %s716, 8
        %s718 = scalar_lea.vmem %s10, %s717
        %s719 = smul.u32 16, %s21
        %v721 = vld [vmem:[%s678] sm:$0xf]
        %v722 = vld [vmem:[%s678 + $0x4] sm:$0xf]
        %v723 = vld [vmem:[%s678 + $0x8] sm:$0xf]
        %v724 = vld [vmem:[%s678 + $0xc] sm:$0xf]
        %v725 = vld [vmem:[%s678 + $0x10] sm:$0xf]
        %v726 = vld [vmem:[%s678 + $0x14] sm:$0xf]
        %v727 = vld [vmem:[%s678 + $0x18] sm:$0xf]
        %v728 = vld [vmem:[%s678 + $0x1c] sm:$0xf]
        %v729 = vld [vmem:[%s678 + $0x20] sm:$0xf]
        %v730 = vld [vmem:[%s678 + $0x24] sm:$0xf]
        %v731 = vld [vmem:[%s678 + $0x28] sm:$0xf]
        %v732 = vld [vmem:[%s678 + $0x2c] sm:$0xf]
        %v733 = vld [vmem:[%s678 + $0x30] sm:$0xf]
        %v734 = vld [vmem:[%s678 + $0x34] sm:$0xf]
        %v735 = vld [vmem:[%s678 + $0x38] sm:$0xf]
        %v736 = vld [vmem:[%s678 + $0x3c] sm:$0xf]
        %v737 = vld [vmem:[%s678 + $0x40] sm:$0xf]
        %v738 = vld [vmem:[%s678 + $0x44] sm:$0xf]
        %v739 = vld [vmem:[%s678 + $0x48] sm:$0xf]
        %v740 = vld [vmem:[%s678 + $0x4c] sm:$0xf]
        %v741 = vld [vmem:[%s678 + $0x50] sm:$0xf]
        %v742 = vld [vmem:[%s678 + $0x54] sm:$0xf]
        %v743 = vld [vmem:[%s678 + $0x58] sm:$0xf]
        %v744 = vld [vmem:[%s678 + $0x5c] sm:$0xf]
        %v745 = vld [vmem:[%s678 + $0x60] sm:$0xf]
        %v746 = vld [vmem:[%s678 + $0x64] sm:$0xf]
        %v747 = vld [vmem:[%s678 + $0x68] sm:$0xf]
        %v748 = vld [vmem:[%s678 + $0x6c] sm:$0xf]
        %v749 = vld [vmem:[%s678 + $0x70] sm:$0xf]
        %v750 = vld [vmem:[%s678 + $0x74] sm:$0xf]
        %v751 = vld [vmem:[%s678 + $0x78] sm:$0xf]
        %v752 = vld [vmem:[%s678 + $0x7c] sm:$0xf]
        %v753 = vld [vmem:[%s678 + $0x80] sm:$0xf]
        %v754 = vld [vmem:[%s678 + $0x84] sm:$0xf]
        %v755 = vld [vmem:[%s678 + $0x88] sm:$0xf]
        %v756 = vld [vmem:[%s678 + $0x8c] sm:$0xf]
        %v757 = vld [vmem:[%s678 + $0x90] sm:$0xf]
        %v758 = vld [vmem:[%s678 + $0x94] sm:$0xf]
        %v759 = vld [vmem:[%s678 + $0x98] sm:$0xf]
        %v760 = vld [vmem:[%s678 + $0x9c] sm:$0xf]
        %v761 = vld [vmem:[%s678 + $0xa0] sm:$0xf]
        %v762 = vld [vmem:[%s678 + $0xa4] sm:$0xf]
        %v763 = vld [vmem:[%s678 + $0xa8] sm:$0xf]
        %v764 = vld [vmem:[%s678 + $0xac] sm:$0xf]
        %v765 = vld [vmem:[%s678 + $0xb0] sm:$0xf]
        %v766 = vld [vmem:[%s678 + $0xb4] sm:$0xf]
        %v767 = vld [vmem:[%s678 + $0xb8] sm:$0xf]
        %v768 = vld [vmem:[%s678 + $0xbc] sm:$0xf]
        %v769 = vld [vmem:[%s678 + $0xc0] sm:$0xf]
        %v770 = vld [vmem:[%s678 + $0xc4] sm:$0xf]
        %v771 = vld [vmem:[%s678 + $0xc8] sm:$0xf]
        %v772 = vld [vmem:[%s678 + $0xcc] sm:$0xf]
        %v773 = vld [vmem:[%s678 + $0xd0] sm:$0xf]
        %v774 = vld [vmem:[%s678 + $0xd4] sm:$0xf]
        %v775 = vld [vmem:[%s678 + $0xd8] sm:$0xf]
        %v776 = vld [vmem:[%s678 + $0xdc] sm:$0xf]
        %v777 = vld [vmem:[%s678 + $0xe0] sm:$0xf]
        %v778 = vld [vmem:[%s678 + $0xe4] sm:$0xf]
        %v779 = vld [vmem:[%s678 + $0xe8] sm:$0xf]
        %v780 = vld [vmem:[%s678 + $0xec] sm:$0xf]
        %v781 = vld [vmem:[%s678 + $0xf0] sm:$0xf]
        %v782 = vld [vmem:[%s678 + $0xf4] sm:$0xf]
        %v783 = vld [vmem:[%s678 + $0xf8] sm:$0xf]
        %v784 = vld [vmem:[%s678 + $0xfc] sm:$0xf]
        %v785 = vld [vmem:[%s678 + $0x100] sm:$0xf]
        %v786 = vld [vmem:[%s678 + $0x104] sm:$0xf]
        %v787 = vld [vmem:[%s678 + $0x108] sm:$0xf]
        %v788 = vld [vmem:[%s678 + $0x10c] sm:$0xf]
        %v789 = vld [vmem:[%s678 + $0x110] sm:$0xf]
        %v790 = vld [vmem:[%s678 + $0x114] sm:$0xf]
        %v791 = vld [vmem:[%s678 + $0x118] sm:$0xf]
        %v792 = vld [vmem:[%s678 + $0x11c] sm:$0xf]
        %v793 = vld [vmem:[%s678 + $0x120] sm:$0xf]
        %v794 = vld [vmem:[%s678 + $0x124] sm:$0xf]
        %v795 = vld [vmem:[%s678 + $0x128] sm:$0xf]
        %v796 = vld [vmem:[%s678 + $0x12c] sm:$0xf]
        %v797 = vld [vmem:[%s678 + $0x130] sm:$0xf]
        %v798 = vld [vmem:[%s678 + $0x134] sm:$0xf]
        %v799 = vld [vmem:[%s678 + $0x138] sm:$0xf]
        %v800 = vld [vmem:[%s678 + $0x13c] sm:$0xf]
        %v801 = vld [vmem:[%s1] sm:$0xff]
        %v802 = vld [vmem:[%s1 + $0x8] sm:$0xff]
        %v803 = vld [vmem:[%s1 + $0x10] sm:$0xff]
        %v804 = vld [vmem:[%s1 + $0x18] sm:$0xff]
        %v805 = vld [vmem:[%s1 + $0x20] sm:$0xff]
        %v806 = vld [vmem:[%s1 + $0x28] sm:$0xff]
        %v807 = vld [vmem:[%s1 + $0x30] sm:$0xff]
        %v808 = vld [vmem:[%s1 + $0x38] sm:$0xff]
        %v809 = vld [vmem:[%s2] sm:$0x3]
        %v811 = vlaneseq
        %v812 = vshrl.u32 %v811, 7
        %v813 = vsub.s32 0, %v812
        %v814 = vrot.slane %v809, %v813
        %v815 = vlaneseq
        %v816 = vshrl.u32 %v815, 7
        %v817 = vsub.s32 1, %v816
        %v818 = vrot.slane %v809, %v817
        %v901 = vunpack.c.l.b16 %v721
        %v902 = vunpack.c.l.b16 %v722
        %v903 = vunpack.c.l.b16 %v723
        %v904 = vunpack.c.l.b16 %v724
        %v905 = vunpack.c.l.b16 %v725
        %v906 = vunpack.c.l.b16 %v726
        %v907 = vunpack.c.l.b16 %v727
        %v908 = vunpack.c.l.b16 %v728
        %v909 = vunpack.c.l.b16 %v729
        %v910 = vunpack.c.l.b16 %v730
        %v911 = vunpack.c.l.b16 %v731
        %v912 = vunpack.c.l.b16 %v732
        %v913 = vunpack.c.l.b16 %v733
        %v914 = vunpack.c.l.b16 %v734
        %v915 = vunpack.c.l.b16 %v735
        %v916 = vunpack.c.l.b16 %v736
        %v917 = vunpack.c.l.b16 %v737
        %v918 = vunpack.c.l.b16 %v738
        %v919 = vunpack.c.l.b16 %v739
        %v920 = vunpack.c.l.b16 %v740
        %v921 = vunpack.c.l.b16 %v741
        %v922 = vunpack.c.l.b16 %v742
        %v923 = vunpack.c.l.b16 %v743
        %v924 = vunpack.c.l.b16 %v744
        %v925 = vunpack.c.l.b16 %v745
        %v926 = vunpack.c.l.b16 %v746
        %v927 = vunpack.c.l.b16 %v747
        %v928 = vunpack.c.l.b16 %v748
        %v929 = vunpack.c.l.b16 %v749
        %v930 = vunpack.c.l.b16 %v750
        %v931 = vunpack.c.l.b16 %v751
        %v932 = vunpack.c.l.b16 %v752
        %v933 = vunpack.c.l.b16 %v753
        %v934 = vunpack.c.l.b16 %v754
        %v935 = vunpack.c.l.b16 %v755
        %v936 = vunpack.c.l.b16 %v756
        %v937 = vunpack.c.l.b16 %v757
        %v938 = vunpack.c.l.b16 %v758
        %v939 = vunpack.c.l.b16 %v759
        %v940 = vunpack.c.l.b16 %v760
        %v941 = vunpack.c.l.b16 %v761
        %v942 = vunpack.c.l.b16 %v762
        %v943 = vunpack.c.l.b16 %v763
        %v944 = vunpack.c.l.b16 %v764
        %v945 = vunpack.c.l.b16 %v765
        %v946 = vunpack.c.l.b16 %v766
        %v947 = vunpack.c.l.b16 %v767
        %v948 = vunpack.c.l.b16 %v768
        %v949 = vunpack.c.l.b16 %v769
        %v950 = vunpack.c.l.b16 %v770
        %v951 = vunpack.c.l.b16 %v771
        %v952 = vunpack.c.l.b16 %v772
        %v953 = vunpack.c.l.b16 %v773
        %v954 = vunpack.c.l.b16 %v774
        %v955 = vunpack.c.l.b16 %v775
        %v956 = vunpack.c.l.b16 %v776
        %v957 = vunpack.c.l.b16 %v777
        %v958 = vunpack.c.l.b16 %v778
        %v959 = vunpack.c.l.b16 %v779
        %v960 = vunpack.c.l.b16 %v780
        %v961 = vunpack.c.l.b16 %v781
        %v962 = vunpack.c.l.b16 %v782
        %v963 = vunpack.c.l.b16 %v783
        %v964 = vunpack.c.l.b16 %v784
        %v965 = vunpack.c.l.b16 %v785
        %v966 = vunpack.c.l.b16 %v786
        %v967 = vunpack.c.l.b16 %v787
        %v968 = vunpack.c.l.b16 %v788
        %v969 = vunpack.c.l.b16 %v789
        %v970 = vunpack.c.l.b16 %v790
        %v971 = vunpack.c.l.b16 %v791
        %v972 = vunpack.c.l.b16 %v792
        %v973 = vunpack.c.l.b16 %v793
        %v974 = vunpack.c.l.b16 %v794
        %v975 = vunpack.c.l.b16 %v795
        %v976 = vunpack.c.l.b16 %v796
        %v977 = vunpack.c.l.b16 %v797
        %v978 = vunpack.c.l.b16 %v798
        %v979 = vunpack.c.l.b16 %v799
        %v980 = vunpack.c.l.b16 %v800
        %v981 = vpack.c.b16 %v902, %v901
        %v982 = vpack.c.b16 %v904, %v903
        %v983 = vpack.c.b16 %v906, %v905
        %v984 = vpack.c.b16 %v908, %v907
        %v985 = vpack.c.b16 %v910, %v909
        %v986 = vpack.c.b16 %v912, %v911
        %v987 = vpack.c.b16 %v914, %v913
        %v988 = vpack.c.b16 %v916, %v915
        %v989 = vpack.c.b16 %v918, %v917
        %v990 = vpack.c.b16 %v920, %v919
        %v991 = vpack.c.b16 %v922, %v921
        %v992 = vpack.c.b16 %v924, %v923
        %v993 = vpack.c.b16 %v926, %v925
        %v994 = vpack.c.b16 %v928, %v927
        %v995 = vpack.c.b16 %v930, %v929
        %v996 = vpack.c.b16 %v932, %v931
        %v997 = vpack.c.b16 %v934, %v933
        %v998 = vpack.c.b16 %v936, %v935
        %v999 = vpack.c.b16 %v938, %v937
        %v1000 = vpack.c.b16 %v940, %v939
        %v1001 = vpack.c.b16 %v942, %v941
        %v1002 = vpack.c.b16 %v944, %v943
        %v1003 = vpack.c.b16 %v946, %v945
        %v1004 = vpack.c.b16 %v948, %v947
        %v1005 = vpack.c.b16 %v950, %v949
        %v1006 = vpack.c.b16 %v952, %v951
        %v1007 = vpack.c.b16 %v954, %v953
        %v1008 = vpack.c.b16 %v956, %v955
        %v1009 = vpack.c.b16 %v958, %v957
        %v1010 = vpack.c.b16 %v960, %v959
        %v1011 = vpack.c.b16 %v962, %v961
        %v1012 = vpack.c.b16 %v964, %v963
        %v1013 = vpack.c.b16 %v966, %v965
        %v1014 = vpack.c.b16 %v968, %v967
        %v1015 = vpack.c.b16 %v970, %v969
        %v1016 = vpack.c.b16 %v972, %v971
        %v1017 = vpack.c.b16 %v974, %v973
        %v1018 = vpack.c.b16 %v976, %v975
        %v1019 = vpack.c.b16 %v978, %v977
        %v1020 = vpack.c.b16 %v980, %v979
        %v1029 = vunpack.c.l.b16 %v801
        %v1030 = vunpack.c.h.b16 %v801
        %v1031 = vunpack.c.l.b16 %v802
        %v1032 = vunpack.c.h.b16 %v802
        %v1033 = vunpack.c.l.b16 %v803
        %v1034 = vunpack.c.h.b16 %v803
        %v1035 = vunpack.c.l.b16 %v804
        %v1036 = vunpack.c.h.b16 %v804
        %v1037 = vunpack.c.l.b16 %v805
        %v1038 = vunpack.c.h.b16 %v805
        %v1039 = vunpack.c.l.b16 %v806
        %v1040 = vunpack.c.h.b16 %v806
        %v1041 = vunpack.c.l.b16 %v807
        %v1042 = vunpack.c.h.b16 %v807
        %v1043 = vunpack.c.l.b16 %v808
        %v1044 = vunpack.c.h.b16 %v808
        %v1045 = vpack.c.b16 %v1031, %v1029
        %v1046 = vpack.c.b16 %v1032, %v1030
        %v1047 = vpack.c.b16 %v1035, %v1033
        %v1048 = vpack.c.b16 %v1036, %v1034
        %v1049 = vpack.c.b16 %v1039, %v1037
        %v1050 = vpack.c.b16 %v1040, %v1038
        %v1051 = vpack.c.b16 %v1043, %v1041
        %v1052 = vpack.c.b16 %v1044, %v1042
        %vm1061 = vcmask 523264
        %v1063 = vsel %vm1061, %v981, 0
        %v1066 = vsel %vm1061, %v982, 0
        %v1069 = vsel %vm1061, %v983, 0
        %v1072 = vsel %vm1061, %v984, 0
        %v1075 = vsel %vm1061, %v985, 0
        %v1078 = vsel %vm1061, %v986, 0
        %v1081 = vsel %vm1061, %v987, 0
        %v1084 = vsel %vm1061, %v988, 0
        %v1087 = vsel %vm1061, %v989, 0
        %v1090 = vsel %vm1061, %v990, 0
        %v1093 = vsel %vm1061, %v991, 0
        %v1096 = vsel %vm1061, %v992, 0
        %v1099 = vsel %vm1061, %v993, 0
        %v1102 = vsel %vm1061, %v994, 0
        %v1105 = vsel %vm1061, %v995, 0
        %v1108 = vsel %vm1061, %v996, 0
        %v1111 = vsel %vm1061, %v997, 0
        %v1114 = vsel %vm1061, %v998, 0
        %v1117 = vsel %vm1061, %v999, 0
        %v1120 = vsel %vm1061, %v1000, 0
        %v1123 = vsel %vm1061, %v1001, 0
        %v1126 = vsel %vm1061, %v1002, 0
        %v1129 = vsel %vm1061, %v1003, 0
        %v1132 = vsel %vm1061, %v1004, 0
        %v1135 = vsel %vm1061, %v1005, 0
        %v1138 = vsel %vm1061, %v1006, 0
        %v1141 = vsel %vm1061, %v1007, 0
        %v1144 = vsel %vm1061, %v1008, 0
        %v1147 = vsel %vm1061, %v1009, 0
        %v1150 = vsel %vm1061, %v1010, 0
        %v1153 = vsel %vm1061, %v1011, 0
        %v1156 = vsel %vm1061, %v1012, 0
        %v1159 = vsel %vm1061, %v1013, 0
        %v1162 = vsel %vm1061, %v1014, 0
        %v1165 = vsel %vm1061, %v1015, 0
        %v1168 = vsel %vm1061, %v1016, 0
        %v1171 = vsel %vm1061, %v1017, 0
        %v1174 = vsel %vm1061, %v1018, 0
        %v1177 = vsel %vm1061, %v1019, 0
        %v1180 = vsel %vm1061, %v1020, 0
        %1182 = vmatprep.subr.bf16.mxu0 %v1046
        %1183 = vmatpush1.bf16.msra.mxu0 %v1045
        %1184 = vmatprep.subr.bf16.mxu0 %v1048
        %1185 = vmatpush1.bf16.msra.mxu0 %v1047
        %1186 = vmatprep.subr.bf16.mxu0 %v1050
        %1187 = vmatpush1.bf16.msra.mxu0 %v1049
        %1188 = vmatprep.subr.bf16.mxu0 %v1052
        %1189 = vmatpush1.bf16.msra.mxu0 %v1051
        %1190 = vmatprep.subr.bf16.mxu0 0
        %1191 = vmatpush1.bf16.msra.mxu0 0
        %1192 = vmatprep.subr.bf16.mxu0 0
        %1193 = vmatpush1.bf16.msra.mxu0 0
        %1194 = vmatprep.subr.bf16.mxu0 0
        %1195 = vmatpush1.bf16.msra.mxu0 0
        %1196 = vmatprep.subr.bf16.mxu0 0
        %1197 = vmatpush1.bf16.msra.mxu0 0
        %1198 = vmatprep.subr.bf16.mxu0 0
        %1199 = vmatpush1.bf16.msra.mxu0 0
        %1200 = vmatprep.subr.bf16.mxu0 0
        %1201 = vmatpush1.bf16.msra.mxu0 0
        %1202 = vmatprep.subr.bf16.mxu0 0
        %1203 = vmatpush1.bf16.msra.mxu0 0
        %1204 = vmatprep.subr.bf16.mxu0 0
        %1205 = vmatpush1.bf16.msra.mxu0 0
        %1206 = vmatprep.subr.bf16.mxu0 0
        %1207 = vmatpush1.bf16.msra.mxu0 0
        %1208 = vmatprep.subr.bf16.mxu0 0
        %1209 = vmatpush1.bf16.msra.mxu0 0
        %1210 = vmatprep.subr.bf16.mxu0 0
        %1211 = vmatpush1.bf16.msra.mxu0 0
        %1212 = vmatprep.subr.bf16.mxu0 0
        %1213 = vmatpush1.bf16.msra.mxu0 0
        %1214 = vmatprep.mubr.bf16.mxu0 0
        %1215 = vmatmul.mubr.bf16.gmra.mrb[0].mxu0 %v1063
        %v1216 = vpop.f32.mrb[0].mxu0
        %v1217 = vadd.f32 %v814, %v1216
        %v1218 = vpop.f32.mrb[0].mxu0
        %v1219 = vadd.f32 %v818, %v1218
        %v1220 = vpop.f32.mrb[0].mxu0
        %v1221 = vadd.f32 %v814, %v1220
        %v1222 = vpop.f32.mrb[0].mxu0
        %v1223 = vadd.f32 %v818, %v1222
        %1224 = vmatprep.mubr.bf16.mxu0 0
        %1225 = vmatmul.mubr.bf16.gmra.mrb[0].mxu0 %v1066
        %v1226 = vpop.f32.mrb[0].mxu0
        %v1227 = vadd.f32 %v814, %v1226
        %v1228 = vpop.f32.mrb[0].mxu0
        %v1229 = vadd.f32 %v818, %v1228
        %v1230 = vpop.f32.mrb[0].mxu0
        %v1231 = vadd.f32 %v814, %v1230
        %v1232 = vpop.f32.mrb[0].mxu0
        %v1233 = vadd.f32 %v818, %v1232
        %1234 = vmatprep.mubr.bf16.mxu0 0
        %1235 = vmatmul.mubr.bf16.gmra.mrb[0].mxu0 %v1069
        %v1236 = vpop.f32.mrb[0].mxu0
        %v1237 = vadd.f32 %v814, %v1236
        %v1238 = vpop.f32.mrb[0].mxu0
        %v1239 = vadd.f32 %v818, %v1238
        %v1240 = vpop.f32.mrb[0].mxu0
        %v1241 = vadd.f32 %v814, %v1240
        %v1242 = vpop.f32.mrb[0].mxu0
        %v1243 = vadd.f32 %v818, %v1242
        %1244 = vmatprep.mubr.bf16.mxu0 0
        %1245 = vmatmul.mubr.bf16.gmra.mrb[0].mxu0 %v1072
        %v1246 = vpop.f32.mrb[0].mxu0
        %v1247 = vadd.f32 %v814, %v1246
        %v1248 = vpop.f32.mrb[0].mxu0
        %v1249 = vadd.f32 %v818, %v1248
        %v1250 = vpop.f32.mrb[0].mxu0
        %v1251 = vadd.f32 %v814, %v1250
        %v1252 = vpop.f32.mrb[0].mxu0
        %v1253 = vadd.f32 %v818, %v1252
        %1254 = vmatprep.mubr.bf16.mxu0 0
        %1255 = vmatmul.mubr.bf16.gmra.mrb[0].mxu0 %v1075
        %v1256 = vpop.f32.mrb[0].mxu0
        %v1257 = vadd.f32 %v814, %v1256
        %v1258 = vpop.f32.mrb[0].mxu0
        %v1259 = vadd.f32 %v818, %v1258
        %v1260 = vpop.f32.mrb[0].mxu0
        %v1261 = vadd.f32 %v814, %v1260
        %v1262 = vpop.f32.mrb[0].mxu0
        %v1263 = vadd.f32 %v818, %v1262
        %1264 = vmatprep.mubr.bf16.mxu0 0
        %1265 = vmatmul.mubr.bf16.gmra.mrb[0].mxu0 %v1078
        %v1266 = vpop.f32.mrb[0].mxu0
        %v1267 = vadd.f32 %v814, %v1266
        %v1268 = vpop.f32.mrb[0].mxu0
        %v1269 = vadd.f32 %v818, %v1268
        %v1270 = vpop.f32.mrb[0].mxu0
        %v1271 = vadd.f32 %v814, %v1270
        %v1272 = vpop.f32.mrb[0].mxu0
        %v1273 = vadd.f32 %v818, %v1272
        %1274 = vmatprep.mubr.bf16.mxu0 0
        %1275 = vmatmul.mubr.bf16.gmra.mrb[0].mxu0 %v1081
        %v1276 = vpop.f32.mrb[0].mxu0
        %v1277 = vadd.f32 %v814, %v1276
        %v1278 = vpop.f32.mrb[0].mxu0
        %v1279 = vadd.f32 %v818, %v1278
        %v1280 = vpop.f32.mrb[0].mxu0
        %v1281 = vadd.f32 %v814, %v1280
        %v1282 = vpop.f32.mrb[0].mxu0
        %v1283 = vadd.f32 %v818, %v1282
        %1284 = vmatprep.mubr.bf16.mxu0 0
        %1285 = vmatmul.mubr.bf16.gmra.mrb[0].mxu0 %v1084
        %v1286 = vpop.f32.mrb[0].mxu0
        %v1287 = vadd.f32 %v814, %v1286
        %v1288 = vpop.f32.mrb[0].mxu0
        %v1289 = vadd.f32 %v818, %v1288
        %v1290 = vpop.f32.mrb[0].mxu0
        %v1291 = vadd.f32 %v814, %v1290
        %v1292 = vpop.f32.mrb[0].mxu0
        %v1293 = vadd.f32 %v818, %v1292
        %1294 = vmatprep.mubr.bf16.mxu0 0
        %1295 = vmatmul.mubr.bf16.gmra.mrb[0].mxu0 %v1087
        %v1296 = vpop.f32.mrb[0].mxu0
        %v1297 = vadd.f32 %v814, %v1296
        %v1298 = vpop.f32.mrb[0].mxu0
        %v1299 = vadd.f32 %v818, %v1298
        %v1300 = vpop.f32.mrb[0].mxu0
        %v1301 = vadd.f32 %v814, %v1300
        %v1302 = vpop.f32.mrb[0].mxu0
        %v1303 = vadd.f32 %v818, %v1302
        %1304 = vmatprep.mubr.bf16.mxu0 0
        %1305 = vmatmul.mubr.bf16.gmra.mrb[0].mxu0 %v1090
        %v1306 = vpop.f32.mrb[0].mxu0
        %v1307 = vadd.f32 %v814, %v1306
        %v1308 = vpop.f32.mrb[0].mxu0
        %v1309 = vadd.f32 %v818, %v1308
        %v1310 = vpop.f32.mrb[0].mxu0
        %v1311 = vadd.f32 %v814, %v1310
        %v1312 = vpop.f32.mrb[0].mxu0
        %v1313 = vadd.f32 %v818, %v1312
        %1314 = vmatprep.mubr.bf16.mxu0 0
        %1315 = vmatmul.mubr.bf16.gmra.mrb[0].mxu0 %v1093
        %v1316 = vpop.f32.mrb[0].mxu0
        %v1317 = vadd.f32 %v814, %v1316
        %v1318 = vpop.f32.mrb[0].mxu0
        %v1319 = vadd.f32 %v818, %v1318
        %v1320 = vpop.f32.mrb[0].mxu0
        %v1321 = vadd.f32 %v814, %v1320
        %v1322 = vpop.f32.mrb[0].mxu0
        %v1323 = vadd.f32 %v818, %v1322
        %1324 = vmatprep.mubr.bf16.mxu0 0
        %1325 = vmatmul.mubr.bf16.gmra.mrb[0].mxu0 %v1096
        %v1326 = vpop.f32.mrb[0].mxu0
        %v1327 = vadd.f32 %v814, %v1326
        %v1328 = vpop.f32.mrb[0].mxu0
        %v1329 = vadd.f32 %v818, %v1328
        %v1330 = vpop.f32.mrb[0].mxu0
        %v1331 = vadd.f32 %v814, %v1330
        %v1332 = vpop.f32.mrb[0].mxu0
        %v1333 = vadd.f32 %v818, %v1332
        %1334 = vmatprep.mubr.bf16.mxu0 0
        %1335 = vmatmul.mubr.bf16.gmra.mrb[0].mxu0 %v1099
        %v1336 = vpop.f32.mrb[0].mxu0
        %v1337 = vadd.f32 %v814, %v1336
        %v1338 = vpop.f32.mrb[0].mxu0
        %v1339 = vadd.f32 %v818, %v1338
        %v1340 = vpop.f32.mrb[0].mxu0
        %v1341 = vadd.f32 %v814, %v1340
        %v1342 = vpop.f32.mrb[0].mxu0
        %v1343 = vadd.f32 %v818, %v1342
        %1344 = vmatprep.mubr.bf16.mxu0 0
        %1345 = vmatmul.mubr.bf16.gmra.mrb[0].mxu0 %v1102
        %v1346 = vpop.f32.mrb[0].mxu0
        %v1347 = vadd.f32 %v814, %v1346
        %v1348 = vpop.f32.mrb[0].mxu0
        %v1349 = vadd.f32 %v818, %v1348
        %v1350 = vpop.f32.mrb[0].mxu0
        %v1351 = vadd.f32 %v814, %v1350
        %v1352 = vpop.f32.mrb[0].mxu0
        %v1353 = vadd.f32 %v818, %v1352
        %1354 = vmatprep.mubr.bf16.mxu0 0
        %1355 = vmatmul.mubr.bf16.gmra.mrb[0].mxu0 %v1105
        %v1356 = vpop.f32.mrb[0].mxu0
        %v1357 = vadd.f32 %v814, %v1356
        %v1358 = vpop.f32.mrb[0].mxu0
        %v1359 = vadd.f32 %v818, %v1358
        %v1360 = vpop.f32.mrb[0].mxu0
        %v1361 = vadd.f32 %v814, %v1360
        %v1362 = vpop.f32.mrb[0].mxu0
        %v1363 = vadd.f32 %v818, %v1362
        %1364 = vmatprep.mubr.bf16.mxu0 0
        %1365 = vmatmul.mubr.bf16.gmra.mrb[0].mxu0 %v1108
        %v1366 = vpop.f32.mrb[0].mxu0
        %v1367 = vadd.f32 %v814, %v1366
        %v1368 = vpop.f32.mrb[0].mxu0
        %v1369 = vadd.f32 %v818, %v1368
        %v1370 = vpop.f32.mrb[0].mxu0
        %v1371 = vadd.f32 %v814, %v1370
        %v1372 = vpop.f32.mrb[0].mxu0
        %v1373 = vadd.f32 %v818, %v1372
        %1374 = vmatprep.mubr.bf16.mxu0 0
        %1375 = vmatmul.mubr.bf16.gmra.mrb[0].mxu0 %v1111
        %v1376 = vpop.f32.mrb[0].mxu0
        %v1377 = vadd.f32 %v814, %v1376
        %v1378 = vpop.f32.mrb[0].mxu0
        %v1379 = vadd.f32 %v818, %v1378
        %v1380 = vpop.f32.mrb[0].mxu0
        %v1381 = vadd.f32 %v814, %v1380
        %v1382 = vpop.f32.mrb[0].mxu0
        %v1383 = vadd.f32 %v818, %v1382
        %1384 = vmatprep.mubr.bf16.mxu0 0
        %1385 = vmatmul.mubr.bf16.gmra.mrb[0].mxu0 %v1114
        %v1386 = vpop.f32.mrb[0].mxu0
        %v1387 = vadd.f32 %v814, %v1386
        %v1388 = vpop.f32.mrb[0].mxu0
        %v1389 = vadd.f32 %v818, %v1388
        %v1390 = vpop.f32.mrb[0].mxu0
        %v1391 = vadd.f32 %v814, %v1390
        %v1392 = vpop.f32.mrb[0].mxu0
        %v1393 = vadd.f32 %v818, %v1392
        %1394 = vmatprep.mubr.bf16.mxu0 0
        %1395 = vmatmul.mubr.bf16.gmra.mrb[0].mxu0 %v1117
        %v1396 = vpop.f32.mrb[0].mxu0
        %v1397 = vadd.f32 %v814, %v1396
        %v1398 = vpop.f32.mrb[0].mxu0
        %v1399 = vadd.f32 %v818, %v1398
        %v1400 = vpop.f32.mrb[0].mxu0
        %v1401 = vadd.f32 %v814, %v1400
        %v1402 = vpop.f32.mrb[0].mxu0
        %v1403 = vadd.f32 %v818, %v1402
        %1404 = vmatprep.mubr.bf16.mxu0 0
        %1405 = vmatmul.mubr.bf16.gmra.mrb[0].mxu0 %v1120
        %v1406 = vpop.f32.mrb[0].mxu0
        %v1407 = vadd.f32 %v814, %v1406
        %v1408 = vpop.f32.mrb[0].mxu0
        %v1409 = vadd.f32 %v818, %v1408
        %v1410 = vpop.f32.mrb[0].mxu0
        %v1411 = vadd.f32 %v814, %v1410
        %v1412 = vpop.f32.mrb[0].mxu0
        %v1413 = vadd.f32 %v818, %v1412
        %1414 = vmatprep.mubr.bf16.mxu0 0
        %1415 = vmatmul.mubr.bf16.gmra.mrb[0].mxu0 %v1123
        %v1416 = vpop.f32.mrb[0].mxu0
        %v1417 = vadd.f32 %v814, %v1416
        %v1418 = vpop.f32.mrb[0].mxu0
        %v1419 = vadd.f32 %v818, %v1418
        %v1420 = vpop.f32.mrb[0].mxu0
        %v1421 = vadd.f32 %v814, %v1420
        %v1422 = vpop.f32.mrb[0].mxu0
        %v1423 = vadd.f32 %v818, %v1422
        %1424 = vmatprep.mubr.bf16.mxu0 0
        %1425 = vmatmul.mubr.bf16.gmra.mrb[0].mxu0 %v1126
        %v1426 = vpop.f32.mrb[0].mxu0
        %v1427 = vadd.f32 %v814, %v1426
        %v1428 = vpop.f32.mrb[0].mxu0
        %v1429 = vadd.f32 %v818, %v1428
        %v1430 = vpop.f32.mrb[0].mxu0
        %v1431 = vadd.f32 %v814, %v1430
        %v1432 = vpop.f32.mrb[0].mxu0
        %v1433 = vadd.f32 %v818, %v1432
        %1434 = vmatprep.mubr.bf16.mxu0 0
        %1435 = vmatmul.mubr.bf16.gmra.mrb[0].mxu0 %v1129
        %v1436 = vpop.f32.mrb[0].mxu0
        %v1437 = vadd.f32 %v814, %v1436
        %v1438 = vpop.f32.mrb[0].mxu0
        %v1439 = vadd.f32 %v818, %v1438
        %v1440 = vpop.f32.mrb[0].mxu0
        %v1441 = vadd.f32 %v814, %v1440
        %v1442 = vpop.f32.mrb[0].mxu0
        %v1443 = vadd.f32 %v818, %v1442
        %1444 = vmatprep.mubr.bf16.mxu0 0
        %1445 = vmatmul.mubr.bf16.gmra.mrb[0].mxu0 %v1132
        %v1446 = vpop.f32.mrb[0].mxu0
        %v1447 = vadd.f32 %v814, %v1446
        %v1448 = vpop.f32.mrb[0].mxu0
        %v1449 = vadd.f32 %v818, %v1448
        %v1450 = vpop.f32.mrb[0].mxu0
        %v1451 = vadd.f32 %v814, %v1450
        %v1452 = vpop.f32.mrb[0].mxu0
        %v1453 = vadd.f32 %v818, %v1452
        %1454 = vmatprep.mubr.bf16.mxu0 0
        %1455 = vmatmul.mubr.bf16.gmra.mrb[0].mxu0 %v1135
        %v1456 = vpop.f32.mrb[0].mxu0
        %v1457 = vadd.f32 %v814, %v1456
        %v1458 = vpop.f32.mrb[0].mxu0
        %v1459 = vadd.f32 %v818, %v1458
        %v1460 = vpop.f32.mrb[0].mxu0
        %v1461 = vadd.f32 %v814, %v1460
        %v1462 = vpop.f32.mrb[0].mxu0
        %v1463 = vadd.f32 %v818, %v1462
        %1464 = vmatprep.mubr.bf16.mxu0 0
        %1465 = vmatmul.mubr.bf16.gmra.mrb[0].mxu0 %v1138
        %v1466 = vpop.f32.mrb[0].mxu0
        %v1467 = vadd.f32 %v814, %v1466
        %v1468 = vpop.f32.mrb[0].mxu0
        %v1469 = vadd.f32 %v818, %v1468
        %v1470 = vpop.f32.mrb[0].mxu0
        %v1471 = vadd.f32 %v814, %v1470
        %v1472 = vpop.f32.mrb[0].mxu0
        %v1473 = vadd.f32 %v818, %v1472
        %1474 = vmatprep.mubr.bf16.mxu0 0
        %1475 = vmatmul.mubr.bf16.gmra.mrb[0].mxu0 %v1141
        %v1476 = vpop.f32.mrb[0].mxu0
        %v1477 = vadd.f32 %v814, %v1476
        %v1478 = vpop.f32.mrb[0].mxu0
        %v1479 = vadd.f32 %v818, %v1478
        %v1480 = vpop.f32.mrb[0].mxu0
        %v1481 = vadd.f32 %v814, %v1480
        %v1482 = vpop.f32.mrb[0].mxu0
        %v1483 = vadd.f32 %v818, %v1482
        %1484 = vmatprep.mubr.bf16.mxu0 0
        %1485 = vmatmul.mubr.bf16.gmra.mrb[0].mxu0 %v1144
        %v1486 = vpop.f32.mrb[0].mxu0
        %v1487 = vadd.f32 %v814, %v1486
        %v1488 = vpop.f32.mrb[0].mxu0
        %v1489 = vadd.f32 %v818, %v1488
        %v1490 = vpop.f32.mrb[0].mxu0
        %v1491 = vadd.f32 %v814, %v1490
        %v1492 = vpop.f32.mrb[0].mxu0
        %v1493 = vadd.f32 %v818, %v1492
        %1494 = vmatprep.mubr.bf16.mxu0 0
        %1495 = vmatmul.mubr.bf16.gmra.mrb[0].mxu0 %v1147
        %v1496 = vpop.f32.mrb[0].mxu0
        %v1497 = vadd.f32 %v814, %v1496
        %v1498 = vpop.f32.mrb[0].mxu0
        %v1499 = vadd.f32 %v818, %v1498
        %v1500 = vpop.f32.mrb[0].mxu0
        %v1501 = vadd.f32 %v814, %v1500
        %v1502 = vpop.f32.mrb[0].mxu0
        %v1503 = vadd.f32 %v818, %v1502
        %1504 = vmatprep.mubr.bf16.mxu0 0
        %1505 = vmatmul.mubr.bf16.gmra.mrb[0].mxu0 %v1150
        %v1506 = vpop.f32.mrb[0].mxu0
        %v1507 = vadd.f32 %v814, %v1506
        %v1508 = vpop.f32.mrb[0].mxu0
        %v1509 = vadd.f32 %v818, %v1508
        %v1510 = vpop.f32.mrb[0].mxu0
        %v1511 = vadd.f32 %v814, %v1510
        %v1512 = vpop.f32.mrb[0].mxu0
        %v1513 = vadd.f32 %v818, %v1512
        %1514 = vmatprep.mubr.bf16.mxu0 0
        %1515 = vmatmul.mubr.bf16.gmra.mrb[0].mxu0 %v1153
        %v1516 = vpop.f32.mrb[0].mxu0
        %v1517 = vadd.f32 %v814, %v1516
        %v1518 = vpop.f32.mrb[0].mxu0
        %v1519 = vadd.f32 %v818, %v1518
        %v1520 = vpop.f32.mrb[0].mxu0
        %v1521 = vadd.f32 %v814, %v1520
        %v1522 = vpop.f32.mrb[0].mxu0
        %v1523 = vadd.f32 %v818, %v1522
        %1524 = vmatprep.mubr.bf16.mxu0 0
        %1525 = vmatmul.mubr.bf16.gmra.mrb[0].mxu0 %v1156
        %v1526 = vpop.f32.mrb[0].mxu0
        %v1527 = vadd.f32 %v814, %v1526
        %v1528 = vpop.f32.mrb[0].mxu0
        %v1529 = vadd.f32 %v818, %v1528
        %v1530 = vpop.f32.mrb[0].mxu0
        %v1531 = vadd.f32 %v814, %v1530
        %v1532 = vpop.f32.mrb[0].mxu0
        %v1533 = vadd.f32 %v818, %v1532
        %1534 = vmatprep.mubr.bf16.mxu0 0
        %1535 = vmatmul.mubr.bf16.gmra.mrb[0].mxu0 %v1159
        %v1536 = vpop.f32.mrb[0].mxu0
        %v1537 = vadd.f32 %v814, %v1536
        %v1538 = vpop.f32.mrb[0].mxu0
        %v1539 = vadd.f32 %v818, %v1538
        %v1540 = vpop.f32.mrb[0].mxu0
        %v1541 = vadd.f32 %v814, %v1540
        %v1542 = vpop.f32.mrb[0].mxu0
        %v1543 = vadd.f32 %v818, %v1542
        %1544 = vmatprep.mubr.bf16.mxu0 0
        %1545 = vmatmul.mubr.bf16.gmra.mrb[0].mxu0 %v1162
        %v1546 = vpop.f32.mrb[0].mxu0
        %v1547 = vadd.f32 %v814, %v1546
        %v1548 = vpop.f32.mrb[0].mxu0
        %v1549 = vadd.f32 %v818, %v1548
        %v1550 = vpop.f32.mrb[0].mxu0
        %v1551 = vadd.f32 %v814, %v1550
        %v1552 = vpop.f32.mrb[0].mxu0
        %v1553 = vadd.f32 %v818, %v1552
        %1554 = vmatprep.mubr.bf16.mxu0 0
        %1555 = vmatmul.mubr.bf16.gmra.mrb[0].mxu0 %v1165
        %v1556 = vpop.f32.mrb[0].mxu0
        %v1557 = vadd.f32 %v814, %v1556
        %v1558 = vpop.f32.mrb[0].mxu0
        %v1559 = vadd.f32 %v818, %v1558
        %v1560 = vpop.f32.mrb[0].mxu0
        %v1561 = vadd.f32 %v814, %v1560
        %v1562 = vpop.f32.mrb[0].mxu0
        %v1563 = vadd.f32 %v818, %v1562
        %1564 = vmatprep.mubr.bf16.mxu0 0
        %1565 = vmatmul.mubr.bf16.gmra.mrb[0].mxu0 %v1168
        %v1566 = vpop.f32.mrb[0].mxu0
        %v1567 = vadd.f32 %v814, %v1566
        %v1568 = vpop.f32.mrb[0].mxu0
        %v1569 = vadd.f32 %v818, %v1568
        %v1570 = vpop.f32.mrb[0].mxu0
        %v1571 = vadd.f32 %v814, %v1570
        %v1572 = vpop.f32.mrb[0].mxu0
        %v1573 = vadd.f32 %v818, %v1572
        %1574 = vmatprep.mubr.bf16.mxu0 0
        %1575 = vmatmul.mubr.bf16.gmra.mrb[0].mxu0 %v1171
        %v1576 = vpop.f32.mrb[0].mxu0
        %v1577 = vadd.f32 %v814, %v1576
        %v1578 = vpop.f32.mrb[0].mxu0
        %v1579 = vadd.f32 %v818, %v1578
        %v1580 = vpop.f32.mrb[0].mxu0
        %v1581 = vadd.f32 %v814, %v1580
        %v1582 = vpop.f32.mrb[0].mxu0
        %v1583 = vadd.f32 %v818, %v1582
        %1584 = vmatprep.mubr.bf16.mxu0 0
        %1585 = vmatmul.mubr.bf16.gmra.mrb[0].mxu0 %v1174
        %v1586 = vpop.f32.mrb[0].mxu0
        %v1587 = vadd.f32 %v814, %v1586
        %v1588 = vpop.f32.mrb[0].mxu0
        %v1589 = vadd.f32 %v818, %v1588
        %v1590 = vpop.f32.mrb[0].mxu0
        %v1591 = vadd.f32 %v814, %v1590
        %v1592 = vpop.f32.mrb[0].mxu0
        %v1593 = vadd.f32 %v818, %v1592
        %1594 = vmatprep.mubr.bf16.mxu0 0
        %1595 = vmatmul.mubr.bf16.gmra.mrb[0].mxu0 %v1177
        %v1596 = vpop.f32.mrb[0].mxu0
        %v1597 = vadd.f32 %v814, %v1596
        %v1598 = vpop.f32.mrb[0].mxu0
        %v1599 = vadd.f32 %v818, %v1598
        %v1600 = vpop.f32.mrb[0].mxu0
        %v1601 = vadd.f32 %v814, %v1600
        %v1602 = vpop.f32.mrb[0].mxu0
        %v1603 = vadd.f32 %v818, %v1602
        %1604 = vmatprep.mubr.bf16.mxu0 0
        %1605 = vmatmul.mubr.bf16.gmra.mrb[0].mxu0 %v1180
        %v1606 = vpop.f32.mrb[0].mxu0
        %v1607 = vadd.f32 %v814, %v1606
        %v1608 = vpop.f32.mrb[0].mxu0
        %v1609 = vadd.f32 %v818, %v1608
        %v1610 = vpop.f32.mrb[0].mxu0
        %v1611 = vadd.f32 %v814, %v1610
        %v1612 = vpop.f32.mrb[0].mxu0
        %v1613 = vadd.f32 %v818, %v1612
        %1614 = vdwg.mxu0
        %v1615 = vld [vmem:[%s3] sm:$0xff]
        %v1616 = vld [vmem:[%s3 + $0x8] sm:$0xff]
        %v1617 = vld [vmem:[%s3 + $0x10] sm:$0xff]
        %v1618 = vld [vmem:[%s3 + $0x18] sm:$0xff]
        %v1619 = vld [vmem:[%s3 + $0x20] sm:$0xff]
        %v1620 = vld [vmem:[%s3 + $0x28] sm:$0xff]
        %v1621 = vld [vmem:[%s3 + $0x30] sm:$0xff]
        %v1622 = vld [vmem:[%s3 + $0x38] sm:$0xff]
        %v1623 = vld [vmem:[%s4] sm:$0xf]
        %1640 = vrot.lane.b32.xlu0 %v1377, 64
        %v1641 = vpop.permute.xlu0 %1640
        %1642 = vrot.lane.b32.xlu0 %v1381, 64
        %v1643 = vpop.permute.xlu0 %1642
        %1644 = vrot.lane.b32.xlu0 %v1387, 64
        %v1645 = vpop.permute.xlu0 %1644
        %1646 = vrot.lane.b32.xlu0 %v1391, 64
        %v1647 = vpop.permute.xlu0 %1646
        %1648 = vrot.lane.b32.xlu0 %v1397, 64
        %v1649 = vpop.permute.xlu0 %1648
        %1650 = vrot.lane.b32.xlu0 %v1401, 64
        %v1651 = vpop.permute.xlu0 %1650
        %1652 = vrot.lane.b32.xlu0 %v1407, 64
        %v1653 = vpop.permute.xlu0 %1652
        %1654 = vrot.lane.b32.xlu0 %v1411, 64
        %v1655 = vpop.permute.xlu0 %1654
        %1656 = vrot.lane.b32.xlu0 %v1417, 64
        %v1657 = vpop.permute.xlu0 %1656
        %1658 = vrot.lane.b32.xlu0 %v1421, 64
        %v1659 = vpop.permute.xlu0 %1658
        %1660 = vrot.lane.b32.xlu0 %v1427, 64
        %v1661 = vpop.permute.xlu0 %1660
        %1662 = vrot.lane.b32.xlu0 %v1431, 64
        %v1663 = vpop.permute.xlu0 %1662
        %1664 = vrot.lane.b32.xlu0 %v1437, 64
        %v1665 = vpop.permute.xlu0 %1664
        %1666 = vrot.lane.b32.xlu0 %v1441, 64
        %v1667 = vpop.permute.xlu0 %1666
        %1668 = vrot.lane.b32.xlu0 %v1447, 64
        %v1669 = vpop.permute.xlu0 %1668
        %1670 = vrot.lane.b32.xlu0 %v1451, 64
        %v1671 = vpop.permute.xlu0 %1670
        %v1688 = vmul.f32 %v1217, %v1641
        %v1689 = vmul.f32 %v1221, %v1643
        %v1690 = vmul.f32 %v1227, %v1645
        %v1691 = vmul.f32 %v1231, %v1647
        %v1692 = vmul.f32 %v1237, %v1649
        %v1693 = vmul.f32 %v1241, %v1651
        %v1694 = vmul.f32 %v1247, %v1653
        %v1695 = vmul.f32 %v1251, %v1655
        %v1696 = vmul.f32 %v1257, %v1657
        %v1697 = vmul.f32 %v1261, %v1659
        %v1698 = vmul.f32 %v1267, %v1661
        %v1699 = vmul.f32 %v1271, %v1663
        %v1700 = vmul.f32 %v1277, %v1665
        %v1701 = vmul.f32 %v1281, %v1667
        %v1702 = vmul.f32 %v1287, %v1669
        %v1703 = vmul.f32 %v1291, %v1671
        %1720 = vrot.lane.b32.xlu0 %v1688, 64
        %v1721 = vpop.permute.xlu0 %1720
        %1722 = vrot.lane.b32.xlu0 %v1689, 64
        %v1723 = vpop.permute.xlu0 %1722
        %1724 = vrot.lane.b32.xlu0 %v1690, 64
        %v1725 = vpop.permute.xlu0 %1724
        %1726 = vrot.lane.b32.xlu0 %v1691, 64
        %v1727 = vpop.permute.xlu0 %1726
        %1728 = vrot.lane.b32.xlu0 %v1692, 64
        %v1729 = vpop.permute.xlu0 %1728
        %1730 = vrot.lane.b32.xlu0 %v1693, 64
        %v1731 = vpop.permute.xlu0 %1730
        %1732 = vrot.lane.b32.xlu0 %v1694, 64
        %v1733 = vpop.permute.xlu0 %1732
        %1734 = vrot.lane.b32.xlu0 %v1695, 64
        %v1735 = vpop.permute.xlu0 %1734
        %1736 = vrot.lane.b32.xlu0 %v1696, 64
        %v1737 = vpop.permute.xlu0 %1736
        %1738 = vrot.lane.b32.xlu0 %v1697, 64
        %v1739 = vpop.permute.xlu0 %1738
        %1740 = vrot.lane.b32.xlu0 %v1698, 64
        %v1741 = vpop.permute.xlu0 %1740
        %1742 = vrot.lane.b32.xlu0 %v1699, 64
        %v1743 = vpop.permute.xlu0 %1742
        %1744 = vrot.lane.b32.xlu0 %v1700, 64
        %v1745 = vpop.permute.xlu0 %1744
        %1746 = vrot.lane.b32.xlu0 %v1701, 64
        %v1747 = vpop.permute.xlu0 %1746
        %1748 = vrot.lane.b32.xlu0 %v1702, 64
        %v1749 = vpop.permute.xlu0 %1748
        %1750 = vrot.lane.b32.xlu0 %v1703, 64
        %v1751 = vpop.permute.xlu0 %1750
        %v1752 = vsel %vm1061, %v1721, 0
        %v1754 = vsel %vm1061, %v1723, 0
        %v1756 = vsel %vm1061, %v1725, 0
        %v1758 = vsel %vm1061, %v1727, 0
        %v1760 = vsel %vm1061, %v1729, 0
        %v1762 = vsel %vm1061, %v1731, 0
        %v1764 = vsel %vm1061, %v1733, 0
        %v1766 = vsel %vm1061, %v1735, 0
        %v1768 = vsel %vm1061, %v1737, 0
        %v1770 = vsel %vm1061, %v1739, 0
        %v1772 = vsel %vm1061, %v1741, 0
        %v1774 = vsel %vm1061, %v1743, 0
        %v1776 = vsel %vm1061, %v1745, 0
        %v1778 = vsel %vm1061, %v1747, 0
        %v1780 = vsel %vm1061, %v1749, 0
        %v1782 = vsel %vm1061, %v1751, 0
        %1784 = vmatprep.subr.mxu0 0.0
        %1785 = vmatpush1.msra.mxu0 %v1615
        %1786 = vmatprep.subr.mxu0 0.0
        %1787 = vmatpush1.msra.mxu0 %v1616
        %1788 = vmatprep.subr.mxu0 0.0
        %1789 = vmatpush1.msra.mxu0 %v1617
        %1790 = vmatprep.subr.mxu0 0.0
        %1791 = vmatpush1.msra.mxu0 %v1618
        %1792 = vmatprep.subr.mxu0 0.0
        %1793 = vmatpush1.msra.mxu0 %v1619
        %1794 = vmatprep.subr.mxu0 0.0
        %1795 = vmatpush1.msra.mxu0 %v1620
        %1796 = vmatprep.subr.mxu0 0.0
        %1797 = vmatpush1.msra.mxu0 %v1621
        %1798 = vmatprep.subr.mxu0 0.0
        %1799 = vmatpush1.msra.mxu0 %v1622
        %1800 = vmatprep.subr.mxu0 0.0
        %1801 = vmatpush1.msra.mxu0 0.0
        %1802 = vmatprep.subr.mxu0 0.0
        %1803 = vmatpush1.msra.mxu0 0.0
        %1804 = vmatprep.subr.mxu0 0.0
        %1805 = vmatpush1.msra.mxu0 0.0
        %1806 = vmatprep.subr.mxu0 0.0
        %1807 = vmatpush1.msra.mxu0 0.0
        %1808 = vmatprep.subr.mxu0 0.0
        %1809 = vmatpush1.msra.mxu0 0.0
        %1810 = vmatprep.subr.mxu0 0.0
        %1811 = vmatpush1.msra.mxu0 0.0
        %1812 = vmatprep.subr.mxu0 0.0
        %1813 = vmatpush1.msra.mxu0 0.0
        %1814 = vmatprep.subr.mxu0 0.0
        %1815 = vmatpush1.msra.mxu0 0.0
        %1816 = vmatprep.subr.mxu0 0.0
        %1817 = vmatpush1.msra.mxu0 0.0
        %1818 = vmatprep.subr.mxu0 0.0
        %1819 = vmatpush1.msra.mxu0 0.0
        %1820 = vmatprep.subr.mxu0 0.0
        %1821 = vmatpush1.msra.mxu0 0.0
        %1822 = vmatprep.subr.mxu0 0.0
        %1823 = vmatpush1.msra.mxu0 0.0
        %1824 = vmatprep.subr.mxu0 0.0
        %1825 = vmatpush1.msra.mxu0 0.0
        %1826 = vmatprep.subr.mxu0 0.0
        %1827 = vmatpush1.msra.mxu0 0.0
        %1828 = vmatprep.subr.mxu0 0.0
        %1829 = vmatpush1.msra.mxu0 0.0
        %1830 = vmatprep.subr.mxu0 0.0
        %1831 = vmatpush1.msra.mxu0 0.0
        %1832 = vmatprep.subr.mxu0 0.0
        %1833 = vmatpush1.msra.mxu0 0.0
        %1834 = vmatprep.subr.mxu0 0.0
        %1835 = vmatpush1.msra.mxu0 0.0
        %1836 = vmatprep.subr.mxu0 0.0
        %1837 = vmatpush1.msra.mxu0 0.0
        %1838 = vmatprep.subr.mxu0 0.0
        %1839 = vmatpush1.msra.mxu0 0.0
        %1840 = vmatprep.subr.mxu0 0.0
        %1841 = vmatpush1.msra.mxu0 0.0
        %1842 = vmatprep.subr.mxu0 0.0
        %1843 = vmatpush1.msra.mxu0 0.0
        %1844 = vmatprep.subr.mxu0 0.0
        %1845 = vmatpush1.msra.mxu0 0.0
        %1846 = vmatprep.subr.mxu0 0.0
        %1847 = vmatpush1.msra.mxu0 0.0
        %1848 = vmatprep.mubr.f32.mxu0 0.0
        %1849 = vmatmul.mubr.f32.gmra.mrb[0].mxu0 %v1752
        %v1850 = vpop.f32.mrb[0].mxu0
        %v1851 = vadd.f32 0.0, %v1850
        %v1852 = vpop.f32.mrb[0].mxu0
        %1853 = vmatprep.mubr.f32.mxu0 0.0
        %1854 = vmatmul.mubr.f32.gmra.mrb[0].mxu0 %v1754
        %v1855 = vpop.f32.mrb[0].mxu0
        %v1856 = vadd.f32 0.0, %v1855
        %v1857 = vpop.f32.mrb[0].mxu0
        %1858 = vmatprep.mubr.f32.mxu0 0.0
        %1859 = vmatmul.mubr.f32.gmra.mrb[0].mxu0 %v1756
        %v1860 = vpop.f32.mrb[0].mxu0
        %v1861 = vadd.f32 0.0, %v1860
        %v1862 = vpop.f32.mrb[0].mxu0
        %1863 = vmatprep.mubr.f32.mxu0 0.0
        %1864 = vmatmul.mubr.f32.gmra.mrb[0].mxu0 %v1758
        %v1865 = vpop.f32.mrb[0].mxu0
        %v1866 = vadd.f32 0.0, %v1865
        %v1867 = vpop.f32.mrb[0].mxu0
        %1868 = vmatprep.mubr.f32.mxu0 0.0
        %1869 = vmatmul.mubr.f32.gmra.mrb[0].mxu0 %v1760
        %v1870 = vpop.f32.mrb[0].mxu0
        %v1871 = vadd.f32 0.0, %v1870
        %v1872 = vpop.f32.mrb[0].mxu0
        %1873 = vmatprep.mubr.f32.mxu0 0.0
        %1874 = vmatmul.mubr.f32.gmra.mrb[0].mxu0 %v1762
        %v1875 = vpop.f32.mrb[0].mxu0
        %v1876 = vadd.f32 0.0, %v1875
        %v1877 = vpop.f32.mrb[0].mxu0
        %1878 = vmatprep.mubr.f32.mxu0 0.0
        %1879 = vmatmul.mubr.f32.gmra.mrb[0].mxu0 %v1764
        %v1880 = vpop.f32.mrb[0].mxu0
        %v1881 = vadd.f32 0.0, %v1880
        %v1882 = vpop.f32.mrb[0].mxu0
        %1883 = vmatprep.mubr.f32.mxu0 0.0
        %1884 = vmatmul.mubr.f32.gmra.mrb[0].mxu0 %v1766
        %v1885 = vpop.f32.mrb[0].mxu0
        %v1886 = vadd.f32 0.0, %v1885
        %v1887 = vpop.f32.mrb[0].mxu0
        %1888 = vmatprep.mubr.f32.mxu0 0.0
        %1889 = vmatmul.mubr.f32.gmra.mrb[0].mxu0 %v1768
        %v1890 = vpop.f32.mrb[0].mxu0
        %v1891 = vadd.f32 0.0, %v1890
        %v1892 = vpop.f32.mrb[0].mxu0
        %1893 = vmatprep.mubr.f32.mxu0 0.0
        %1894 = vmatmul.mubr.f32.gmra.mrb[0].mxu0 %v1770
        %v1895 = vpop.f32.mrb[0].mxu0
        %v1896 = vadd.f32 0.0, %v1895
        %v1897 = vpop.f32.mrb[0].mxu0
        %1898 = vmatprep.mubr.f32.mxu0 0.0
        %1899 = vmatmul.mubr.f32.gmra.mrb[0].mxu0 %v1772
        %v1900 = vpop.f32.mrb[0].mxu0
        %v1901 = vadd.f32 0.0, %v1900
        %v1902 = vpop.f32.mrb[0].mxu0
        %1903 = vmatprep.mubr.f32.mxu0 0.0
        %1904 = vmatmul.mubr.f32.gmra.mrb[0].mxu0 %v1774
        %v1905 = vpop.f32.mrb[0].mxu0
        %v1906 = vadd.f32 0.0, %v1905
        %v1907 = vpop.f32.mrb[0].mxu0
        %1908 = vmatprep.mubr.f32.mxu0 0.0
        %1909 = vmatmul.mubr.f32.gmra.mrb[0].mxu0 %v1776
        %v1910 = vpop.f32.mrb[0].mxu0
        %v1911 = vadd.f32 0.0, %v1910
        %v1912 = vpop.f32.mrb[0].mxu0
        %1913 = vmatprep.mubr.f32.mxu0 0.0
        %1914 = vmatmul.mubr.f32.gmra.mrb[0].mxu0 %v1778
        %v1915 = vpop.f32.mrb[0].mxu0
        %v1916 = vadd.f32 0.0, %v1915
        %v1917 = vpop.f32.mrb[0].mxu0
        %1918 = vmatprep.mubr.f32.mxu0 0.0
        %1919 = vmatmul.mubr.f32.gmra.mrb[0].mxu0 %v1780
        %v1920 = vpop.f32.mrb[0].mxu0
        %v1921 = vadd.f32 0.0, %v1920
        %v1922 = vpop.f32.mrb[0].mxu0
        %1923 = vmatprep.mubr.f32.mxu0 0.0
        %1924 = vmatmul.mubr.f32.gmra.mrb[0].mxu0 %v1782
        %v1925 = vpop.f32.mrb[0].mxu0
        %v1926 = vadd.f32 0.0, %v1925
        %v1927 = vpop.f32.mrb[0].mxu0
        %1928 = vdwg.mxu0
        %v1929 = vmul.f32 %v1297, %v1641
        %v1930 = vmul.f32 %v1301, %v1643
        %v1931 = vmul.f32 %v1307, %v1645
        %v1932 = vmul.f32 %v1311, %v1647
        %v1933 = vmul.f32 %v1317, %v1649
        %v1934 = vmul.f32 %v1321, %v1651
        %v1935 = vmul.f32 %v1327, %v1653
        %v1936 = vmul.f32 %v1331, %v1655
        %v1937 = vmul.f32 %v1337, %v1657
        %v1938 = vmul.f32 %v1341, %v1659
        %v1939 = vmul.f32 %v1347, %v1661
        %v1940 = vmul.f32 %v1351, %v1663
        %v1941 = vmul.f32 %v1357, %v1665
        %v1942 = vmul.f32 %v1361, %v1667
        %v1943 = vmul.f32 %v1367, %v1669
        %v1944 = vmul.f32 %v1371, %v1671
        %1961 = vrot.lane.b32.xlu0 %v1929, 64
        %v1962 = vpop.permute.xlu0 %1961
        %1963 = vrot.lane.b32.xlu0 %v1930, 64
        %v1964 = vpop.permute.xlu0 %1963
        %1965 = vrot.lane.b32.xlu0 %v1931, 64
        %v1966 = vpop.permute.xlu0 %1965
        %1967 = vrot.lane.b32.xlu0 %v1932, 64
        %v1968 = vpop.permute.xlu0 %1967
        %1969 = vrot.lane.b32.xlu0 %v1933, 64
        %v1970 = vpop.permute.xlu0 %1969
        %1971 = vrot.lane.b32.xlu0 %v1934, 64
        %v1972 = vpop.permute.xlu0 %1971
        %1973 = vrot.lane.b32.xlu0 %v1935, 64
        %v1974 = vpop.permute.xlu0 %1973
        %1975 = vrot.lane.b32.xlu0 %v1936, 64
        %v1976 = vpop.permute.xlu0 %1975
        %1977 = vrot.lane.b32.xlu0 %v1937, 64
        %v1978 = vpop.permute.xlu0 %1977
        %1979 = vrot.lane.b32.xlu0 %v1938, 64
        %v1980 = vpop.permute.xlu0 %1979
        %1981 = vrot.lane.b32.xlu0 %v1939, 64
        %v1982 = vpop.permute.xlu0 %1981
        %1983 = vrot.lane.b32.xlu0 %v1940, 64
        %v1984 = vpop.permute.xlu0 %1983
        %1985 = vrot.lane.b32.xlu0 %v1941, 64
        %v1986 = vpop.permute.xlu0 %1985
        %1987 = vrot.lane.b32.xlu0 %v1942, 64
        %v1988 = vpop.permute.xlu0 %1987
        %1989 = vrot.lane.b32.xlu0 %v1943, 64
        %v1990 = vpop.permute.xlu0 %1989
        %1991 = vrot.lane.b32.xlu0 %v1944, 64
        %v1992 = vpop.permute.xlu0 %1991
        %v1993 = vsel %vm1061, %v1962, 0
        %v1995 = vsel %vm1061, %v1964, 0
        %v1997 = vsel %vm1061, %v1966, 0
        %v1999 = vsel %vm1061, %v1968, 0
        %v2001 = vsel %vm1061, %v1970, 0
        %v2003 = vsel %vm1061, %v1972, 0
        %v2005 = vsel %vm1061, %v1974, 0
        %v2007 = vsel %vm1061, %v1976, 0
        %v2009 = vsel %vm1061, %v1978, 0
        %v2011 = vsel %vm1061, %v1980, 0
        %v2013 = vsel %vm1061, %v1982, 0
        %v2015 = vsel %vm1061, %v1984, 0
        %v2017 = vsel %vm1061, %v1986, 0
        %v2019 = vsel %vm1061, %v1988, 0
        %v2021 = vsel %vm1061, %v1990, 0
        %v2023 = vsel %vm1061, %v1992, 0
        %2025 = vmatprep.subr.mxu0 0.0
        %2026 = vmatpush1.msra.mxu0 %v1615
        %2027 = vmatprep.subr.mxu0 0.0
        %2028 = vmatpush1.msra.mxu0 %v1616
        %2029 = vmatprep.subr.mxu0 0.0
        %2030 = vmatpush1.msra.mxu0 %v1617
        %2031 = vmatprep.subr.mxu0 0.0
        %2032 = vmatpush1.msra.mxu0 %v1618
        %2033 = vmatprep.subr.mxu0 0.0
        %2034 = vmatpush1.msra.mxu0 %v1619
        %2035 = vmatprep.subr.mxu0 0.0
        %2036 = vmatpush1.msra.mxu0 %v1620
        %2037 = vmatprep.subr.mxu0 0.0
        %2038 = vmatpush1.msra.mxu0 %v1621
        %2039 = vmatprep.subr.mxu0 0.0
        %2040 = vmatpush1.msra.mxu0 %v1622
        %2041 = vmatprep.subr.mxu0 0.0
        %2042 = vmatpush1.msra.mxu0 0.0
        %2043 = vmatprep.subr.mxu0 0.0
        %2044 = vmatpush1.msra.mxu0 0.0
        %2045 = vmatprep.subr.mxu0 0.0
        %2046 = vmatpush1.msra.mxu0 0.0
        %2047 = vmatprep.subr.mxu0 0.0
        %2048 = vmatpush1.msra.mxu0 0.0
        %2049 = vmatprep.subr.mxu0 0.0
        %2050 = vmatpush1.msra.mxu0 0.0
        %2051 = vmatprep.subr.mxu0 0.0
        %2052 = vmatpush1.msra.mxu0 0.0
        %2053 = vmatprep.subr.mxu0 0.0
        %2054 = vmatpush1.msra.mxu0 0.0
        %2055 = vmatprep.subr.mxu0 0.0
        %2056 = vmatpush1.msra.mxu0 0.0
        %2057 = vmatprep.subr.mxu0 0.0
        %2058 = vmatpush1.msra.mxu0 0.0
        %2059 = vmatprep.subr.mxu0 0.0
        %2060 = vmatpush1.msra.mxu0 0.0
        %2061 = vmatprep.subr.mxu0 0.0
        %2062 = vmatpush1.msra.mxu0 0.0
        %2063 = vmatprep.subr.mxu0 0.0
        %2064 = vmatpush1.msra.mxu0 0.0
        %2065 = vmatprep.subr.mxu0 0.0
        %2066 = vmatpush1.msra.mxu0 0.0
        %2067 = vmatprep.subr.mxu0 0.0
        %2068 = vmatpush1.msra.mxu0 0.0
        %2069 = vmatprep.subr.mxu0 0.0
        %2070 = vmatpush1.msra.mxu0 0.0
        %2071 = vmatprep.subr.mxu0 0.0
        %2072 = vmatpush1.msra.mxu0 0.0
        %2073 = vmatprep.subr.mxu0 0.0
        %2074 = vmatpush1.msra.mxu0 0.0
        %2075 = vmatprep.subr.mxu0 0.0
        %2076 = vmatpush1.msra.mxu0 0.0
        %2077 = vmatprep.subr.mxu0 0.0
        %2078 = vmatpush1.msra.mxu0 0.0
        %2079 = vmatprep.subr.mxu0 0.0
        %2080 = vmatpush1.msra.mxu0 0.0
        %2081 = vmatprep.subr.mxu0 0.0
        %2082 = vmatpush1.msra.mxu0 0.0
        %2083 = vmatprep.subr.mxu0 0.0
        %2084 = vmatpush1.msra.mxu0 0.0
        %2085 = vmatprep.subr.mxu0 0.0
        %2086 = vmatpush1.msra.mxu0 0.0
        %2087 = vmatprep.subr.mxu0 0.0
        %2088 = vmatpush1.msra.mxu0 0.0
        %2089 = vmatprep.mubr.f32.mxu0 0.0
        %2090 = vmatmul.mubr.f32.gmra.mrb[0].mxu0 %v1993
        %v2091 = vpop.f32.mrb[0].mxu0
        %v2092 = vadd.f32 0.0, %v2091
        %v2093 = vpop.f32.mrb[0].mxu0
        %2094 = vmatprep.mubr.f32.mxu0 0.0
        %2095 = vmatmul.mubr.f32.gmra.mrb[0].mxu0 %v1995
        %v2096 = vpop.f32.mrb[0].mxu0
        %v2097 = vadd.f32 0.0, %v2096
        %v2098 = vpop.f32.mrb[0].mxu0
        %2099 = vmatprep.mubr.f32.mxu0 0.0
        %2100 = vmatmul.mubr.f32.gmra.mrb[0].mxu0 %v1997
        %v2101 = vpop.f32.mrb[0].mxu0
        %v2102 = vadd.f32 0.0, %v2101
        %v2103 = vpop.f32.mrb[0].mxu0
        %2104 = vmatprep.mubr.f32.mxu0 0.0
        %2105 = vmatmul.mubr.f32.gmra.mrb[0].mxu0 %v1999
        %v2106 = vpop.f32.mrb[0].mxu0
        %v2107 = vadd.f32 0.0, %v2106
        %v2108 = vpop.f32.mrb[0].mxu0
        %2109 = vmatprep.mubr.f32.mxu0 0.0
        %2110 = vmatmul.mubr.f32.gmra.mrb[0].mxu0 %v2001
        %v2111 = vpop.f32.mrb[0].mxu0
        %v2112 = vadd.f32 0.0, %v2111
        %v2113 = vpop.f32.mrb[0].mxu0
        %2114 = vmatprep.mubr.f32.mxu0 0.0
        %2115 = vmatmul.mubr.f32.gmra.mrb[0].mxu0 %v2003
        %v2116 = vpop.f32.mrb[0].mxu0
        %v2117 = vadd.f32 0.0, %v2116
        %v2118 = vpop.f32.mrb[0].mxu0
        %2119 = vmatprep.mubr.f32.mxu0 0.0
        %2120 = vmatmul.mubr.f32.gmra.mrb[0].mxu0 %v2005
        %v2121 = vpop.f32.mrb[0].mxu0
        %v2122 = vadd.f32 0.0, %v2121
        %v2123 = vpop.f32.mrb[0].mxu0
        %2124 = vmatprep.mubr.f32.mxu0 0.0
        %2125 = vmatmul.mubr.f32.gmra.mrb[0].mxu0 %v2007
        %v2126 = vpop.f32.mrb[0].mxu0
        %v2127 = vadd.f32 0.0, %v2126
        %v2128 = vpop.f32.mrb[0].mxu0
        %2129 = vmatprep.mubr.f32.mxu0 0.0
        %2130 = vmatmul.mubr.f32.gmra.mrb[0].mxu0 %v2009
        %v2131 = vpop.f32.mrb[0].mxu0
        %v2132 = vadd.f32 0.0, %v2131
        %v2133 = vpop.f32.mrb[0].mxu0
        %2134 = vmatprep.mubr.f32.mxu0 0.0
        %2135 = vmatmul.mubr.f32.gmra.mrb[0].mxu0 %v2011
        %v2136 = vpop.f32.mrb[0].mxu0
        %v2137 = vadd.f32 0.0, %v2136
        %v2138 = vpop.f32.mrb[0].mxu0
        %2139 = vmatprep.mubr.f32.mxu0 0.0
        %2140 = vmatmul.mubr.f32.gmra.mrb[0].mxu0 %v2013
        %v2141 = vpop.f32.mrb[0].mxu0
        %v2142 = vadd.f32 0.0, %v2141
        %v2143 = vpop.f32.mrb[0].mxu0
        %2144 = vmatprep.mubr.f32.mxu0 0.0
        %2145 = vmatmul.mubr.f32.gmra.mrb[0].mxu0 %v2015
        %v2146 = vpop.f32.mrb[0].mxu0
        %v2147 = vadd.f32 0.0, %v2146
        %v2148 = vpop.f32.mrb[0].mxu0
        %2149 = vmatprep.mubr.f32.mxu0 0.0
        %2150 = vmatmul.mubr.f32.gmra.mrb[0].mxu0 %v2017
        %v2151 = vpop.f32.mrb[0].mxu0
        %v2152 = vadd.f32 0.0, %v2151
        %v2153 = vpop.f32.mrb[0].mxu0
        %2154 = vmatprep.mubr.f32.mxu0 0.0
        %2155 = vmatmul.mubr.f32.gmra.mrb[0].mxu0 %v2019
        %v2156 = vpop.f32.mrb[0].mxu0
        %v2157 = vadd.f32 0.0, %v2156
        %v2158 = vpop.f32.mrb[0].mxu0
        %2159 = vmatprep.mubr.f32.mxu0 0.0
        %2160 = vmatmul.mubr.f32.gmra.mrb[0].mxu0 %v2021
        %v2161 = vpop.f32.mrb[0].mxu0
        %v2162 = vadd.f32 0.0, %v2161
        %v2163 = vpop.f32.mrb[0].mxu0
        %2164 = vmatprep.mubr.f32.mxu0 0.0
        %2165 = vmatmul.mubr.f32.gmra.mrb[0].mxu0 %v2023
        %v2166 = vpop.f32.mrb[0].mxu0
        %v2167 = vadd.f32 0.0, %v2166
        %v2168 = vpop.f32.mrb[0].mxu0
        %2169 = vdwg.mxu0
        %v2170 = vmul.f32 %v1377, %v1641
        %v2171 = vmul.f32 %v1381, %v1643
        %v2172 = vmul.f32 %v1387, %v1645
        %v2173 = vmul.f32 %v1391, %v1647
        %v2174 = vmul.f32 %v1397, %v1649
        %v2175 = vmul.f32 %v1401, %v1651
        %v2176 = vmul.f32 %v1407, %v1653
        %v2177 = vmul.f32 %v1411, %v1655
        %v2178 = vmul.f32 %v1417, %v1657
        %v2179 = vmul.f32 %v1421, %v1659
        %v2180 = vmul.f32 %v1427, %v1661
        %v2181 = vmul.f32 %v1431, %v1663
        %v2182 = vmul.f32 %v1437, %v1665
        %v2183 = vmul.f32 %v1441, %v1667
        %v2184 = vmul.f32 %v1447, %v1669
        %v2185 = vmul.f32 %v1451, %v1671
        %2202 = vrot.lane.b32.xlu0 %v2170, 64
        %v2203 = vpop.permute.xlu0 %2202
        %2204 = vrot.lane.b32.xlu0 %v2171, 64
        %v2205 = vpop.permute.xlu0 %2204
        %2206 = vrot.lane.b32.xlu0 %v2172, 64
        %v2207 = vpop.permute.xlu0 %2206
        %2208 = vrot.lane.b32.xlu0 %v2173, 64
        %v2209 = vpop.permute.xlu0 %2208
        %2210 = vrot.lane.b32.xlu0 %v2174, 64
        %v2211 = vpop.permute.xlu0 %2210
        %2212 = vrot.lane.b32.xlu0 %v2175, 64
        %v2213 = vpop.permute.xlu0 %2212
        %2214 = vrot.lane.b32.xlu0 %v2176, 64
        %v2215 = vpop.permute.xlu0 %2214
        %2216 = vrot.lane.b32.xlu0 %v2177, 64
        %v2217 = vpop.permute.xlu0 %2216
        %2218 = vrot.lane.b32.xlu0 %v2178, 64
        %v2219 = vpop.permute.xlu0 %2218
        %2220 = vrot.lane.b32.xlu0 %v2179, 64
        %v2221 = vpop.permute.xlu0 %2220
        %2222 = vrot.lane.b32.xlu0 %v2180, 64
        %v2223 = vpop.permute.xlu0 %2222
        %2224 = vrot.lane.b32.xlu0 %v2181, 64
        %v2225 = vpop.permute.xlu0 %2224
        %2226 = vrot.lane.b32.xlu0 %v2182, 64
        %v2227 = vpop.permute.xlu0 %2226
        %2228 = vrot.lane.b32.xlu0 %v2183, 64
        %v2229 = vpop.permute.xlu0 %2228
        %2230 = vrot.lane.b32.xlu0 %v2184, 64
        %v2231 = vpop.permute.xlu0 %2230
        %2232 = vrot.lane.b32.xlu0 %v2185, 64
        %v2233 = vpop.permute.xlu0 %2232
        %v2234 = vsel %vm1061, %v2203, 0
        %v2236 = vsel %vm1061, %v2205, 0
        %v2238 = vsel %vm1061, %v2207, 0
        %v2240 = vsel %vm1061, %v2209, 0
        %v2242 = vsel %vm1061, %v2211, 0
        %v2244 = vsel %vm1061, %v2213, 0
        %v2246 = vsel %vm1061, %v2215, 0
        %v2248 = vsel %vm1061, %v2217, 0
        %v2250 = vsel %vm1061, %v2219, 0
        %v2252 = vsel %vm1061, %v2221, 0
        %v2254 = vsel %vm1061, %v2223, 0
        %v2256 = vsel %vm1061, %v2225, 0
        %v2258 = vsel %vm1061, %v2227, 0
        %v2260 = vsel %vm1061, %v2229, 0
        %v2262 = vsel %vm1061, %v2231, 0
        %v2264 = vsel %vm1061, %v2233, 0
        %2266 = vmatprep.subr.mxu0 0.0
        %2267 = vmatpush1.msra.mxu0 %v1615
        %2268 = vmatprep.subr.mxu0 0.0
        %2269 = vmatpush1.msra.mxu0 %v1616
        %2270 = vmatprep.subr.mxu0 0.0
        %2271 = vmatpush1.msra.mxu0 %v1617
        %2272 = vmatprep.subr.mxu0 0.0
        %2273 = vmatpush1.msra.mxu0 %v1618
        %2274 = vmatprep.subr.mxu0 0.0
        %2275 = vmatpush1.msra.mxu0 %v1619
        %2276 = vmatprep.subr.mxu0 0.0
        %2277 = vmatpush1.msra.mxu0 %v1620
        %2278 = vmatprep.subr.mxu0 0.0
        %2279 = vmatpush1.msra.mxu0 %v1621
        %2280 = vmatprep.subr.mxu0 0.0
        %2281 = vmatpush1.msra.mxu0 %v1622
        %2282 = vmatprep.subr.mxu0 0.0
        %2283 = vmatpush1.msra.mxu0 0.0
        %2284 = vmatprep.subr.mxu0 0.0
        %2285 = vmatpush1.msra.mxu0 0.0
        %2286 = vmatprep.subr.mxu0 0.0
        %2287 = vmatpush1.msra.mxu0 0.0
        %2288 = vmatprep.subr.mxu0 0.0
        %2289 = vmatpush1.msra.mxu0 0.0
        %2290 = vmatprep.subr.mxu0 0.0
        %2291 = vmatpush1.msra.mxu0 0.0
        %2292 = vmatprep.subr.mxu0 0.0
        %2293 = vmatpush1.msra.mxu0 0.0
        %2294 = vmatprep.subr.mxu0 0.0
        %2295 = vmatpush1.msra.mxu0 0.0
        %2296 = vmatprep.subr.mxu0 0.0
        %2297 = vmatpush1.msra.mxu0 0.0
        %2298 = vmatprep.subr.mxu0 0.0
        %2299 = vmatpush1.msra.mxu0 0.0
        %2300 = vmatprep.subr.mxu0 0.0
        %2301 = vmatpush1.msra.mxu0 0.0
        %2302 = vmatprep.subr.mxu0 0.0
        %2303 = vmatpush1.msra.mxu0 0.0
        %2304 = vmatprep.subr.mxu0 0.0
        %2305 = vmatpush1.msra.mxu0 0.0
        %2306 = vmatprep.subr.mxu0 0.0
        %2307 = vmatpush1.msra.mxu0 0.0
        %2308 = vmatprep.subr.mxu0 0.0
        %2309 = vmatpush1.msra.mxu0 0.0
        %2310 = vmatprep.subr.mxu0 0.0
        %2311 = vmatpush1.msra.mxu0 0.0
        %2312 = vmatprep.subr.mxu0 0.0
        %2313 = vmatpush1.msra.mxu0 0.0
        %2314 = vmatprep.subr.mxu0 0.0
        %2315 = vmatpush1.msra.mxu0 0.0
        %2316 = vmatprep.subr.mxu0 0.0
        %2317 = vmatpush1.msra.mxu0 0.0
        %2318 = vmatprep.subr.mxu0 0.0
        %2319 = vmatpush1.msra.mxu0 0.0
        %2320 = vmatprep.subr.mxu0 0.0
        %2321 = vmatpush1.msra.mxu0 0.0
        %2322 = vmatprep.subr.mxu0 0.0
        %2323 = vmatpush1.msra.mxu0 0.0
        %2324 = vmatprep.subr.mxu0 0.0
        %2325 = vmatpush1.msra.mxu0 0.0
        %2326 = vmatprep.subr.mxu0 0.0
        %2327 = vmatpush1.msra.mxu0 0.0
        %2328 = vmatprep.subr.mxu0 0.0
        %2329 = vmatpush1.msra.mxu0 0.0
        %2330 = vmatprep.mubr.f32.mxu0 0.0
        %2331 = vmatmul.mubr.f32.gmra.mrb[0].mxu0 %v2234
        %v2332 = vpop.f32.mrb[0].mxu0
        %v2333 = vadd.f32 0.0, %v2332
        %v2334 = vpop.f32.mrb[0].mxu0
        %2335 = vmatprep.mubr.f32.mxu0 0.0
        %2336 = vmatmul.mubr.f32.gmra.mrb[0].mxu0 %v2236
        %v2337 = vpop.f32.mrb[0].mxu0
        %v2338 = vadd.f32 0.0, %v2337
        %v2339 = vpop.f32.mrb[0].mxu0
        %2340 = vmatprep.mubr.f32.mxu0 0.0
        %2341 = vmatmul.mubr.f32.gmra.mrb[0].mxu0 %v2238
        %v2342 = vpop.f32.mrb[0].mxu0
        %v2343 = vadd.f32 0.0, %v2342
        %v2344 = vpop.f32.mrb[0].mxu0
        %2345 = vmatprep.mubr.f32.mxu0 0.0
        %2346 = vmatmul.mubr.f32.gmra.mrb[0].mxu0 %v2240
        %v2347 = vpop.f32.mrb[0].mxu0
        %v2348 = vadd.f32 0.0, %v2347
        %v2349 = vpop.f32.mrb[0].mxu0
        %2350 = vmatprep.mubr.f32.mxu0 0.0
        %2351 = vmatmul.mubr.f32.gmra.mrb[0].mxu0 %v2242
        %v2352 = vpop.f32.mrb[0].mxu0
        %v2353 = vadd.f32 0.0, %v2352
        %v2354 = vpop.f32.mrb[0].mxu0
        %2355 = vmatprep.mubr.f32.mxu0 0.0
        %2356 = vmatmul.mubr.f32.gmra.mrb[0].mxu0 %v2244
        %v2357 = vpop.f32.mrb[0].mxu0
        %v2358 = vadd.f32 0.0, %v2357
        %v2359 = vpop.f32.mrb[0].mxu0
        %2360 = vmatprep.mubr.f32.mxu0 0.0
        %2361 = vmatmul.mubr.f32.gmra.mrb[0].mxu0 %v2246
        %v2362 = vpop.f32.mrb[0].mxu0
        %v2363 = vadd.f32 0.0, %v2362
        %v2364 = vpop.f32.mrb[0].mxu0
        %2365 = vmatprep.mubr.f32.mxu0 0.0
        %2366 = vmatmul.mubr.f32.gmra.mrb[0].mxu0 %v2248
        %v2367 = vpop.f32.mrb[0].mxu0
        %v2368 = vadd.f32 0.0, %v2367
        %v2369 = vpop.f32.mrb[0].mxu0
        %2370 = vmatprep.mubr.f32.mxu0 0.0
        %2371 = vmatmul.mubr.f32.gmra.mrb[0].mxu0 %v2250
        %v2372 = vpop.f32.mrb[0].mxu0
        %v2373 = vadd.f32 0.0, %v2372
        %v2374 = vpop.f32.mrb[0].mxu0
        %2375 = vmatprep.mubr.f32.mxu0 0.0
        %2376 = vmatmul.mubr.f32.gmra.mrb[0].mxu0 %v2252
        %v2377 = vpop.f32.mrb[0].mxu0
        %v2378 = vadd.f32 0.0, %v2377
        %v2379 = vpop.f32.mrb[0].mxu0
        %2380 = vmatprep.mubr.f32.mxu0 0.0
        %2381 = vmatmul.mubr.f32.gmra.mrb[0].mxu0 %v2254
        %v2382 = vpop.f32.mrb[0].mxu0
        %v2383 = vadd.f32 0.0, %v2382
        %v2384 = vpop.f32.mrb[0].mxu0
        %2385 = vmatprep.mubr.f32.mxu0 0.0
        %2386 = vmatmul.mubr.f32.gmra.mrb[0].mxu0 %v2256
        %v2387 = vpop.f32.mrb[0].mxu0
        %v2388 = vadd.f32 0.0, %v2387
        %v2389 = vpop.f32.mrb[0].mxu0
        %2390 = vmatprep.mubr.f32.mxu0 0.0
        %2391 = vmatmul.mubr.f32.gmra.mrb[0].mxu0 %v2258
        %v2392 = vpop.f32.mrb[0].mxu0
        %v2393 = vadd.f32 0.0, %v2392
        %v2394 = vpop.f32.mrb[0].mxu0
        %2395 = vmatprep.mubr.f32.mxu0 0.0
        %2396 = vmatmul.mubr.f32.gmra.mrb[0].mxu0 %v2260
        %v2397 = vpop.f32.mrb[0].mxu0
        %v2398 = vadd.f32 0.0, %v2397
        %v2399 = vpop.f32.mrb[0].mxu0
        %2400 = vmatprep.mubr.f32.mxu0 0.0
        %2401 = vmatmul.mubr.f32.gmra.mrb[0].mxu0 %v2262
        %v2402 = vpop.f32.mrb[0].mxu0
        %v2403 = vadd.f32 0.0, %v2402
        %v2404 = vpop.f32.mrb[0].mxu0
        %2405 = vmatprep.mubr.f32.mxu0 0.0
        %2406 = vmatmul.mubr.f32.gmra.mrb[0].mxu0 %v2264
        %v2407 = vpop.f32.mrb[0].mxu0
        %v2408 = vadd.f32 0.0, %v2407
        %v2409 = vpop.f32.mrb[0].mxu0
        %2410 = vdwg.mxu0
        %v2411 = vmul.f32 %v1457, %v1641
        %v2412 = vmul.f32 %v1461, %v1643
        %v2413 = vmul.f32 %v1467, %v1645
        %v2414 = vmul.f32 %v1471, %v1647
        %v2415 = vmul.f32 %v1477, %v1649
        %v2416 = vmul.f32 %v1481, %v1651
        %v2417 = vmul.f32 %v1487, %v1653
        %v2418 = vmul.f32 %v1491, %v1655
        %v2419 = vmul.f32 %v1497, %v1657
        %v2420 = vmul.f32 %v1501, %v1659
        %v2421 = vmul.f32 %v1507, %v1661
        %v2422 = vmul.f32 %v1511, %v1663
        %v2423 = vmul.f32 %v1517, %v1665
        %v2424 = vmul.f32 %v1521, %v1667
        %v2425 = vmul.f32 %v1527, %v1669
        %v2426 = vmul.f32 %v1531, %v1671
        %2443 = vrot.lane.b32.xlu0 %v2411, 64
        %v2444 = vpop.permute.xlu0 %2443
        %2445 = vrot.lane.b32.xlu0 %v2412, 64
        %v2446 = vpop.permute.xlu0 %2445
        %2447 = vrot.lane.b32.xlu0 %v2413, 64
        %v2448 = vpop.permute.xlu0 %2447
        %2449 = vrot.lane.b32.xlu0 %v2414, 64
        %v2450 = vpop.permute.xlu0 %2449
        %2451 = vrot.lane.b32.xlu0 %v2415, 64
        %v2452 = vpop.permute.xlu0 %2451
        %2453 = vrot.lane.b32.xlu0 %v2416, 64
        %v2454 = vpop.permute.xlu0 %2453
        %2455 = vrot.lane.b32.xlu0 %v2417, 64
        %v2456 = vpop.permute.xlu0 %2455
        %2457 = vrot.lane.b32.xlu0 %v2418, 64
        %v2458 = vpop.permute.xlu0 %2457
        %2459 = vrot.lane.b32.xlu0 %v2419, 64
        %v2460 = vpop.permute.xlu0 %2459
        %2461 = vrot.lane.b32.xlu0 %v2420, 64
        %v2462 = vpop.permute.xlu0 %2461
        %2463 = vrot.lane.b32.xlu0 %v2421, 64
        %v2464 = vpop.permute.xlu0 %2463
        %2465 = vrot.lane.b32.xlu0 %v2422, 64
        %v2466 = vpop.permute.xlu0 %2465
        %2467 = vrot.lane.b32.xlu0 %v2423, 64
        %v2468 = vpop.permute.xlu0 %2467
        %2469 = vrot.lane.b32.xlu0 %v2424, 64
        %v2470 = vpop.permute.xlu0 %2469
        %2471 = vrot.lane.b32.xlu0 %v2425, 64
        %v2472 = vpop.permute.xlu0 %2471
        %2473 = vrot.lane.b32.xlu0 %v2426, 64
        %v2474 = vpop.permute.xlu0 %2473
        %v2475 = vsel %vm1061, %v2444, 0
        %v2477 = vsel %vm1061, %v2446, 0
        %v2479 = vsel %vm1061, %v2448, 0
        %v2481 = vsel %vm1061, %v2450, 0
        %v2483 = vsel %vm1061, %v2452, 0
        %v2485 = vsel %vm1061, %v2454, 0
        %v2487 = vsel %vm1061, %v2456, 0
        %v2489 = vsel %vm1061, %v2458, 0
        %v2491 = vsel %vm1061, %v2460, 0
        %v2493 = vsel %vm1061, %v2462, 0
        %v2495 = vsel %vm1061, %v2464, 0
        %v2497 = vsel %vm1061, %v2466, 0
        %v2499 = vsel %vm1061, %v2468, 0
        %v2501 = vsel %vm1061, %v2470, 0
        %v2503 = vsel %vm1061, %v2472, 0
        %v2505 = vsel %vm1061, %v2474, 0
        %2507 = vmatprep.subr.mxu0 0.0
        %2508 = vmatpush1.msra.mxu0 %v1615
        %2509 = vmatprep.subr.mxu0 0.0
        %2510 = vmatpush1.msra.mxu0 %v1616
        %2511 = vmatprep.subr.mxu0 0.0
        %2512 = vmatpush1.msra.mxu0 %v1617
        %2513 = vmatprep.subr.mxu0 0.0
        %2514 = vmatpush1.msra.mxu0 %v1618
        %2515 = vmatprep.subr.mxu0 0.0
        %2516 = vmatpush1.msra.mxu0 %v1619
        %2517 = vmatprep.subr.mxu0 0.0
        %2518 = vmatpush1.msra.mxu0 %v1620
        %2519 = vmatprep.subr.mxu0 0.0
        %2520 = vmatpush1.msra.mxu0 %v1621
        %2521 = vmatprep.subr.mxu0 0.0
        %2522 = vmatpush1.msra.mxu0 %v1622
        %2523 = vmatprep.subr.mxu0 0.0
        %2524 = vmatpush1.msra.mxu0 0.0
        %2525 = vmatprep.subr.mxu0 0.0
        %2526 = vmatpush1.msra.mxu0 0.0
        %2527 = vmatprep.subr.mxu0 0.0
        %2528 = vmatpush1.msra.mxu0 0.0
        %2529 = vmatprep.subr.mxu0 0.0
        %2530 = vmatpush1.msra.mxu0 0.0
        %2531 = vmatprep.subr.mxu0 0.0
        %2532 = vmatpush1.msra.mxu0 0.0
        %2533 = vmatprep.subr.mxu0 0.0
        %2534 = vmatpush1.msra.mxu0 0.0
        %2535 = vmatprep.subr.mxu0 0.0
        %2536 = vmatpush1.msra.mxu0 0.0
        %2537 = vmatprep.subr.mxu0 0.0
        %2538 = vmatpush1.msra.mxu0 0.0
        %2539 = vmatprep.subr.mxu0 0.0
        %2540 = vmatpush1.msra.mxu0 0.0
        %2541 = vmatprep.subr.mxu0 0.0
        %2542 = vmatpush1.msra.mxu0 0.0
        %2543 = vmatprep.subr.mxu0 0.0
        %2544 = vmatpush1.msra.mxu0 0.0
        %2545 = vmatprep.subr.mxu0 0.0
        %2546 = vmatpush1.msra.mxu0 0.0
        %2547 = vmatprep.subr.mxu0 0.0
        %2548 = vmatpush1.msra.mxu0 0.0
        %2549 = vmatprep.subr.mxu0 0.0
        %2550 = vmatpush1.msra.mxu0 0.0
        %2551 = vmatprep.subr.mxu0 0.0
        %2552 = vmatpush1.msra.mxu0 0.0
        %2553 = vmatprep.subr.mxu0 0.0
        %2554 = vmatpush1.msra.mxu0 0.0
        %2555 = vmatprep.subr.mxu0 0.0
        %2556 = vmatpush1.msra.mxu0 0.0
        %2557 = vmatprep.subr.mxu0 0.0
        %2558 = vmatpush1.msra.mxu0 0.0
        %2559 = vmatprep.subr.mxu0 0.0
        %2560 = vmatpush1.msra.mxu0 0.0
        %2561 = vmatprep.subr.mxu0 0.0
        %2562 = vmatpush1.msra.mxu0 0.0
        %2563 = vmatprep.subr.mxu0 0.0
        %2564 = vmatpush1.msra.mxu0 0.0
        %2565 = vmatprep.subr.mxu0 0.0
        %2566 = vmatpush1.msra.mxu0 0.0
        %2567 = vmatprep.subr.mxu0 0.0
        %2568 = vmatpush1.msra.mxu0 0.0
        %2569 = vmatprep.subr.mxu0 0.0
        %2570 = vmatpush1.msra.mxu0 0.0
        %2571 = vmatprep.mubr.f32.mxu0 0.0
        %2572 = vmatmul.mubr.f32.gmra.mrb[0].mxu0 %v2475
        %v2573 = vpop.f32.mrb[0].mxu0
        %v2574 = vadd.f32 0.0, %v2573
        %v2575 = vpop.f32.mrb[0].mxu0
        %2576 = vmatprep.mubr.f32.mxu0 0.0
        %2577 = vmatmul.mubr.f32.gmra.mrb[0].mxu0 %v2477
        %v2578 = vpop.f32.mrb[0].mxu0
        %v2579 = vadd.f32 0.0, %v2578
        %v2580 = vpop.f32.mrb[0].mxu0
        %2581 = vmatprep.mubr.f32.mxu0 0.0
        %2582 = vmatmul.mubr.f32.gmra.mrb[0].mxu0 %v2479
        %v2583 = vpop.f32.mrb[0].mxu0
        %v2584 = vadd.f32 0.0, %v2583
        %v2585 = vpop.f32.mrb[0].mxu0
        %2586 = vmatprep.mubr.f32.mxu0 0.0
        %2587 = vmatmul.mubr.f32.gmra.mrb[0].mxu0 %v2481
        %v2588 = vpop.f32.mrb[0].mxu0
        %v2589 = vadd.f32 0.0, %v2588
        %v2590 = vpop.f32.mrb[0].mxu0
        %2591 = vmatprep.mubr.f32.mxu0 0.0
        %2592 = vmatmul.mubr.f32.gmra.mrb[0].mxu0 %v2483
        %v2593 = vpop.f32.mrb[0].mxu0
        %v2594 = vadd.f32 0.0, %v2593
        %v2595 = vpop.f32.mrb[0].mxu0
        %2596 = vmatprep.mubr.f32.mxu0 0.0
        %2597 = vmatmul.mubr.f32.gmra.mrb[0].mxu0 %v2485
        %v2598 = vpop.f32.mrb[0].mxu0
        %v2599 = vadd.f32 0.0, %v2598
        %v2600 = vpop.f32.mrb[0].mxu0
        %2601 = vmatprep.mubr.f32.mxu0 0.0
        %2602 = vmatmul.mubr.f32.gmra.mrb[0].mxu0 %v2487
        %v2603 = vpop.f32.mrb[0].mxu0
        %v2604 = vadd.f32 0.0, %v2603
        %v2605 = vpop.f32.mrb[0].mxu0
        %2606 = vmatprep.mubr.f32.mxu0 0.0
        %2607 = vmatmul.mubr.f32.gmra.mrb[0].mxu0 %v2489
        %v2608 = vpop.f32.mrb[0].mxu0
        %v2609 = vadd.f32 0.0, %v2608
        %v2610 = vpop.f32.mrb[0].mxu0
        %2611 = vmatprep.mubr.f32.mxu0 0.0
        %2612 = vmatmul.mubr.f32.gmra.mrb[0].mxu0 %v2491
        %v2613 = vpop.f32.mrb[0].mxu0
        %v2614 = vadd.f32 0.0, %v2613
        %v2615 = vpop.f32.mrb[0].mxu0
        %2616 = vmatprep.mubr.f32.mxu0 0.0
        %2617 = vmatmul.mubr.f32.gmra.mrb[0].mxu0 %v2493
        %v2618 = vpop.f32.mrb[0].mxu0
        %v2619 = vadd.f32 0.0, %v2618
        %v2620 = vpop.f32.mrb[0].mxu0
        %2621 = vmatprep.mubr.f32.mxu0 0.0
        %2622 = vmatmul.mubr.f32.gmra.mrb[0].mxu0 %v2495
        %v2623 = vpop.f32.mrb[0].mxu0
        %v2624 = vadd.f32 0.0, %v2623
        %v2625 = vpop.f32.mrb[0].mxu0
        %2626 = vmatprep.mubr.f32.mxu0 0.0
        %2627 = vmatmul.mubr.f32.gmra.mrb[0].mxu0 %v2497
        %v2628 = vpop.f32.mrb[0].mxu0
        %v2629 = vadd.f32 0.0, %v2628
        %v2630 = vpop.f32.mrb[0].mxu0
        %2631 = vmatprep.mubr.f32.mxu0 0.0
        %2632 = vmatmul.mubr.f32.gmra.mrb[0].mxu0 %v2499
        %v2633 = vpop.f32.mrb[0].mxu0
        %v2634 = vadd.f32 0.0, %v2633
        %v2635 = vpop.f32.mrb[0].mxu0
        %2636 = vmatprep.mubr.f32.mxu0 0.0
        %2637 = vmatmul.mubr.f32.gmra.mrb[0].mxu0 %v2501
        %v2638 = vpop.f32.mrb[0].mxu0
        %v2639 = vadd.f32 0.0, %v2638
        %v2640 = vpop.f32.mrb[0].mxu0
        %2641 = vmatprep.mubr.f32.mxu0 0.0
        %2642 = vmatmul.mubr.f32.gmra.mrb[0].mxu0 %v2503
        %v2643 = vpop.f32.mrb[0].mxu0
        %v2644 = vadd.f32 0.0, %v2643
        %v2645 = vpop.f32.mrb[0].mxu0
        %2646 = vmatprep.mubr.f32.mxu0 0.0
        %2647 = vmatmul.mubr.f32.gmra.mrb[0].mxu0 %v2505
        %v2648 = vpop.f32.mrb[0].mxu0
        %v2649 = vadd.f32 0.0, %v2648
        %v2650 = vpop.f32.mrb[0].mxu0
        %2651 = vdwg.mxu0
        %v2652 = vmul.f32 %v1537, %v1641
        %v2653 = vmul.f32 %v1541, %v1643
        %v2654 = vmul.f32 %v1547, %v1645
        %v2655 = vmul.f32 %v1551, %v1647
        %v2656 = vmul.f32 %v1557, %v1649
        %v2657 = vmul.f32 %v1561, %v1651
        %v2658 = vmul.f32 %v1567, %v1653
        %v2659 = vmul.f32 %v1571, %v1655
        %v2660 = vmul.f32 %v1577, %v1657
        %v2661 = vmul.f32 %v1581, %v1659
        %v2662 = vmul.f32 %v1587, %v1661
        %v2663 = vmul.f32 %v1591, %v1663
        %v2664 = vmul.f32 %v1597, %v1665
        %v2665 = vmul.f32 %v1601, %v1667
        %v2666 = vmul.f32 %v1607, %v1669
        %v2667 = vmul.f32 %v1611, %v1671
        %2684 = vrot.lane.b32.xlu0 %v2652, 64
        %v2685 = vpop.permute.xlu0 %2684
        %2686 = vrot.lane.b32.xlu0 %v2653, 64
        %v2687 = vpop.permute.xlu0 %2686
        %2688 = vrot.lane.b32.xlu0 %v2654, 64
        %v2689 = vpop.permute.xlu0 %2688
        %2690 = vrot.lane.b32.xlu0 %v2655, 64
        %v2691 = vpop.permute.xlu0 %2690
        %2692 = vrot.lane.b32.xlu0 %v2656, 64
        %v2693 = vpop.permute.xlu0 %2692
        %2694 = vrot.lane.b32.xlu0 %v2657, 64
        %v2695 = vpop.permute.xlu0 %2694
        %2696 = vrot.lane.b32.xlu0 %v2658, 64
        %v2697 = vpop.permute.xlu0 %2696
        %2698 = vrot.lane.b32.xlu0 %v2659, 64
        %v2699 = vpop.permute.xlu0 %2698
        %2700 = vrot.lane.b32.xlu0 %v2660, 64
        %v2701 = vpop.permute.xlu0 %2700
        %2702 = vrot.lane.b32.xlu0 %v2661, 64
        %v2703 = vpop.permute.xlu0 %2702
        %2704 = vrot.lane.b32.xlu0 %v2662, 64
        %v2705 = vpop.permute.xlu0 %2704
        %2706 = vrot.lane.b32.xlu0 %v2663, 64
        %v2707 = vpop.permute.xlu0 %2706
        %2708 = vrot.lane.b32.xlu0 %v2664, 64
        %v2709 = vpop.permute.xlu0 %2708
        %2710 = vrot.lane.b32.xlu0 %v2665, 64
        %v2711 = vpop.permute.xlu0 %2710
        %2712 = vrot.lane.b32.xlu0 %v2666, 64
        %v2713 = vpop.permute.xlu0 %2712
        %2714 = vrot.lane.b32.xlu0 %v2667, 64
        %v2715 = vpop.permute.xlu0 %2714
        %v2716 = vsel %vm1061, %v2685, 0
        %v2718 = vsel %vm1061, %v2687, 0
        %v2720 = vsel %vm1061, %v2689, 0
        %v2722 = vsel %vm1061, %v2691, 0
        %v2724 = vsel %vm1061, %v2693, 0
        %v2726 = vsel %vm1061, %v2695, 0
        %v2728 = vsel %vm1061, %v2697, 0
        %v2730 = vsel %vm1061, %v2699, 0
        %v2732 = vsel %vm1061, %v2701, 0
        %v2734 = vsel %vm1061, %v2703, 0
        %v2736 = vsel %vm1061, %v2705, 0
        %v2738 = vsel %vm1061, %v2707, 0
        %v2740 = vsel %vm1061, %v2709, 0
        %v2742 = vsel %vm1061, %v2711, 0
        %v2744 = vsel %vm1061, %v2713, 0
        %v2746 = vsel %vm1061, %v2715, 0
        %2748 = vmatprep.subr.mxu0 0.0
        %2749 = vmatpush1.msra.mxu0 %v1615
        %2750 = vmatprep.subr.mxu0 0.0
        %2751 = vmatpush1.msra.mxu0 %v1616
        %2752 = vmatprep.subr.mxu0 0.0
        %2753 = vmatpush1.msra.mxu0 %v1617
        %2754 = vmatprep.subr.mxu0 0.0
        %2755 = vmatpush1.msra.mxu0 %v1618
        %2756 = vmatprep.subr.mxu0 0.0
        %2757 = vmatpush1.msra.mxu0 %v1619
        %2758 = vmatprep.subr.mxu0 0.0
        %2759 = vmatpush1.msra.mxu0 %v1620
        %2760 = vmatprep.subr.mxu0 0.0
        %2761 = vmatpush1.msra.mxu0 %v1621
        %2762 = vmatprep.subr.mxu0 0.0
        %2763 = vmatpush1.msra.mxu0 %v1622
        %2764 = vmatprep.subr.mxu0 0.0
        %2765 = vmatpush1.msra.mxu0 0.0
        %2766 = vmatprep.subr.mxu0 0.0
        %2767 = vmatpush1.msra.mxu0 0.0
        %2768 = vmatprep.subr.mxu0 0.0
        %2769 = vmatpush1.msra.mxu0 0.0
        %2770 = vmatprep.subr.mxu0 0.0
        %2771 = vmatpush1.msra.mxu0 0.0
        %2772 = vmatprep.subr.mxu0 0.0
        %2773 = vmatpush1.msra.mxu0 0.0
        %2774 = vmatprep.subr.mxu0 0.0
        %2775 = vmatpush1.msra.mxu0 0.0
        %2776 = vmatprep.subr.mxu0 0.0
        %2777 = vmatpush1.msra.mxu0 0.0
        %2778 = vmatprep.subr.mxu0 0.0
        %2779 = vmatpush1.msra.mxu0 0.0
        %2780 = vmatprep.subr.mxu0 0.0
        %2781 = vmatpush1.msra.mxu0 0.0
        %2782 = vmatprep.subr.mxu0 0.0
        %2783 = vmatpush1.msra.mxu0 0.0
        %2784 = vmatprep.subr.mxu0 0.0
        %2785 = vmatpush1.msra.mxu0 0.0
        %2786 = vmatprep.subr.mxu0 0.0
        %2787 = vmatpush1.msra.mxu0 0.0
        %2788 = vmatprep.subr.mxu0 0.0
        %2789 = vmatpush1.msra.mxu0 0.0
        %2790 = vmatprep.subr.mxu0 0.0
        %2791 = vmatpush1.msra.mxu0 0.0
        %2792 = vmatprep.subr.mxu0 0.0
        %2793 = vmatpush1.msra.mxu0 0.0
        %2794 = vmatprep.subr.mxu0 0.0
        %2795 = vmatpush1.msra.mxu0 0.0
        %2796 = vmatprep.subr.mxu0 0.0
        %2797 = vmatpush1.msra.mxu0 0.0
        %2798 = vmatprep.subr.mxu0 0.0
        %2799 = vmatpush1.msra.mxu0 0.0
        %2800 = vmatprep.subr.mxu0 0.0
        %2801 = vmatpush1.msra.mxu0 0.0
        %2802 = vmatprep.subr.mxu0 0.0
        %2803 = vmatpush1.msra.mxu0 0.0
        %2804 = vmatprep.subr.mxu0 0.0
        %2805 = vmatpush1.msra.mxu0 0.0
        %2806 = vmatprep.subr.mxu0 0.0
        %2807 = vmatpush1.msra.mxu0 0.0
        %2808 = vmatprep.subr.mxu0 0.0
        %2809 = vmatpush1.msra.mxu0 0.0
        %2810 = vmatprep.subr.mxu0 0.0
        %2811 = vmatpush1.msra.mxu0 0.0
        %2812 = vmatprep.mubr.f32.mxu0 0.0
        %2813 = vmatmul.mubr.f32.gmra.mrb[0].mxu0 %v2716
        %v2814 = vpop.f32.mrb[0].mxu0
        %v2815 = vadd.f32 0.0, %v2814
        %v2816 = vpop.f32.mrb[0].mxu0
        %2817 = vmatprep.mubr.f32.mxu0 0.0
        %2818 = vmatmul.mubr.f32.gmra.mrb[0].mxu0 %v2718
        %v2819 = vpop.f32.mrb[0].mxu0
        %v2820 = vadd.f32 0.0, %v2819
        %v2821 = vpop.f32.mrb[0].mxu0
        %2822 = vmatprep.mubr.f32.mxu0 0.0
        %2823 = vmatmul.mubr.f32.gmra.mrb[0].mxu0 %v2720
        %v2824 = vpop.f32.mrb[0].mxu0
        %v2825 = vadd.f32 0.0, %v2824
        %v2826 = vpop.f32.mrb[0].mxu0
        %2827 = vmatprep.mubr.f32.mxu0 0.0
        %2828 = vmatmul.mubr.f32.gmra.mrb[0].mxu0 %v2722
        %v2829 = vpop.f32.mrb[0].mxu0
        %v2830 = vadd.f32 0.0, %v2829
        %v2831 = vpop.f32.mrb[0].mxu0
        %2832 = vmatprep.mubr.f32.mxu0 0.0
        %2833 = vmatmul.mubr.f32.gmra.mrb[0].mxu0 %v2724
        %v2834 = vpop.f32.mrb[0].mxu0
        %v2835 = vadd.f32 0.0, %v2834
        %v2836 = vpop.f32.mrb[0].mxu0
        %2837 = vmatprep.mubr.f32.mxu0 0.0
        %2838 = vmatmul.mubr.f32.gmra.mrb[0].mxu0 %v2726
        %v2839 = vpop.f32.mrb[0].mxu0
        %v2840 = vadd.f32 0.0, %v2839
        %v2841 = vpop.f32.mrb[0].mxu0
        %2842 = vmatprep.mubr.f32.mxu0 0.0
        %2843 = vmatmul.mubr.f32.gmra.mrb[0].mxu0 %v2728
        %v2844 = vpop.f32.mrb[0].mxu0
        %v2845 = vadd.f32 0.0, %v2844
        %v2846 = vpop.f32.mrb[0].mxu0
        %2847 = vmatprep.mubr.f32.mxu0 0.0
        %2848 = vmatmul.mubr.f32.gmra.mrb[0].mxu0 %v2730
        %v2849 = vpop.f32.mrb[0].mxu0
        %v2850 = vadd.f32 0.0, %v2849
        %v2851 = vpop.f32.mrb[0].mxu0
        %2852 = vmatprep.mubr.f32.mxu0 0.0
        %2853 = vmatmul.mubr.f32.gmra.mrb[0].mxu0 %v2732
        %v2854 = vpop.f32.mrb[0].mxu0
        %v2855 = vadd.f32 0.0, %v2854
        %v2856 = vpop.f32.mrb[0].mxu0
        %2857 = vmatprep.mubr.f32.mxu0 0.0
        %2858 = vmatmul.mubr.f32.gmra.mrb[0].mxu0 %v2734
        %v2859 = vpop.f32.mrb[0].mxu0
        %v2860 = vadd.f32 0.0, %v2859
        %v2861 = vpop.f32.mrb[0].mxu0
        %2862 = vmatprep.mubr.f32.mxu0 0.0
        %2863 = vmatmul.mubr.f32.gmra.mrb[0].mxu0 %v2736
        %v2864 = vpop.f32.mrb[0].mxu0
        %v2865 = vadd.f32 0.0, %v2864
        %v2866 = vpop.f32.mrb[0].mxu0
        %2867 = vmatprep.mubr.f32.mxu0 0.0
        %2868 = vmatmul.mubr.f32.gmra.mrb[0].mxu0 %v2738
        %v2869 = vpop.f32.mrb[0].mxu0
        %v2870 = vadd.f32 0.0, %v2869
        %v2871 = vpop.f32.mrb[0].mxu0
        %2872 = vmatprep.mubr.f32.mxu0 0.0
        %2873 = vmatmul.mubr.f32.gmra.mrb[0].mxu0 %v2740
        %v2874 = vpop.f32.mrb[0].mxu0
        %v2875 = vadd.f32 0.0, %v2874
        %v2876 = vpop.f32.mrb[0].mxu0
        %2877 = vmatprep.mubr.f32.mxu0 0.0
        %2878 = vmatmul.mubr.f32.gmra.mrb[0].mxu0 %v2742
        %v2879 = vpop.f32.mrb[0].mxu0
        %v2880 = vadd.f32 0.0, %v2879
        %v2881 = vpop.f32.mrb[0].mxu0
        %2882 = vmatprep.mubr.f32.mxu0 0.0
        %2883 = vmatmul.mubr.f32.gmra.mrb[0].mxu0 %v2744
        %v2884 = vpop.f32.mrb[0].mxu0
        %v2885 = vadd.f32 0.0, %v2884
        %v2886 = vpop.f32.mrb[0].mxu0
        %2887 = vmatprep.mubr.f32.mxu0 0.0
        %2888 = vmatmul.mubr.f32.gmra.mrb[0].mxu0 %v2746
        %v2889 = vpop.f32.mrb[0].mxu0
        %v2890 = vadd.f32 0.0, %v2889
        %v2891 = vpop.f32.mrb[0].mxu0
        %2892 = vdwg.mxu0
        %v2893 = vmax.f32 %v1851, %v2092
        %v2894 = vmax.f32 %v1856, %v2097
        %v2895 = vmax.f32 %v1861, %v2102
        %v2896 = vmax.f32 %v1866, %v2107
        %v2897 = vmax.f32 %v1871, %v2112
        %v2898 = vmax.f32 %v1876, %v2117
        %v2899 = vmax.f32 %v1881, %v2122
        %v2900 = vmax.f32 %v1886, %v2127
        %v2901 = vmax.f32 %v1891, %v2132
        %v2902 = vmax.f32 %v1896, %v2137
        %v2903 = vmax.f32 %v1901, %v2142
        %v2904 = vmax.f32 %v1906, %v2147
        %v2905 = vmax.f32 %v1911, %v2152
        %v2906 = vmax.f32 %v1916, %v2157
        %v2907 = vmax.f32 %v1921, %v2162
        %v2908 = vmax.f32 %v1926, %v2167
        %v2909 = vmax.f32 %v2893, %v2333
        %v2910 = vmax.f32 %v2894, %v2338
        %v2911 = vmax.f32 %v2895, %v2343
        %v2912 = vmax.f32 %v2896, %v2348
        %v2913 = vmax.f32 %v2897, %v2353
        %v2914 = vmax.f32 %v2898, %v2358
        %v2915 = vmax.f32 %v2899, %v2363
        %v2916 = vmax.f32 %v2900, %v2368
        %v2917 = vmax.f32 %v2901, %v2373
        %v2918 = vmax.f32 %v2902, %v2378
        %v2919 = vmax.f32 %v2903, %v2383
        %v2920 = vmax.f32 %v2904, %v2388
        %v2921 = vmax.f32 %v2905, %v2393
        %v2922 = vmax.f32 %v2906, %v2398
        %v2923 = vmax.f32 %v2907, %v2403
        %v2924 = vmax.f32 %v2908, %v2408
        %v2925 = vmax.f32 %v2909, %v2574
        %v2926 = vmax.f32 %v2910, %v2579
        %v2927 = vmax.f32 %v2911, %v2584
        %v2928 = vmax.f32 %v2912, %v2589
        %v2929 = vmax.f32 %v2913, %v2594
        %v2930 = vmax.f32 %v2914, %v2599
        %v2931 = vmax.f32 %v2915, %v2604
        %v2932 = vmax.f32 %v2916, %v2609
        %v2933 = vmax.f32 %v2917, %v2614
        %v2934 = vmax.f32 %v2918, %v2619
        %v2935 = vmax.f32 %v2919, %v2624
        %v2936 = vmax.f32 %v2920, %v2629
        %v2937 = vmax.f32 %v2921, %v2634
        %v2938 = vmax.f32 %v2922, %v2639
        %v2939 = vmax.f32 %v2923, %v2644
        %v2940 = vmax.f32 %v2924, %v2649
        %v2941 = vmax.f32 %v2925, %v2815
        %v2942 = vmax.f32 %v2926, %v2820
        %v2943 = vmax.f32 %v2927, %v2825
        %v2944 = vmax.f32 %v2928, %v2830
        %v2945 = vmax.f32 %v2929, %v2835
        %v2946 = vmax.f32 %v2930, %v2840
        %v2947 = vmax.f32 %v2931, %v2845
        %v2948 = vmax.f32 %v2932, %v2850
        %v2949 = vmax.f32 %v2933, %v2855
        %v2950 = vmax.f32 %v2934, %v2860
        %v2951 = vmax.f32 %v2935, %v2865
        %v2952 = vmax.f32 %v2936, %v2870
        %v2953 = vmax.f32 %v2937, %v2875
        %v2954 = vmax.f32 %v2938, %v2880
        %v2955 = vmax.f32 %v2939, %v2885
        %v2956 = vmax.f32 %v2940, %v2890
        %v2957 = vsub.f32 %v1851, %v2941
        %v2958 = vsub.f32 %v1856, %v2942
        %v2959 = vsub.f32 %v1861, %v2943
        %v2960 = vsub.f32 %v1866, %v2944
        %v2961 = vsub.f32 %v1871, %v2945
        %v2962 = vsub.f32 %v1876, %v2946
        %v2963 = vsub.f32 %v1881, %v2947
        %v2964 = vsub.f32 %v1886, %v2948
        %v2965 = vsub.f32 %v1891, %v2949
        %v2966 = vsub.f32 %v1896, %v2950
        %v2967 = vsub.f32 %v1901, %v2951
        %v2968 = vsub.f32 %v1906, %v2952
        %v2969 = vsub.f32 %v1911, %v2953
        %v2970 = vsub.f32 %v1916, %v2954
        %v2971 = vsub.f32 %v1921, %v2955
        %v2972 = vsub.f32 %v1926, %v2956
        %v2973 = vmul.f32 %v2957, 1.442695
        %v2974 = vpow.pop %v2973
        %v2975 = vmul.f32 %v2958, 1.442695
        %v2976 = vpow.pop %v2975
        %v2977 = vmul.f32 %v2959, 1.442695
        %v2978 = vpow.pop %v2977
        %v2979 = vmul.f32 %v2960, 1.442695
        %v2980 = vpow.pop %v2979
        %v2981 = vmul.f32 %v2961, 1.442695
        %v2982 = vpow.pop %v2981
        %v2983 = vmul.f32 %v2962, 1.442695
        %v2984 = vpow.pop %v2983
        %v2985 = vmul.f32 %v2963, 1.442695
        %v2986 = vpow.pop %v2985
        %v2987 = vmul.f32 %v2964, 1.442695
        %v2988 = vpow.pop %v2987
        %v2989 = vmul.f32 %v2965, 1.442695
        %v2990 = vpow.pop %v2989
        %v2991 = vmul.f32 %v2966, 1.442695
        %v2992 = vpow.pop %v2991
        %v2993 = vmul.f32 %v2967, 1.442695
        %v2994 = vpow.pop %v2993
        %v2995 = vmul.f32 %v2968, 1.442695
        %v2996 = vpow.pop %v2995
        %v2997 = vmul.f32 %v2969, 1.442695
        %v2998 = vpow.pop %v2997
        %v2999 = vmul.f32 %v2970, 1.442695
        %v3000 = vpow.pop %v2999
        %v3001 = vmul.f32 %v2971, 1.442695
        %v3002 = vpow.pop %v3001
        %v3003 = vmul.f32 %v2972, 1.442695
        %v3004 = vpow.pop %v3003
        %v3005 = vsub.f32 %v2092, %v2941
        %v3006 = vsub.f32 %v2097, %v2942
        %v3007 = vsub.f32 %v2102, %v2943
        %v3008 = vsub.f32 %v2107, %v2944
        %v3009 = vsub.f32 %v2112, %v2945
        %v3010 = vsub.f32 %v2117, %v2946
        %v3011 = vsub.f32 %v2122, %v2947
        %v3012 = vsub.f32 %v2127, %v2948
        %v3013 = vsub.f32 %v2132, %v2949
        %v3014 = vsub.f32 %v2137, %v2950
        %v3015 = vsub.f32 %v2142, %v2951
        %v3016 = vsub.f32 %v2147, %v2952
        %v3017 = vsub.f32 %v2152, %v2953
        %v3018 = vsub.f32 %v2157, %v2954
        %v3019 = vsub.f32 %v2162, %v2955
        %v3020 = vsub.f32 %v2167, %v2956
        %v3021 = vmul.f32 %v3005, 1.442695
        %v3022 = vpow.pop %v3021
        %v3023 = vmul.f32 %v3006, 1.442695
        %v3024 = vpow.pop %v3023
        %v3025 = vmul.f32 %v3007, 1.442695
        %v3026 = vpow.pop %v3025
        %v3027 = vmul.f32 %v3008, 1.442695
        %v3028 = vpow.pop %v3027
        %v3029 = vmul.f32 %v3009, 1.442695
        %v3030 = vpow.pop %v3029
        %v3031 = vmul.f32 %v3010, 1.442695
        %v3032 = vpow.pop %v3031
        %v3033 = vmul.f32 %v3011, 1.442695
        %v3034 = vpow.pop %v3033
        %v3035 = vmul.f32 %v3012, 1.442695
        %v3036 = vpow.pop %v3035
        %v3037 = vmul.f32 %v3013, 1.442695
        %v3038 = vpow.pop %v3037
        %v3039 = vmul.f32 %v3014, 1.442695
        %v3040 = vpow.pop %v3039
        %v3041 = vmul.f32 %v3015, 1.442695
        %v3042 = vpow.pop %v3041
        %v3043 = vmul.f32 %v3016, 1.442695
        %v3044 = vpow.pop %v3043
        %v3045 = vmul.f32 %v3017, 1.442695
        %v3046 = vpow.pop %v3045
        %v3047 = vmul.f32 %v3018, 1.442695
        %v3048 = vpow.pop %v3047
        %v3049 = vmul.f32 %v3019, 1.442695
        %v3050 = vpow.pop %v3049
        %v3051 = vmul.f32 %v3020, 1.442695
        %v3052 = vpow.pop %v3051
        %v3053 = vsub.f32 %v2333, %v2941
        %v3054 = vsub.f32 %v2338, %v2942
        %v3055 = vsub.f32 %v2343, %v2943
        %v3056 = vsub.f32 %v2348, %v2944
        %v3057 = vsub.f32 %v2353, %v2945
        %v3058 = vsub.f32 %v2358, %v2946
        %v3059 = vsub.f32 %v2363, %v2947
        %v3060 = vsub.f32 %v2368, %v2948
        %v3061 = vsub.f32 %v2373, %v2949
        %v3062 = vsub.f32 %v2378, %v2950
        %v3063 = vsub.f32 %v2383, %v2951
        %v3064 = vsub.f32 %v2388, %v2952
        %v3065 = vsub.f32 %v2393, %v2953
        %v3066 = vsub.f32 %v2398, %v2954
        %v3067 = vsub.f32 %v2403, %v2955
        %v3068 = vsub.f32 %v2408, %v2956
        %v3069 = vmul.f32 %v3053, 1.442695
        %v3070 = vpow.pop %v3069
        %v3071 = vmul.f32 %v3054, 1.442695
        %v3072 = vpow.pop %v3071
        %v3073 = vmul.f32 %v3055, 1.442695
        %v3074 = vpow.pop %v3073
        %v3075 = vmul.f32 %v3056, 1.442695
        %v3076 = vpow.pop %v3075
        %v3077 = vmul.f32 %v3057, 1.442695
        %v3078 = vpow.pop %v3077
        %v3079 = vmul.f32 %v3058, 1.442695
        %v3080 = vpow.pop %v3079
        %v3081 = vmul.f32 %v3059, 1.442695
        %v3082 = vpow.pop %v3081
        %v3083 = vmul.f32 %v3060, 1.442695
        %v3084 = vpow.pop %v3083
        %v3085 = vmul.f32 %v3061, 1.442695
        %v3086 = vpow.pop %v3085
        %v3087 = vmul.f32 %v3062, 1.442695
        %v3088 = vpow.pop %v3087
        %v3089 = vmul.f32 %v3063, 1.442695
        %v3090 = vpow.pop %v3089
        %v3091 = vmul.f32 %v3064, 1.442695
        %v3092 = vpow.pop %v3091
        %v3093 = vmul.f32 %v3065, 1.442695
        %v3094 = vpow.pop %v3093
        %v3095 = vmul.f32 %v3066, 1.442695
        %v3096 = vpow.pop %v3095
        %v3097 = vmul.f32 %v3067, 1.442695
        %v3098 = vpow.pop %v3097
        %v3099 = vmul.f32 %v3068, 1.442695
        %v3100 = vpow.pop %v3099
        %v3101 = vsub.f32 %v2574, %v2941
        %v3102 = vsub.f32 %v2579, %v2942
        %v3103 = vsub.f32 %v2584, %v2943
        %v3104 = vsub.f32 %v2589, %v2944
        %v3105 = vsub.f32 %v2594, %v2945
        %v3106 = vsub.f32 %v2599, %v2946
        %v3107 = vsub.f32 %v2604, %v2947
        %v3108 = vsub.f32 %v2609, %v2948
        %v3109 = vsub.f32 %v2614, %v2949
        %v3110 = vsub.f32 %v2619, %v2950
        %v3111 = vsub.f32 %v2624, %v2951
        %v3112 = vsub.f32 %v2629, %v2952
        %v3113 = vsub.f32 %v2634, %v2953
        %v3114 = vsub.f32 %v2639, %v2954
        %v3115 = vsub.f32 %v2644, %v2955
        %v3116 = vsub.f32 %v2649, %v2956
        %v3117 = vmul.f32 %v3101, 1.442695
        %v3118 = vpow.pop %v3117
        %v3119 = vmul.f32 %v3102, 1.442695
        %v3120 = vpow.pop %v3119
        %v3121 = vmul.f32 %v3103, 1.442695
        %v3122 = vpow.pop %v3121
        %v3123 = vmul.f32 %v3104, 1.442695
        %v3124 = vpow.pop %v3123
        %v3125 = vmul.f32 %v3105, 1.442695
        %v3126 = vpow.pop %v3125
        %v3127 = vmul.f32 %v3106, 1.442695
        %v3128 = vpow.pop %v3127
        %v3129 = vmul.f32 %v3107, 1.442695
        %v3130 = vpow.pop %v3129
        %v3131 = vmul.f32 %v3108, 1.442695
        %v3132 = vpow.pop %v3131
        %v3133 = vmul.f32 %v3109, 1.442695
        %v3134 = vpow.pop %v3133
        %v3135 = vmul.f32 %v3110, 1.442695
        %v3136 = vpow.pop %v3135
        %v3137 = vmul.f32 %v3111, 1.442695
        %v3138 = vpow.pop %v3137
        %v3139 = vmul.f32 %v3112, 1.442695
        %v3140 = vpow.pop %v3139
        %v3141 = vmul.f32 %v3113, 1.442695
        %v3142 = vpow.pop %v3141
        %v3143 = vmul.f32 %v3114, 1.442695
        %v3144 = vpow.pop %v3143
        %v3145 = vmul.f32 %v3115, 1.442695
        %v3146 = vpow.pop %v3145
        %v3147 = vmul.f32 %v3116, 1.442695
        %v3148 = vpow.pop %v3147
        %v3149 = vsub.f32 %v2815, %v2941
        %v3150 = vsub.f32 %v2820, %v2942
        %v3151 = vsub.f32 %v2825, %v2943
        %v3152 = vsub.f32 %v2830, %v2944
        %v3153 = vsub.f32 %v2835, %v2945
        %v3154 = vsub.f32 %v2840, %v2946
        %v3155 = vsub.f32 %v2845, %v2947
        %v3156 = vsub.f32 %v2850, %v2948
        %v3157 = vsub.f32 %v2855, %v2949
        %v3158 = vsub.f32 %v2860, %v2950
        %v3159 = vsub.f32 %v2865, %v2951
        %v3160 = vsub.f32 %v2870, %v2952
        %v3161 = vsub.f32 %v2875, %v2953
        %v3162 = vsub.f32 %v2880, %v2954
        %v3163 = vsub.f32 %v2885, %v2955
        %v3164 = vsub.f32 %v2890, %v2956
        %v3165 = vmul.f32 %v3149, 1.442695
        %v3166 = vpow.pop %v3165
        %v3167 = vmul.f32 %v3150, 1.442695
        %v3168 = vpow.pop %v3167
        %v3169 = vmul.f32 %v3151, 1.442695
        %v3170 = vpow.pop %v3169
        %v3171 = vmul.f32 %v3152, 1.442695
        %v3172 = vpow.pop %v3171
        %v3173 = vmul.f32 %v3153, 1.442695
        %v3174 = vpow.pop %v3173
        %v3175 = vmul.f32 %v3154, 1.442695
        %v3176 = vpow.pop %v3175
        %v3177 = vmul.f32 %v3155, 1.442695
        %v3178 = vpow.pop %v3177
        %v3179 = vmul.f32 %v3156, 1.442695
        %v3180 = vpow.pop %v3179
        %v3181 = vmul.f32 %v3157, 1.442695
        %v3182 = vpow.pop %v3181
        %v3183 = vmul.f32 %v3158, 1.442695
        %v3184 = vpow.pop %v3183
        %v3185 = vmul.f32 %v3159, 1.442695
        %v3186 = vpow.pop %v3185
        %v3187 = vmul.f32 %v3160, 1.442695
        %v3188 = vpow.pop %v3187
        %v3189 = vmul.f32 %v3161, 1.442695
        %v3190 = vpow.pop %v3189
        %v3191 = vmul.f32 %v3162, 1.442695
        %v3192 = vpow.pop %v3191
        %v3193 = vmul.f32 %v3163, 1.442695
        %v3194 = vpow.pop %v3193
        %v3195 = vmul.f32 %v3164, 1.442695
        %v3196 = vpow.pop %v3195
        %v3197 = vadd.f32 %v2974, %v3022
        %v3198 = vadd.f32 %v2976, %v3024
        %v3199 = vadd.f32 %v2978, %v3026
        %v3200 = vadd.f32 %v2980, %v3028
        %v3201 = vadd.f32 %v2982, %v3030
        %v3202 = vadd.f32 %v2984, %v3032
        %v3203 = vadd.f32 %v2986, %v3034
        %v3204 = vadd.f32 %v2988, %v3036
        %v3205 = vadd.f32 %v2990, %v3038
        %v3206 = vadd.f32 %v2992, %v3040
        %v3207 = vadd.f32 %v2994, %v3042
        %v3208 = vadd.f32 %v2996, %v3044
        %v3209 = vadd.f32 %v2998, %v3046
        %v3210 = vadd.f32 %v3000, %v3048
        %v3211 = vadd.f32 %v3002, %v3050
        %v3212 = vadd.f32 %v3004, %v3052
        %v3213 = vadd.f32 %v3197, %v3070
        %v3214 = vadd.f32 %v3198, %v3072
        %v3215 = vadd.f32 %v3199, %v3074
        %v3216 = vadd.f32 %v3200, %v3076
        %v3217 = vadd.f32 %v3201, %v3078
        %v3218 = vadd.f32 %v3202, %v3080
        %v3219 = vadd.f32 %v3203, %v3082
        %v3220 = vadd.f32 %v3204, %v3084
        %v3221 = vadd.f32 %v3205, %v3086
        %v3222 = vadd.f32 %v3206, %v3088
        %v3223 = vadd.f32 %v3207, %v3090
        %v3224 = vadd.f32 %v3208, %v3092
        %v3225 = vadd.f32 %v3209, %v3094
        %v3226 = vadd.f32 %v3210, %v3096
        %v3227 = vadd.f32 %v3211, %v3098
        %v3228 = vadd.f32 %v3212, %v3100
        %v3229 = vadd.f32 %v3213, %v3118
        %v3230 = vadd.f32 %v3214, %v3120
        %v3231 = vadd.f32 %v3215, %v3122
        %v3232 = vadd.f32 %v3216, %v3124
        %v3233 = vadd.f32 %v3217, %v3126
        %v3234 = vadd.f32 %v3218, %v3128
        %v3235 = vadd.f32 %v3219, %v3130
        %v3236 = vadd.f32 %v3220, %v3132
        %v3237 = vadd.f32 %v3221, %v3134
        %v3238 = vadd.f32 %v3222, %v3136
        %v3239 = vadd.f32 %v3223, %v3138
        %v3240 = vadd.f32 %v3224, %v3140
        %v3241 = vadd.f32 %v3225, %v3142
        %v3242 = vadd.f32 %v3226, %v3144
        %v3243 = vadd.f32 %v3227, %v3146
        %v3244 = vadd.f32 %v3228, %v3148
        %v3245 = vadd.f32 %v3229, %v3166
        %v3246 = vadd.f32 %v3230, %v3168
        %v3247 = vadd.f32 %v3231, %v3170
        %v3248 = vadd.f32 %v3232, %v3172
        %v3249 = vadd.f32 %v3233, %v3174
        %v3250 = vadd.f32 %v3234, %v3176
        %v3251 = vadd.f32 %v3235, %v3178
        %v3252 = vadd.f32 %v3236, %v3180
        %v3253 = vadd.f32 %v3237, %v3182
        %v3254 = vadd.f32 %v3238, %v3184
        %v3255 = vadd.f32 %v3239, %v3186
        %v3256 = vadd.f32 %v3240, %v3188
        %v3257 = vadd.f32 %v3241, %v3190
        %v3258 = vadd.f32 %v3242, %v3192
        %v3259 = vadd.f32 %v3243, %v3194
        %v3260 = vadd.f32 %v3244, %v3196
        %v3261 = vrcp.pop %v3245
        %v3262 = vrcp.pop %v3246
        %v3263 = vrcp.pop %v3247
        %v3264 = vrcp.pop %v3248
        %v3265 = vrcp.pop %v3249
        %v3266 = vrcp.pop %v3250
        %v3267 = vrcp.pop %v3251
        %v3268 = vrcp.pop %v3252
        %v3269 = vrcp.pop %v3253
        %v3270 = vrcp.pop %v3254
        %v3271 = vrcp.pop %v3255
        %v3272 = vrcp.pop %v3256
        %v3273 = vrcp.pop %v3257
        %v3274 = vrcp.pop %v3258
        %v3275 = vrcp.pop %v3259
        %v3276 = vrcp.pop %v3260
        %v3277 = vmul.f32 %v2974, %v3261
        %v3278 = vmul.f32 %v2976, %v3262
        %v3279 = vmul.f32 %v2978, %v3263
        %v3280 = vmul.f32 %v2980, %v3264
        %v3281 = vmul.f32 %v2982, %v3265
        %v3282 = vmul.f32 %v2984, %v3266
        %v3283 = vmul.f32 %v2986, %v3267
        %v3284 = vmul.f32 %v2988, %v3268
        %v3285 = vmul.f32 %v2990, %v3269
        %v3286 = vmul.f32 %v2992, %v3270
        %v3287 = vmul.f32 %v2994, %v3271
        %v3288 = vmul.f32 %v2996, %v3272
        %v3289 = vmul.f32 %v2998, %v3273
        %v3290 = vmul.f32 %v3000, %v3274
        %v3291 = vmul.f32 %v3002, %v3275
        %v3292 = vmul.f32 %v3004, %v3276
        %vm3293 = vcmask 31744
        %v3295 = vsel %vm3293, %v3277, 0
        %v3298 = vsel %vm3293, %v3278, 0
        %v3301 = vsel %vm3293, %v3279, 0
        %v3304 = vsel %vm3293, %v3280, 0
        %v3307 = vsel %vm3293, %v3281, 0
        %v3310 = vsel %vm3293, %v3282, 0
        %v3313 = vsel %vm3293, %v3283, 0
        %v3316 = vsel %vm3293, %v3284, 0
        %v3319 = vsel %vm3293, %v3285, 0
        %v3322 = vsel %vm3293, %v3286, 0
        %v3325 = vsel %vm3293, %v3287, 0
        %v3328 = vsel %vm3293, %v3288, 0
        %v3331 = vsel %vm3293, %v3289, 0
        %v3334 = vsel %vm3293, %v3290, 0
        %v3337 = vsel %vm3293, %v3291, 0
        %v3340 = vsel %vm3293, %v3292, 0
        %vm3342 = vcmask 1043456
        %v3344 = vsel %vm3342, %v1623, 0
        %3346 = vmatprep.subr.mxu0 0.0
        %3347 = vmatpush1.msra.mxu0 %v3344
        %3348 = vmatprep.subr.mxu0 0.0
        %3349 = vmatpush1.msra.mxu0 0.0
        %3350 = vmatprep.subr.mxu0 0.0
        %3351 = vmatpush1.msra.mxu0 0.0
        %3352 = vmatprep.subr.mxu0 0.0
        %3353 = vmatpush1.msra.mxu0 0.0
        %3354 = vmatprep.subr.mxu0 0.0
        %3355 = vmatpush1.msra.mxu0 0.0
        %3356 = vmatprep.subr.mxu0 0.0
        %3357 = vmatpush1.msra.mxu0 0.0
        %3358 = vmatprep.subr.mxu0 0.0
        %3359 = vmatpush1.msra.mxu0 0.0
        %3360 = vmatprep.subr.mxu0 0.0
        %3361 = vmatpush1.msra.mxu0 0.0
        %3362 = vmatprep.subr.mxu0 0.0
        %3363 = vmatpush1.msra.mxu0 0.0
        %3364 = vmatprep.subr.mxu0 0.0
        %3365 = vmatpush1.msra.mxu0 0.0
        %3366 = vmatprep.subr.mxu0 0.0
        %3367 = vmatpush1.msra.mxu0 0.0
        %3368 = vmatprep.subr.mxu0 0.0
        %3369 = vmatpush1.msra.mxu0 0.0
        %3370 = vmatprep.subr.mxu0 0.0
        %3371 = vmatpush1.msra.mxu0 0.0
        %3372 = vmatprep.subr.mxu0 0.0
        %3373 = vmatpush1.msra.mxu0 0.0
        %3374 = vmatprep.subr.mxu0 0.0
        %3375 = vmatpush1.msra.mxu0 0.0
        %3376 = vmatprep.subr.mxu0 0.0
        %3377 = vmatpush1.msra.mxu0 0.0
        %3378 = vmatprep.subr.mxu0 0.0
        %3379 = vmatpush1.msra.mxu0 0.0
        %3380 = vmatprep.subr.mxu0 0.0
        %3381 = vmatpush1.msra.mxu0 0.0
        %3382 = vmatprep.subr.mxu0 0.0
        %3383 = vmatpush1.msra.mxu0 0.0
        %3384 = vmatprep.subr.mxu0 0.0
        %3385 = vmatpush1.msra.mxu0 0.0
        %3386 = vmatprep.subr.mxu0 0.0
        %3387 = vmatpush1.msra.mxu0 0.0
        %3388 = vmatprep.subr.mxu0 0.0
        %3389 = vmatpush1.msra.mxu0 0.0
        %3390 = vmatprep.subr.mxu0 0.0
        %3391 = vmatpush1.msra.mxu0 0.0
        %3392 = vmatprep.subr.mxu0 0.0
        %3393 = vmatpush1.msra.mxu0 0.0
        %3394 = vmatprep.subr.mxu0 0.0
        %3395 = vmatpush1.msra.mxu0 0.0
        %3396 = vmatprep.subr.mxu0 0.0
        %3397 = vmatpush1.msra.mxu0 0.0
        %3398 = vmatprep.subr.mxu0 0.0
        %3399 = vmatpush1.msra.mxu0 0.0
        %3400 = vmatprep.subr.mxu0 0.0
        %3401 = vmatpush1.msra.mxu0 0.0
        %3402 = vmatprep.subr.mxu0 0.0
        %3403 = vmatpush1.msra.mxu0 0.0
        %3404 = vmatprep.subr.mxu0 0.0
        %3405 = vmatpush1.msra.mxu0 0.0
        %3406 = vmatprep.subr.mxu0 0.0
        %3407 = vmatpush1.msra.mxu0 0.0
        %3408 = vmatprep.subr.mxu0 0.0
        %3409 = vmatpush1.msra.mxu0 0.0
        %3410 = vmatprep.mubr.f32.mxu0 0.0
        %3411 = vmatmul.mubr.f32.gmra.mrb[0].mxu0 %v3295
        %v3412 = vpop.f32.mrb[0].mxu0
        %v3413 = vadd.f32 0.0, %v3412
        %v3414 = vpop.f32.mrb[0].mxu0
        %3415 = vmatprep.mubr.f32.mxu0 0.0
        %3416 = vmatmul.mubr.f32.gmra.mrb[0].mxu0 %v3298
        %v3417 = vpop.f32.mrb[0].mxu0
        %v3418 = vadd.f32 0.0, %v3417
        %v3419 = vpop.f32.mrb[0].mxu0
        %3420 = vmatprep.mubr.f32.mxu0 0.0
        %3421 = vmatmul.mubr.f32.gmra.mrb[0].mxu0 %v3301
        %v3422 = vpop.f32.mrb[0].mxu0
        %v3423 = vadd.f32 0.0, %v3422
        %v3424 = vpop.f32.mrb[0].mxu0
        %3425 = vmatprep.mubr.f32.mxu0 0.0
        %3426 = vmatmul.mubr.f32.gmra.mrb[0].mxu0 %v3304
        %v3427 = vpop.f32.mrb[0].mxu0
        %v3428 = vadd.f32 0.0, %v3427
        %v3429 = vpop.f32.mrb[0].mxu0
        %3430 = vmatprep.mubr.f32.mxu0 0.0
        %3431 = vmatmul.mubr.f32.gmra.mrb[0].mxu0 %v3307
        %v3432 = vpop.f32.mrb[0].mxu0
        %v3433 = vadd.f32 0.0, %v3432
        %v3434 = vpop.f32.mrb[0].mxu0
        %3435 = vmatprep.mubr.f32.mxu0 0.0
        %3436 = vmatmul.mubr.f32.gmra.mrb[0].mxu0 %v3310
        %v3437 = vpop.f32.mrb[0].mxu0
        %v3438 = vadd.f32 0.0, %v3437
        %v3439 = vpop.f32.mrb[0].mxu0
        %3440 = vmatprep.mubr.f32.mxu0 0.0
        %3441 = vmatmul.mubr.f32.gmra.mrb[0].mxu0 %v3313
        %v3442 = vpop.f32.mrb[0].mxu0
        %v3443 = vadd.f32 0.0, %v3442
        %v3444 = vpop.f32.mrb[0].mxu0
        %3445 = vmatprep.mubr.f32.mxu0 0.0
        %3446 = vmatmul.mubr.f32.gmra.mrb[0].mxu0 %v3316
        %v3447 = vpop.f32.mrb[0].mxu0
        %v3448 = vadd.f32 0.0, %v3447
        %v3449 = vpop.f32.mrb[0].mxu0
        %3450 = vmatprep.mubr.f32.mxu0 0.0
        %3451 = vmatmul.mubr.f32.gmra.mrb[0].mxu0 %v3319
        %v3452 = vpop.f32.mrb[0].mxu0
        %v3453 = vadd.f32 0.0, %v3452
        %v3454 = vpop.f32.mrb[0].mxu0
        %3455 = vmatprep.mubr.f32.mxu0 0.0
        %3456 = vmatmul.mubr.f32.gmra.mrb[0].mxu0 %v3322
        %v3457 = vpop.f32.mrb[0].mxu0
        %v3458 = vadd.f32 0.0, %v3457
        %v3459 = vpop.f32.mrb[0].mxu0
        %3460 = vmatprep.mubr.f32.mxu0 0.0
        %3461 = vmatmul.mubr.f32.gmra.mrb[0].mxu0 %v3325
        %v3462 = vpop.f32.mrb[0].mxu0
        %v3463 = vadd.f32 0.0, %v3462
        %v3464 = vpop.f32.mrb[0].mxu0
        %3465 = vmatprep.mubr.f32.mxu0 0.0
        %3466 = vmatmul.mubr.f32.gmra.mrb[0].mxu0 %v3328
        %v3467 = vpop.f32.mrb[0].mxu0
        %v3468 = vadd.f32 0.0, %v3467
        %v3469 = vpop.f32.mrb[0].mxu0
        %3470 = vmatprep.mubr.f32.mxu0 0.0
        %3471 = vmatmul.mubr.f32.gmra.mrb[0].mxu0 %v3331
        %v3472 = vpop.f32.mrb[0].mxu0
        %v3473 = vadd.f32 0.0, %v3472
        %v3474 = vpop.f32.mrb[0].mxu0
        %3475 = vmatprep.mubr.f32.mxu0 0.0
        %3476 = vmatmul.mubr.f32.gmra.mrb[0].mxu0 %v3334
        %v3477 = vpop.f32.mrb[0].mxu0
        %v3478 = vadd.f32 0.0, %v3477
        %v3479 = vpop.f32.mrb[0].mxu0
        %3480 = vmatprep.mubr.f32.mxu0 0.0
        %3481 = vmatmul.mubr.f32.gmra.mrb[0].mxu0 %v3337
        %v3482 = vpop.f32.mrb[0].mxu0
        %v3483 = vadd.f32 0.0, %v3482
        %v3484 = vpop.f32.mrb[0].mxu0
        %3485 = vmatprep.mubr.f32.mxu0 0.0
        %3486 = vmatmul.mubr.f32.gmra.mrb[0].mxu0 %v3340
        %v3487 = vpop.f32.mrb[0].mxu0
        %v3488 = vadd.f32 0.0, %v3487
        %v3489 = vpop.f32.mrb[0].mxu0
        %3490 = vdwg.mxu0
        %v3491 = vmul.f32 %v3413, %v1219
        %v3492 = vmul.f32 %v3418, %v1223
        %v3493 = vmul.f32 %v3423, %v1229
        %v3494 = vmul.f32 %v3428, %v1233
        %v3495 = vmul.f32 %v3433, %v1239
        %v3496 = vmul.f32 %v3438, %v1243
        %v3497 = vmul.f32 %v3443, %v1249
        %v3498 = vmul.f32 %v3448, %v1253
        %v3499 = vmul.f32 %v3453, %v1259
        %v3500 = vmul.f32 %v3458, %v1263
        %v3501 = vmul.f32 %v3463, %v1269
        %v3502 = vmul.f32 %v3468, %v1273
        %v3503 = vmul.f32 %v3473, %v1279
        %v3504 = vmul.f32 %v3478, %v1283
        %v3505 = vmul.f32 %v3483, %v1289
        %v3506 = vmul.f32 %v3488, %v1293
        %v3507 = vmul.f32 %v3022, %v3261
        %v3508 = vmul.f32 %v3024, %v3262
        %v3509 = vmul.f32 %v3026, %v3263
        %v3510 = vmul.f32 %v3028, %v3264
        %v3511 = vmul.f32 %v3030, %v3265
        %v3512 = vmul.f32 %v3032, %v3266
        %v3513 = vmul.f32 %v3034, %v3267
        %v3514 = vmul.f32 %v3036, %v3268
        %v3515 = vmul.f32 %v3038, %v3269
        %v3516 = vmul.f32 %v3040, %v3270
        %v3517 = vmul.f32 %v3042, %v3271
        %v3518 = vmul.f32 %v3044, %v3272
        %v3519 = vmul.f32 %v3046, %v3273
        %v3520 = vmul.f32 %v3048, %v3274
        %v3521 = vmul.f32 %v3050, %v3275
        %v3522 = vmul.f32 %v3052, %v3276
        %v3524 = vsel %vm3293, %v3507, 0
        %v3527 = vsel %vm3293, %v3508, 0
        %v3530 = vsel %vm3293, %v3509, 0
        %v3533 = vsel %vm3293, %v3510, 0
        %v3536 = vsel %vm3293, %v3511, 0
        %v3539 = vsel %vm3293, %v3512, 0
        %v3542 = vsel %vm3293, %v3513, 0
        %v3545 = vsel %vm3293, %v3514, 0
        %v3548 = vsel %vm3293, %v3515, 0
        %v3551 = vsel %vm3293, %v3516, 0
        %v3554 = vsel %vm3293, %v3517, 0
        %v3557 = vsel %vm3293, %v3518, 0
        %v3560 = vsel %vm3293, %v3519, 0
        %v3563 = vsel %vm3293, %v3520, 0
        %v3566 = vsel %vm3293, %v3521, 0
        %v3569 = vsel %vm3293, %v3522, 0
        %3571 = vmatprep.subr.mxu0 0.0
        %3572 = vmatpush1.msra.mxu0 %v3344
        %3573 = vmatprep.subr.mxu0 0.0
        %3574 = vmatpush1.msra.mxu0 0.0
        %3575 = vmatprep.subr.mxu0 0.0
        %3576 = vmatpush1.msra.mxu0 0.0
        %3577 = vmatprep.subr.mxu0 0.0
        %3578 = vmatpush1.msra.mxu0 0.0
        %3579 = vmatprep.subr.mxu0 0.0
        %3580 = vmatpush1.msra.mxu0 0.0
        %3581 = vmatprep.subr.mxu0 0.0
        %3582 = vmatpush1.msra.mxu0 0.0
        %3583 = vmatprep.subr.mxu0 0.0
        %3584 = vmatpush1.msra.mxu0 0.0
        %3585 = vmatprep.subr.mxu0 0.0
        %3586 = vmatpush1.msra.mxu0 0.0
        %3587 = vmatprep.subr.mxu0 0.0
        %3588 = vmatpush1.msra.mxu0 0.0
        %3589 = vmatprep.subr.mxu0 0.0
        %3590 = vmatpush1.msra.mxu0 0.0
        %3591 = vmatprep.subr.mxu0 0.0
        %3592 = vmatpush1.msra.mxu0 0.0
        %3593 = vmatprep.subr.mxu0 0.0
        %3594 = vmatpush1.msra.mxu0 0.0
        %3595 = vmatprep.subr.mxu0 0.0
        %3596 = vmatpush1.msra.mxu0 0.0
        %3597 = vmatprep.subr.mxu0 0.0
        %3598 = vmatpush1.msra.mxu0 0.0
        %3599 = vmatprep.subr.mxu0 0.0
        %3600 = vmatpush1.msra.mxu0 0.0
        %3601 = vmatprep.subr.mxu0 0.0
        %3602 = vmatpush1.msra.mxu0 0.0
        %3603 = vmatprep.subr.mxu0 0.0
        %3604 = vmatpush1.msra.mxu0 0.0
        %3605 = vmatprep.subr.mxu0 0.0
        %3606 = vmatpush1.msra.mxu0 0.0
        %3607 = vmatprep.subr.mxu0 0.0
        %3608 = vmatpush1.msra.mxu0 0.0
        %3609 = vmatprep.subr.mxu0 0.0
        %3610 = vmatpush1.msra.mxu0 0.0
        %3611 = vmatprep.subr.mxu0 0.0
        %3612 = vmatpush1.msra.mxu0 0.0
        %3613 = vmatprep.subr.mxu0 0.0
        %3614 = vmatpush1.msra.mxu0 0.0
        %3615 = vmatprep.subr.mxu0 0.0
        %3616 = vmatpush1.msra.mxu0 0.0
        %3617 = vmatprep.subr.mxu0 0.0
        %3618 = vmatpush1.msra.mxu0 0.0
        %3619 = vmatprep.subr.mxu0 0.0
        %3620 = vmatpush1.msra.mxu0 0.0
        %3621 = vmatprep.subr.mxu0 0.0
        %3622 = vmatpush1.msra.mxu0 0.0
        %3623 = vmatprep.subr.mxu0 0.0
        %3624 = vmatpush1.msra.mxu0 0.0
        %3625 = vmatprep.subr.mxu0 0.0
        %3626 = vmatpush1.msra.mxu0 0.0
        %3627 = vmatprep.subr.mxu0 0.0
        %3628 = vmatpush1.msra.mxu0 0.0
        %3629 = vmatprep.subr.mxu0 0.0
        %3630 = vmatpush1.msra.mxu0 0.0
        %3631 = vmatprep.subr.mxu0 0.0
        %3632 = vmatpush1.msra.mxu0 0.0
        %3633 = vmatprep.subr.mxu0 0.0
        %3634 = vmatpush1.msra.mxu0 0.0
        %3635 = vmatprep.mubr.f32.mxu0 0.0
        %3636 = vmatmul.mubr.f32.gmra.mrb[0].mxu0 %v3524
        %v3637 = vpop.f32.mrb[0].mxu0
        %v3638 = vadd.f32 0.0, %v3637
        %v3639 = vpop.f32.mrb[0].mxu0
        %3640 = vmatprep.mubr.f32.mxu0 0.0
        %3641 = vmatmul.mubr.f32.gmra.mrb[0].mxu0 %v3527
        %v3642 = vpop.f32.mrb[0].mxu0
        %v3643 = vadd.f32 0.0, %v3642
        %v3644 = vpop.f32.mrb[0].mxu0
        %3645 = vmatprep.mubr.f32.mxu0 0.0
        %3646 = vmatmul.mubr.f32.gmra.mrb[0].mxu0 %v3530
        %v3647 = vpop.f32.mrb[0].mxu0
        %v3648 = vadd.f32 0.0, %v3647
        %v3649 = vpop.f32.mrb[0].mxu0
        %3650 = vmatprep.mubr.f32.mxu0 0.0
        %3651 = vmatmul.mubr.f32.gmra.mrb[0].mxu0 %v3533
        %v3652 = vpop.f32.mrb[0].mxu0
        %v3653 = vadd.f32 0.0, %v3652
        %v3654 = vpop.f32.mrb[0].mxu0
        %3655 = vmatprep.mubr.f32.mxu0 0.0
        %3656 = vmatmul.mubr.f32.gmra.mrb[0].mxu0 %v3536
        %v3657 = vpop.f32.mrb[0].mxu0
        %v3658 = vadd.f32 0.0, %v3657
        %v3659 = vpop.f32.mrb[0].mxu0
        %3660 = vmatprep.mubr.f32.mxu0 0.0
        %3661 = vmatmul.mubr.f32.gmra.mrb[0].mxu0 %v3539
        %v3662 = vpop.f32.mrb[0].mxu0
        %v3663 = vadd.f32 0.0, %v3662
        %v3664 = vpop.f32.mrb[0].mxu0
        %3665 = vmatprep.mubr.f32.mxu0 0.0
        %3666 = vmatmul.mubr.f32.gmra.mrb[0].mxu0 %v3542
        %v3667 = vpop.f32.mrb[0].mxu0
        %v3668 = vadd.f32 0.0, %v3667
        %v3669 = vpop.f32.mrb[0].mxu0
        %3670 = vmatprep.mubr.f32.mxu0 0.0
        %3671 = vmatmul.mubr.f32.gmra.mrb[0].mxu0 %v3545
        %v3672 = vpop.f32.mrb[0].mxu0
        %v3673 = vadd.f32 0.0, %v3672
        %v3674 = vpop.f32.mrb[0].mxu0
        %3675 = vmatprep.mubr.f32.mxu0 0.0
        %3676 = vmatmul.mubr.f32.gmra.mrb[0].mxu0 %v3548
        %v3677 = vpop.f32.mrb[0].mxu0
        %v3678 = vadd.f32 0.0, %v3677
        %v3679 = vpop.f32.mrb[0].mxu0
        %3680 = vmatprep.mubr.f32.mxu0 0.0
        %3681 = vmatmul.mubr.f32.gmra.mrb[0].mxu0 %v3551
        %v3682 = vpop.f32.mrb[0].mxu0
        %v3683 = vadd.f32 0.0, %v3682
        %v3684 = vpop.f32.mrb[0].mxu0
        %3685 = vmatprep.mubr.f32.mxu0 0.0
        %3686 = vmatmul.mubr.f32.gmra.mrb[0].mxu0 %v3554
        %v3687 = vpop.f32.mrb[0].mxu0
        %v3688 = vadd.f32 0.0, %v3687
        %v3689 = vpop.f32.mrb[0].mxu0
        %3690 = vmatprep.mubr.f32.mxu0 0.0
        %3691 = vmatmul.mubr.f32.gmra.mrb[0].mxu0 %v3557
        %v3692 = vpop.f32.mrb[0].mxu0
        %v3693 = vadd.f32 0.0, %v3692
        %v3694 = vpop.f32.mrb[0].mxu0
        %3695 = vmatprep.mubr.f32.mxu0 0.0
        %3696 = vmatmul.mubr.f32.gmra.mrb[0].mxu0 %v3560
        %v3697 = vpop.f32.mrb[0].mxu0
        %v3698 = vadd.f32 0.0, %v3697
        %v3699 = vpop.f32.mrb[0].mxu0
        %3700 = vmatprep.mubr.f32.mxu0 0.0
        %3701 = vmatmul.mubr.f32.gmra.mrb[0].mxu0 %v3563
        %v3702 = vpop.f32.mrb[0].mxu0
        %v3703 = vadd.f32 0.0, %v3702
        %v3704 = vpop.f32.mrb[0].mxu0
        %3705 = vmatprep.mubr.f32.mxu0 0.0
        %3706 = vmatmul.mubr.f32.gmra.mrb[0].mxu0 %v3566
        %v3707 = vpop.f32.mrb[0].mxu0
        %v3708 = vadd.f32 0.0, %v3707
        %v3709 = vpop.f32.mrb[0].mxu0
        %3710 = vmatprep.mubr.f32.mxu0 0.0
        %3711 = vmatmul.mubr.f32.gmra.mrb[0].mxu0 %v3569
        %v3712 = vpop.f32.mrb[0].mxu0
        %v3713 = vadd.f32 0.0, %v3712
        %v3714 = vpop.f32.mrb[0].mxu0
        %3715 = vdwg.mxu0
        %v3716 = vmul.f32 %v3638, %v1299
        %v3717 = vmul.f32 %v3643, %v1303
        %v3718 = vmul.f32 %v3648, %v1309
        %v3719 = vmul.f32 %v3653, %v1313
        %v3720 = vmul.f32 %v3658, %v1319
        %v3721 = vmul.f32 %v3663, %v1323
        %v3722 = vmul.f32 %v3668, %v1329
        %v3723 = vmul.f32 %v3673, %v1333
        %v3724 = vmul.f32 %v3678, %v1339
        %v3725 = vmul.f32 %v3683, %v1343
        %v3726 = vmul.f32 %v3688, %v1349
        %v3727 = vmul.f32 %v3693, %v1353
        %v3728 = vmul.f32 %v3698, %v1359
        %v3729 = vmul.f32 %v3703, %v1363
        %v3730 = vmul.f32 %v3708, %v1369
        %v3731 = vmul.f32 %v3713, %v1373
        %v3732 = vadd.f32 %v3491, %v3716
        %v3733 = vadd.f32 %v3492, %v3717
        %v3734 = vadd.f32 %v3493, %v3718
        %v3735 = vadd.f32 %v3494, %v3719
        %v3736 = vadd.f32 %v3495, %v3720
        %v3737 = vadd.f32 %v3496, %v3721
        %v3738 = vadd.f32 %v3497, %v3722
        %v3739 = vadd.f32 %v3498, %v3723
        %v3740 = vadd.f32 %v3499, %v3724
        %v3741 = vadd.f32 %v3500, %v3725
        %v3742 = vadd.f32 %v3501, %v3726
        %v3743 = vadd.f32 %v3502, %v3727
        %v3744 = vadd.f32 %v3503, %v3728
        %v3745 = vadd.f32 %v3504, %v3729
        %v3746 = vadd.f32 %v3505, %v3730
        %v3747 = vadd.f32 %v3506, %v3731
        %v3748 = vmul.f32 %v3070, %v3261
        %v3749 = vmul.f32 %v3072, %v3262
        %v3750 = vmul.f32 %v3074, %v3263
        %v3751 = vmul.f32 %v3076, %v3264
        %v3752 = vmul.f32 %v3078, %v3265
        %v3753 = vmul.f32 %v3080, %v3266
        %v3754 = vmul.f32 %v3082, %v3267
        %v3755 = vmul.f32 %v3084, %v3268
        %v3756 = vmul.f32 %v3086, %v3269
        %v3757 = vmul.f32 %v3088, %v3270
        %v3758 = vmul.f32 %v3090, %v3271
        %v3759 = vmul.f32 %v3092, %v3272
        %v3760 = vmul.f32 %v3094, %v3273
        %v3761 = vmul.f32 %v3096, %v3274
        %v3762 = vmul.f32 %v3098, %v3275
        %v3763 = vmul.f32 %v3100, %v3276
        %v3765 = vsel %vm3293, %v3748, 0
        %v3768 = vsel %vm3293, %v3749, 0
        %v3771 = vsel %vm3293, %v3750, 0
        %v3774 = vsel %vm3293, %v3751, 0
        %v3777 = vsel %vm3293, %v3752, 0
        %v3780 = vsel %vm3293, %v3753, 0
        %v3783 = vsel %vm3293, %v3754, 0
        %v3786 = vsel %vm3293, %v3755, 0
        %v3789 = vsel %vm3293, %v3756, 0
        %v3792 = vsel %vm3293, %v3757, 0
        %v3795 = vsel %vm3293, %v3758, 0
        %v3798 = vsel %vm3293, %v3759, 0
        %v3801 = vsel %vm3293, %v3760, 0
        %v3804 = vsel %vm3293, %v3761, 0
        %v3807 = vsel %vm3293, %v3762, 0
        %v3810 = vsel %vm3293, %v3763, 0
        %3812 = vmatprep.subr.mxu0 0.0
        %3813 = vmatpush1.msra.mxu0 %v3344
        %3814 = vmatprep.subr.mxu0 0.0
        %3815 = vmatpush1.msra.mxu0 0.0
        %3816 = vmatprep.subr.mxu0 0.0
        %3817 = vmatpush1.msra.mxu0 0.0
        %3818 = vmatprep.subr.mxu0 0.0
        %3819 = vmatpush1.msra.mxu0 0.0
        %3820 = vmatprep.subr.mxu0 0.0
        %3821 = vmatpush1.msra.mxu0 0.0
        %3822 = vmatprep.subr.mxu0 0.0
        %3823 = vmatpush1.msra.mxu0 0.0
        %3824 = vmatprep.subr.mxu0 0.0
        %3825 = vmatpush1.msra.mxu0 0.0
        %3826 = vmatprep.subr.mxu0 0.0
        %3827 = vmatpush1.msra.mxu0 0.0
        %3828 = vmatprep.subr.mxu0 0.0
        %3829 = vmatpush1.msra.mxu0 0.0
        %3830 = vmatprep.subr.mxu0 0.0
        %3831 = vmatpush1.msra.mxu0 0.0
        %3832 = vmatprep.subr.mxu0 0.0
        %3833 = vmatpush1.msra.mxu0 0.0
        %3834 = vmatprep.subr.mxu0 0.0
        %3835 = vmatpush1.msra.mxu0 0.0
        %3836 = vmatprep.subr.mxu0 0.0
        %3837 = vmatpush1.msra.mxu0 0.0
        %3838 = vmatprep.subr.mxu0 0.0
        %3839 = vmatpush1.msra.mxu0 0.0
        %3840 = vmatprep.subr.mxu0 0.0
        %3841 = vmatpush1.msra.mxu0 0.0
        %3842 = vmatprep.subr.mxu0 0.0
        %3843 = vmatpush1.msra.mxu0 0.0
        %3844 = vmatprep.subr.mxu0 0.0
        %3845 = vmatpush1.msra.mxu0 0.0
        %3846 = vmatprep.subr.mxu0 0.0
        %3847 = vmatpush1.msra.mxu0 0.0
        %3848 = vmatprep.subr.mxu0 0.0
        %3849 = vmatpush1.msra.mxu0 0.0
        %3850 = vmatprep.subr.mxu0 0.0
        %3851 = vmatpush1.msra.mxu0 0.0
        %3852 = vmatprep.subr.mxu0 0.0
        %3853 = vmatpush1.msra.mxu0 0.0
        %3854 = vmatprep.subr.mxu0 0.0
        %3855 = vmatpush1.msra.mxu0 0.0
        %3856 = vmatprep.subr.mxu0 0.0
        %3857 = vmatpush1.msra.mxu0 0.0
        %3858 = vmatprep.subr.mxu0 0.0
        %3859 = vmatpush1.msra.mxu0 0.0
        %3860 = vmatprep.subr.mxu0 0.0
        %3861 = vmatpush1.msra.mxu0 0.0
        %3862 = vmatprep.subr.mxu0 0.0
        %3863 = vmatpush1.msra.mxu0 0.0
        %3864 = vmatprep.subr.mxu0 0.0
        %3865 = vmatpush1.msra.mxu0 0.0
        %3866 = vmatprep.subr.mxu0 0.0
        %3867 = vmatpush1.msra.mxu0 0.0
        %3868 = vmatprep.subr.mxu0 0.0
        %3869 = vmatpush1.msra.mxu0 0.0
        %3870 = vmatprep.subr.mxu0 0.0
        %3871 = vmatpush1.msra.mxu0 0.0
        %3872 = vmatprep.subr.mxu0 0.0
        %3873 = vmatpush1.msra.mxu0 0.0
        %3874 = vmatprep.subr.mxu0 0.0
        %3875 = vmatpush1.msra.mxu0 0.0
        %3876 = vmatprep.mubr.f32.mxu0 0.0
        %3877 = vmatmul.mubr.f32.gmra.mrb[0].mxu0 %v3765
        %v3878 = vpop.f32.mrb[0].mxu0
        %v3879 = vadd.f32 0.0, %v3878
        %v3880 = vpop.f32.mrb[0].mxu0
        %3881 = vmatprep.mubr.f32.mxu0 0.0
        %3882 = vmatmul.mubr.f32.gmra.mrb[0].mxu0 %v3768
        %v3883 = vpop.f32.mrb[0].mxu0
        %v3884 = vadd.f32 0.0, %v3883
        %v3885 = vpop.f32.mrb[0].mxu0
        %3886 = vmatprep.mubr.f32.mxu0 0.0
        %3887 = vmatmul.mubr.f32.gmra.mrb[0].mxu0 %v3771
        %v3888 = vpop.f32.mrb[0].mxu0
        %v3889 = vadd.f32 0.0, %v3888
        %v3890 = vpop.f32.mrb[0].mxu0
        %3891 = vmatprep.mubr.f32.mxu0 0.0
        %3892 = vmatmul.mubr.f32.gmra.mrb[0].mxu0 %v3774
        %v3893 = vpop.f32.mrb[0].mxu0
        %v3894 = vadd.f32 0.0, %v3893
        %v3895 = vpop.f32.mrb[0].mxu0
        %3896 = vmatprep.mubr.f32.mxu0 0.0
        %3897 = vmatmul.mubr.f32.gmra.mrb[0].mxu0 %v3777
        %v3898 = vpop.f32.mrb[0].mxu0
        %v3899 = vadd.f32 0.0, %v3898
        %v3900 = vpop.f32.mrb[0].mxu0
        %3901 = vmatprep.mubr.f32.mxu0 0.0
        %3902 = vmatmul.mubr.f32.gmra.mrb[0].mxu0 %v3780
        %v3903 = vpop.f32.mrb[0].mxu0
        %v3904 = vadd.f32 0.0, %v3903
        %v3905 = vpop.f32.mrb[0].mxu0
        %3906 = vmatprep.mubr.f32.mxu0 0.0
        %3907 = vmatmul.mubr.f32.gmra.mrb[0].mxu0 %v3783
        %v3908 = vpop.f32.mrb[0].mxu0
        %v3909 = vadd.f32 0.0, %v3908
        %v3910 = vpop.f32.mrb[0].mxu0
        %3911 = vmatprep.mubr.f32.mxu0 0.0
        %3912 = vmatmul.mubr.f32.gmra.mrb[0].mxu0 %v3786
        %v3913 = vpop.f32.mrb[0].mxu0
        %v3914 = vadd.f32 0.0, %v3913
        %v3915 = vpop.f32.mrb[0].mxu0
        %3916 = vmatprep.mubr.f32.mxu0 0.0
        %3917 = vmatmul.mubr.f32.gmra.mrb[0].mxu0 %v3789
        %v3918 = vpop.f32.mrb[0].mxu0
        %v3919 = vadd.f32 0.0, %v3918
        %v3920 = vpop.f32.mrb[0].mxu0
        %3921 = vmatprep.mubr.f32.mxu0 0.0
        %3922 = vmatmul.mubr.f32.gmra.mrb[0].mxu0 %v3792
        %v3923 = vpop.f32.mrb[0].mxu0
        %v3924 = vadd.f32 0.0, %v3923
        %v3925 = vpop.f32.mrb[0].mxu0
        %3926 = vmatprep.mubr.f32.mxu0 0.0
        %3927 = vmatmul.mubr.f32.gmra.mrb[0].mxu0 %v3795
        %v3928 = vpop.f32.mrb[0].mxu0
        %v3929 = vadd.f32 0.0, %v3928
        %v3930 = vpop.f32.mrb[0].mxu0
        %3931 = vmatprep.mubr.f32.mxu0 0.0
        %3932 = vmatmul.mubr.f32.gmra.mrb[0].mxu0 %v3798
        %v3933 = vpop.f32.mrb[0].mxu0
        %v3934 = vadd.f32 0.0, %v3933
        %v3935 = vpop.f32.mrb[0].mxu0
        %3936 = vmatprep.mubr.f32.mxu0 0.0
        %3937 = vmatmul.mubr.f32.gmra.mrb[0].mxu0 %v3801
        %v3938 = vpop.f32.mrb[0].mxu0
        %v3939 = vadd.f32 0.0, %v3938
        %v3940 = vpop.f32.mrb[0].mxu0
        %3941 = vmatprep.mubr.f32.mxu0 0.0
        %3942 = vmatmul.mubr.f32.gmra.mrb[0].mxu0 %v3804
        %v3943 = vpop.f32.mrb[0].mxu0
        %v3944 = vadd.f32 0.0, %v3943
        %v3945 = vpop.f32.mrb[0].mxu0
        %3946 = vmatprep.mubr.f32.mxu0 0.0
        %3947 = vmatmul.mubr.f32.gmra.mrb[0].mxu0 %v3807
        %v3948 = vpop.f32.mrb[0].mxu0
        %v3949 = vadd.f32 0.0, %v3948
        %v3950 = vpop.f32.mrb[0].mxu0
        %3951 = vmatprep.mubr.f32.mxu0 0.0
        %3952 = vmatmul.mubr.f32.gmra.mrb[0].mxu0 %v3810
        %v3953 = vpop.f32.mrb[0].mxu0
        %v3954 = vadd.f32 0.0, %v3953
        %v3955 = vpop.f32.mrb[0].mxu0
        %3956 = vdwg.mxu0
        %v3957 = vmul.f32 %v3879, %v1379
        %v3958 = vmul.f32 %v3884, %v1383
        %v3959 = vmul.f32 %v3889, %v1389
        %v3960 = vmul.f32 %v3894, %v1393
        %v3961 = vmul.f32 %v3899, %v1399
        %v3962 = vmul.f32 %v3904, %v1403
        %v3963 = vmul.f32 %v3909, %v1409
        %v3964 = vmul.f32 %v3914, %v1413
        %v3965 = vmul.f32 %v3919, %v1419
        %v3966 = vmul.f32 %v3924, %v1423
        %v3967 = vmul.f32 %v3929, %v1429
        %v3968 = vmul.f32 %v3934, %v1433
        %v3969 = vmul.f32 %v3939, %v1439
        %v3970 = vmul.f32 %v3944, %v1443
        %v3971 = vmul.f32 %v3949, %v1449
        %v3972 = vmul.f32 %v3954, %v1453
        %v3973 = vadd.f32 %v3732, %v3957
        %v3974 = vadd.f32 %v3733, %v3958
        %v3975 = vadd.f32 %v3734, %v3959
        %v3976 = vadd.f32 %v3735, %v3960
        %v3977 = vadd.f32 %v3736, %v3961
        %v3978 = vadd.f32 %v3737, %v3962
        %v3979 = vadd.f32 %v3738, %v3963
        %v3980 = vadd.f32 %v3739, %v3964
        %v3981 = vadd.f32 %v3740, %v3965
        %v3982 = vadd.f32 %v3741, %v3966
        %v3983 = vadd.f32 %v3742, %v3967
        %v3984 = vadd.f32 %v3743, %v3968
        %v3985 = vadd.f32 %v3744, %v3969
        %v3986 = vadd.f32 %v3745, %v3970
        %v3987 = vadd.f32 %v3746, %v3971
        %v3988 = vadd.f32 %v3747, %v3972
        %v3989 = vmul.f32 %v3118, %v3261
        %v3990 = vmul.f32 %v3120, %v3262
        %v3991 = vmul.f32 %v3122, %v3263
        %v3992 = vmul.f32 %v3124, %v3264
        %v3993 = vmul.f32 %v3126, %v3265
        %v3994 = vmul.f32 %v3128, %v3266
        %v3995 = vmul.f32 %v3130, %v3267
        %v3996 = vmul.f32 %v3132, %v3268
        %v3997 = vmul.f32 %v3134, %v3269
        %v3998 = vmul.f32 %v3136, %v3270
        %v3999 = vmul.f32 %v3138, %v3271
        %v4000 = vmul.f32 %v3140, %v3272
        %v4001 = vmul.f32 %v3142, %v3273
        %v4002 = vmul.f32 %v3144, %v3274
        %v4003 = vmul.f32 %v3146, %v3275
        %v4004 = vmul.f32 %v3148, %v3276
        %v4006 = vsel %vm3293, %v3989, 0
        %v4009 = vsel %vm3293, %v3990, 0
        %v4012 = vsel %vm3293, %v3991, 0
        %v4015 = vsel %vm3293, %v3992, 0
        %v4018 = vsel %vm3293, %v3993, 0
        %v4021 = vsel %vm3293, %v3994, 0
        %v4024 = vsel %vm3293, %v3995, 0
        %v4027 = vsel %vm3293, %v3996, 0
        %v4030 = vsel %vm3293, %v3997, 0
        %v4033 = vsel %vm3293, %v3998, 0
        %v4036 = vsel %vm3293, %v3999, 0
        %v4039 = vsel %vm3293, %v4000, 0
        %v4042 = vsel %vm3293, %v4001, 0
        %v4045 = vsel %vm3293, %v4002, 0
        %v4048 = vsel %vm3293, %v4003, 0
        %v4051 = vsel %vm3293, %v4004, 0
        %4053 = vmatprep.subr.mxu0 0.0
        %4054 = vmatpush1.msra.mxu0 %v3344
        %4055 = vmatprep.subr.mxu0 0.0
        %4056 = vmatpush1.msra.mxu0 0.0
        %4057 = vmatprep.subr.mxu0 0.0
        %4058 = vmatpush1.msra.mxu0 0.0
        %4059 = vmatprep.subr.mxu0 0.0
        %4060 = vmatpush1.msra.mxu0 0.0
        %4061 = vmatprep.subr.mxu0 0.0
        %4062 = vmatpush1.msra.mxu0 0.0
        %4063 = vmatprep.subr.mxu0 0.0
        %4064 = vmatpush1.msra.mxu0 0.0
        %4065 = vmatprep.subr.mxu0 0.0
        %4066 = vmatpush1.msra.mxu0 0.0
        %4067 = vmatprep.subr.mxu0 0.0
        %4068 = vmatpush1.msra.mxu0 0.0
        %4069 = vmatprep.subr.mxu0 0.0
        %4070 = vmatpush1.msra.mxu0 0.0
        %4071 = vmatprep.subr.mxu0 0.0
        %4072 = vmatpush1.msra.mxu0 0.0
        %4073 = vmatprep.subr.mxu0 0.0
        %4074 = vmatpush1.msra.mxu0 0.0
        %4075 = vmatprep.subr.mxu0 0.0
        %4076 = vmatpush1.msra.mxu0 0.0
        %4077 = vmatprep.subr.mxu0 0.0
        %4078 = vmatpush1.msra.mxu0 0.0
        %4079 = vmatprep.subr.mxu0 0.0
        %4080 = vmatpush1.msra.mxu0 0.0
        %4081 = vmatprep.subr.mxu0 0.0
        %4082 = vmatpush1.msra.mxu0 0.0
        %4083 = vmatprep.subr.mxu0 0.0
        %4084 = vmatpush1.msra.mxu0 0.0
        %4085 = vmatprep.subr.mxu0 0.0
        %4086 = vmatpush1.msra.mxu0 0.0
        %4087 = vmatprep.subr.mxu0 0.0
        %4088 = vmatpush1.msra.mxu0 0.0
        %4089 = vmatprep.subr.mxu0 0.0
        %4090 = vmatpush1.msra.mxu0 0.0
        %4091 = vmatprep.subr.mxu0 0.0
        %4092 = vmatpush1.msra.mxu0 0.0
        %4093 = vmatprep.subr.mxu0 0.0
        %4094 = vmatpush1.msra.mxu0 0.0
        %4095 = vmatprep.subr.mxu0 0.0
        %4096 = vmatpush1.msra.mxu0 0.0
        %4097 = vmatprep.subr.mxu0 0.0
        %4098 = vmatpush1.msra.mxu0 0.0
        %4099 = vmatprep.subr.mxu0 0.0
        %4100 = vmatpush1.msra.mxu0 0.0
        %4101 = vmatprep.subr.mxu0 0.0
        %4102 = vmatpush1.msra.mxu0 0.0
        %4103 = vmatprep.subr.mxu0 0.0
        %4104 = vmatpush1.msra.mxu0 0.0
        %4105 = vmatprep.subr.mxu0 0.0
        %4106 = vmatpush1.msra.mxu0 0.0
        %4107 = vmatprep.subr.mxu0 0.0
        %4108 = vmatpush1.msra.mxu0 0.0
        %4109 = vmatprep.subr.mxu0 0.0
        %4110 = vmatpush1.msra.mxu0 0.0
        %4111 = vmatprep.subr.mxu0 0.0
        %4112 = vmatpush1.msra.mxu0 0.0
        %4113 = vmatprep.subr.mxu0 0.0
        %4114 = vmatpush1.msra.mxu0 0.0
        %4115 = vmatprep.subr.mxu0 0.0
        %4116 = vmatpush1.msra.mxu0 0.0
        %4117 = vmatprep.mubr.f32.mxu0 0.0
        %4118 = vmatmul.mubr.f32.gmra.mrb[0].mxu0 %v4006
        %v4119 = vpop.f32.mrb[0].mxu0
        %v4120 = vadd.f32 0.0, %v4119
        %v4121 = vpop.f32.mrb[0].mxu0
        %4122 = vmatprep.mubr.f32.mxu0 0.0
        %4123 = vmatmul.mubr.f32.gmra.mrb[0].mxu0 %v4009
        %v4124 = vpop.f32.mrb[0].mxu0
        %v4125 = vadd.f32 0.0, %v4124
        %v4126 = vpop.f32.mrb[0].mxu0
        %4127 = vmatprep.mubr.f32.mxu0 0.0
        %4128 = vmatmul.mubr.f32.gmra.mrb[0].mxu0 %v4012
        %v4129 = vpop.f32.mrb[0].mxu0
        %v4130 = vadd.f32 0.0, %v4129
        %v4131 = vpop.f32.mrb[0].mxu0
        %4132 = vmatprep.mubr.f32.mxu0 0.0
        %4133 = vmatmul.mubr.f32.gmra.mrb[0].mxu0 %v4015
        %v4134 = vpop.f32.mrb[0].mxu0
        %v4135 = vadd.f32 0.0, %v4134
        %v4136 = vpop.f32.mrb[0].mxu0
        %4137 = vmatprep.mubr.f32.mxu0 0.0
        %4138 = vmatmul.mubr.f32.gmra.mrb[0].mxu0 %v4018
        %v4139 = vpop.f32.mrb[0].mxu0
        %v4140 = vadd.f32 0.0, %v4139
        %v4141 = vpop.f32.mrb[0].mxu0
        %4142 = vmatprep.mubr.f32.mxu0 0.0
        %4143 = vmatmul.mubr.f32.gmra.mrb[0].mxu0 %v4021
        %v4144 = vpop.f32.mrb[0].mxu0
        %v4145 = vadd.f32 0.0, %v4144
        %v4146 = vpop.f32.mrb[0].mxu0
        %4147 = vmatprep.mubr.f32.mxu0 0.0
        %4148 = vmatmul.mubr.f32.gmra.mrb[0].mxu0 %v4024
        %v4149 = vpop.f32.mrb[0].mxu0
        %v4150 = vadd.f32 0.0, %v4149
        %v4151 = vpop.f32.mrb[0].mxu0
        %4152 = vmatprep.mubr.f32.mxu0 0.0
        %4153 = vmatmul.mubr.f32.gmra.mrb[0].mxu0 %v4027
        %v4154 = vpop.f32.mrb[0].mxu0
        %v4155 = vadd.f32 0.0, %v4154
        %v4156 = vpop.f32.mrb[0].mxu0
        %4157 = vmatprep.mubr.f32.mxu0 0.0
        %4158 = vmatmul.mubr.f32.gmra.mrb[0].mxu0 %v4030
        %v4159 = vpop.f32.mrb[0].mxu0
        %v4160 = vadd.f32 0.0, %v4159
        %v4161 = vpop.f32.mrb[0].mxu0
        %4162 = vmatprep.mubr.f32.mxu0 0.0
        %4163 = vmatmul.mubr.f32.gmra.mrb[0].mxu0 %v4033
        %v4164 = vpop.f32.mrb[0].mxu0
        %v4165 = vadd.f32 0.0, %v4164
        %v4166 = vpop.f32.mrb[0].mxu0
        %4167 = vmatprep.mubr.f32.mxu0 0.0
        %4168 = vmatmul.mubr.f32.gmra.mrb[0].mxu0 %v4036
        %v4169 = vpop.f32.mrb[0].mxu0
        %v4170 = vadd.f32 0.0, %v4169
        %v4171 = vpop.f32.mrb[0].mxu0
        %4172 = vmatprep.mubr.f32.mxu0 0.0
        %4173 = vmatmul.mubr.f32.gmra.mrb[0].mxu0 %v4039
        %v4174 = vpop.f32.mrb[0].mxu0
        %v4175 = vadd.f32 0.0, %v4174
        %v4176 = vpop.f32.mrb[0].mxu0
        %4177 = vmatprep.mubr.f32.mxu0 0.0
        %4178 = vmatmul.mubr.f32.gmra.mrb[0].mxu0 %v4042
        %v4179 = vpop.f32.mrb[0].mxu0
        %v4180 = vadd.f32 0.0, %v4179
        %v4181 = vpop.f32.mrb[0].mxu0
        %4182 = vmatprep.mubr.f32.mxu0 0.0
        %4183 = vmatmul.mubr.f32.gmra.mrb[0].mxu0 %v4045
        %v4184 = vpop.f32.mrb[0].mxu0
        %v4185 = vadd.f32 0.0, %v4184
        %v4186 = vpop.f32.mrb[0].mxu0
        %4187 = vmatprep.mubr.f32.mxu0 0.0
        %4188 = vmatmul.mubr.f32.gmra.mrb[0].mxu0 %v4048
        %v4189 = vpop.f32.mrb[0].mxu0
        %v4190 = vadd.f32 0.0, %v4189
        %v4191 = vpop.f32.mrb[0].mxu0
        %4192 = vmatprep.mubr.f32.mxu0 0.0
        %4193 = vmatmul.mubr.f32.gmra.mrb[0].mxu0 %v4051
        %v4194 = vpop.f32.mrb[0].mxu0
        %v4195 = vadd.f32 0.0, %v4194
        %v4196 = vpop.f32.mrb[0].mxu0
        %4197 = vdwg.mxu0
        %v4198 = vmul.f32 %v4120, %v1459
        %v4199 = vmul.f32 %v4125, %v1463
        %v4200 = vmul.f32 %v4130, %v1469
        %v4201 = vmul.f32 %v4135, %v1473
        %v4202 = vmul.f32 %v4140, %v1479
        %v4203 = vmul.f32 %v4145, %v1483
        %v4204 = vmul.f32 %v4150, %v1489
        %v4205 = vmul.f32 %v4155, %v1493
        %v4206 = vmul.f32 %v4160, %v1499
        %v4207 = vmul.f32 %v4165, %v1503
        %v4208 = vmul.f32 %v4170, %v1509
        %v4209 = vmul.f32 %v4175, %v1513
        %v4210 = vmul.f32 %v4180, %v1519
        %v4211 = vmul.f32 %v4185, %v1523
        %v4212 = vmul.f32 %v4190, %v1529
        %v4213 = vmul.f32 %v4195, %v1533
        %v4214 = vadd.f32 %v3973, %v4198
        %v4215 = vadd.f32 %v3974, %v4199
        %v4216 = vadd.f32 %v3975, %v4200
        %v4217 = vadd.f32 %v3976, %v4201
        %v4218 = vadd.f32 %v3977, %v4202
        %v4219 = vadd.f32 %v3978, %v4203
        %v4220 = vadd.f32 %v3979, %v4204
        %v4221 = vadd.f32 %v3980, %v4205
        %v4222 = vadd.f32 %v3981, %v4206
        %v4223 = vadd.f32 %v3982, %v4207
        %v4224 = vadd.f32 %v3983, %v4208
        %v4225 = vadd.f32 %v3984, %v4209
        %v4226 = vadd.f32 %v3985, %v4210
        %v4227 = vadd.f32 %v3986, %v4211
        %v4228 = vadd.f32 %v3987, %v4212
        %v4229 = vadd.f32 %v3988, %v4213
        %v4230 = vmul.f32 %v3166, %v3261
        %v4231 = vmul.f32 %v3168, %v3262
        %v4232 = vmul.f32 %v3170, %v3263
        %v4233 = vmul.f32 %v3172, %v3264
        %v4234 = vmul.f32 %v3174, %v3265
        %v4235 = vmul.f32 %v3176, %v3266
        %v4236 = vmul.f32 %v3178, %v3267
        %v4237 = vmul.f32 %v3180, %v3268
        %v4238 = vmul.f32 %v3182, %v3269
        %v4239 = vmul.f32 %v3184, %v3270
        %v4240 = vmul.f32 %v3186, %v3271
        %v4241 = vmul.f32 %v3188, %v3272
        %v4242 = vmul.f32 %v3190, %v3273
        %v4243 = vmul.f32 %v3192, %v3274
        %v4244 = vmul.f32 %v3194, %v3275
        %v4245 = vmul.f32 %v3196, %v3276
        %v4247 = vsel %vm3293, %v4230, 0
        %v4250 = vsel %vm3293, %v4231, 0
        %v4253 = vsel %vm3293, %v4232, 0
        %v4256 = vsel %vm3293, %v4233, 0
        %v4259 = vsel %vm3293, %v4234, 0
        %v4262 = vsel %vm3293, %v4235, 0
        %v4265 = vsel %vm3293, %v4236, 0
        %v4268 = vsel %vm3293, %v4237, 0
        %v4271 = vsel %vm3293, %v4238, 0
        %v4274 = vsel %vm3293, %v4239, 0
        %v4277 = vsel %vm3293, %v4240, 0
        %v4280 = vsel %vm3293, %v4241, 0
        %v4283 = vsel %vm3293, %v4242, 0
        %v4286 = vsel %vm3293, %v4243, 0
        %v4289 = vsel %vm3293, %v4244, 0
        %v4292 = vsel %vm3293, %v4245, 0
        %4294 = vmatprep.subr.mxu0 0.0
        %4295 = vmatpush1.msra.mxu0 %v3344
        %4296 = vmatprep.subr.mxu0 0.0
        %4297 = vmatpush1.msra.mxu0 0.0
        %4298 = vmatprep.subr.mxu0 0.0
        %4299 = vmatpush1.msra.mxu0 0.0
        %4300 = vmatprep.subr.mxu0 0.0
        %4301 = vmatpush1.msra.mxu0 0.0
        %4302 = vmatprep.subr.mxu0 0.0
        %4303 = vmatpush1.msra.mxu0 0.0
        %4304 = vmatprep.subr.mxu0 0.0
        %4305 = vmatpush1.msra.mxu0 0.0
        %4306 = vmatprep.subr.mxu0 0.0
        %4307 = vmatpush1.msra.mxu0 0.0
        %4308 = vmatprep.subr.mxu0 0.0
        %4309 = vmatpush1.msra.mxu0 0.0
        %4310 = vmatprep.subr.mxu0 0.0
        %4311 = vmatpush1.msra.mxu0 0.0
        %4312 = vmatprep.subr.mxu0 0.0
        %4313 = vmatpush1.msra.mxu0 0.0
        %4314 = vmatprep.subr.mxu0 0.0
        %4315 = vmatpush1.msra.mxu0 0.0
        %4316 = vmatprep.subr.mxu0 0.0
        %4317 = vmatpush1.msra.mxu0 0.0
        %4318 = vmatprep.subr.mxu0 0.0
        %4319 = vmatpush1.msra.mxu0 0.0
        %4320 = vmatprep.subr.mxu0 0.0
        %4321 = vmatpush1.msra.mxu0 0.0
        %4322 = vmatprep.subr.mxu0 0.0
        %4323 = vmatpush1.msra.mxu0 0.0
        %4324 = vmatprep.subr.mxu0 0.0
        %4325 = vmatpush1.msra.mxu0 0.0
        %4326 = vmatprep.subr.mxu0 0.0
        %4327 = vmatpush1.msra.mxu0 0.0
        %4328 = vmatprep.subr.mxu0 0.0
        %4329 = vmatpush1.msra.mxu0 0.0
        %4330 = vmatprep.subr.mxu0 0.0
        %4331 = vmatpush1.msra.mxu0 0.0
        %4332 = vmatprep.subr.mxu0 0.0
        %4333 = vmatpush1.msra.mxu0 0.0
        %4334 = vmatprep.subr.mxu0 0.0
        %4335 = vmatpush1.msra.mxu0 0.0
        %4336 = vmatprep.subr.mxu0 0.0
        %4337 = vmatpush1.msra.mxu0 0.0
        %4338 = vmatprep.subr.mxu0 0.0
        %4339 = vmatpush1.msra.mxu0 0.0
        %4340 = vmatprep.subr.mxu0 0.0
        %4341 = vmatpush1.msra.mxu0 0.0
        %4342 = vmatprep.subr.mxu0 0.0
        %4343 = vmatpush1.msra.mxu0 0.0
        %4344 = vmatprep.subr.mxu0 0.0
        %4345 = vmatpush1.msra.mxu0 0.0
        %4346 = vmatprep.subr.mxu0 0.0
        %4347 = vmatpush1.msra.mxu0 0.0
        %4348 = vmatprep.subr.mxu0 0.0
        %4349 = vmatpush1.msra.mxu0 0.0
        %4350 = vmatprep.subr.mxu0 0.0
        %4351 = vmatpush1.msra.mxu0 0.0
        %4352 = vmatprep.subr.mxu0 0.0
        %4353 = vmatpush1.msra.mxu0 0.0
        %4354 = vmatprep.subr.mxu0 0.0
        %4355 = vmatpush1.msra.mxu0 0.0
        %4356 = vmatprep.subr.mxu0 0.0
        %4357 = vmatpush1.msra.mxu0 0.0
        %4358 = vmatprep.mubr.f32.mxu0 0.0
        %4359 = vmatmul.mubr.f32.gmra.mrb[0].mxu0 %v4247
        %v4360 = vpop.f32.mrb[0].mxu0
        %v4361 = vadd.f32 0.0, %v4360
        %v4362 = vpop.f32.mrb[0].mxu0
        %4363 = vmatprep.mubr.f32.mxu0 0.0
        %4364 = vmatmul.mubr.f32.gmra.mrb[0].mxu0 %v4250
        %v4365 = vpop.f32.mrb[0].mxu0
        %v4366 = vadd.f32 0.0, %v4365
        %v4367 = vpop.f32.mrb[0].mxu0
        %4368 = vmatprep.mubr.f32.mxu0 0.0
        %4369 = vmatmul.mubr.f32.gmra.mrb[0].mxu0 %v4253
        %v4370 = vpop.f32.mrb[0].mxu0
        %v4371 = vadd.f32 0.0, %v4370
        %v4372 = vpop.f32.mrb[0].mxu0
        %4373 = vmatprep.mubr.f32.mxu0 0.0
        %4374 = vmatmul.mubr.f32.gmra.mrb[0].mxu0 %v4256
        %v4375 = vpop.f32.mrb[0].mxu0
        %v4376 = vadd.f32 0.0, %v4375
        %v4377 = vpop.f32.mrb[0].mxu0
        %4378 = vmatprep.mubr.f32.mxu0 0.0
        %4379 = vmatmul.mubr.f32.gmra.mrb[0].mxu0 %v4259
        %v4380 = vpop.f32.mrb[0].mxu0
        %v4381 = vadd.f32 0.0, %v4380
        %v4382 = vpop.f32.mrb[0].mxu0
        %4383 = vmatprep.mubr.f32.mxu0 0.0
        %4384 = vmatmul.mubr.f32.gmra.mrb[0].mxu0 %v4262
        %v4385 = vpop.f32.mrb[0].mxu0
        %v4386 = vadd.f32 0.0, %v4385
        %v4387 = vpop.f32.mrb[0].mxu0
        %4388 = vmatprep.mubr.f32.mxu0 0.0
        %4389 = vmatmul.mubr.f32.gmra.mrb[0].mxu0 %v4265
        %v4390 = vpop.f32.mrb[0].mxu0
        %v4391 = vadd.f32 0.0, %v4390
        %v4392 = vpop.f32.mrb[0].mxu0
        %4393 = vmatprep.mubr.f32.mxu0 0.0
        %4394 = vmatmul.mubr.f32.gmra.mrb[0].mxu0 %v4268
        %v4395 = vpop.f32.mrb[0].mxu0
        %v4396 = vadd.f32 0.0, %v4395
        %v4397 = vpop.f32.mrb[0].mxu0
        %4398 = vmatprep.mubr.f32.mxu0 0.0
        %4399 = vmatmul.mubr.f32.gmra.mrb[0].mxu0 %v4271
        %v4400 = vpop.f32.mrb[0].mxu0
        %v4401 = vadd.f32 0.0, %v4400
        %v4402 = vpop.f32.mrb[0].mxu0
        %4403 = vmatprep.mubr.f32.mxu0 0.0
        %4404 = vmatmul.mubr.f32.gmra.mrb[0].mxu0 %v4274
        %v4405 = vpop.f32.mrb[0].mxu0
        %v4406 = vadd.f32 0.0, %v4405
        %v4407 = vpop.f32.mrb[0].mxu0
        %4408 = vmatprep.mubr.f32.mxu0 0.0
        %4409 = vmatmul.mubr.f32.gmra.mrb[0].mxu0 %v4277
        %v4410 = vpop.f32.mrb[0].mxu0
        %v4411 = vadd.f32 0.0, %v4410
        %v4412 = vpop.f32.mrb[0].mxu0
        %4413 = vmatprep.mubr.f32.mxu0 0.0
        %4414 = vmatmul.mubr.f32.gmra.mrb[0].mxu0 %v4280
        %v4415 = vpop.f32.mrb[0].mxu0
        %v4416 = vadd.f32 0.0, %v4415
        %v4417 = vpop.f32.mrb[0].mxu0
        %4418 = vmatprep.mubr.f32.mxu0 0.0
        %4419 = vmatmul.mubr.f32.gmra.mrb[0].mxu0 %v4283
        %v4420 = vpop.f32.mrb[0].mxu0
        %v4421 = vadd.f32 0.0, %v4420
        %v4422 = vpop.f32.mrb[0].mxu0
        %4423 = vmatprep.mubr.f32.mxu0 0.0
        %4424 = vmatmul.mubr.f32.gmra.mrb[0].mxu0 %v4286
        %v4425 = vpop.f32.mrb[0].mxu0
        %v4426 = vadd.f32 0.0, %v4425
        %v4427 = vpop.f32.mrb[0].mxu0
        %4428 = vmatprep.mubr.f32.mxu0 0.0
        %4429 = vmatmul.mubr.f32.gmra.mrb[0].mxu0 %v4289
        %v4430 = vpop.f32.mrb[0].mxu0
        %v4431 = vadd.f32 0.0, %v4430
        %v4432 = vpop.f32.mrb[0].mxu0
        %4433 = vmatprep.mubr.f32.mxu0 0.0
        %4434 = vmatmul.mubr.f32.gmra.mrb[0].mxu0 %v4292
        %v4435 = vpop.f32.mrb[0].mxu0
        %v4436 = vadd.f32 0.0, %v4435
        %v4437 = vpop.f32.mrb[0].mxu0
        %4438 = vdwg.mxu0
        %v4439 = vmul.f32 %v4361, %v1539
        %v4440 = vmul.f32 %v4366, %v1543
        %v4441 = vmul.f32 %v4371, %v1549
        %v4442 = vmul.f32 %v4376, %v1553
        %v4443 = vmul.f32 %v4381, %v1559
        %v4444 = vmul.f32 %v4386, %v1563
        %v4445 = vmul.f32 %v4391, %v1569
        %v4446 = vmul.f32 %v4396, %v1573
        %v4447 = vmul.f32 %v4401, %v1579
        %v4448 = vmul.f32 %v4406, %v1583
        %v4449 = vmul.f32 %v4411, %v1589
        %v4450 = vmul.f32 %v4416, %v1593
        %v4451 = vmul.f32 %v4421, %v1599
        %v4452 = vmul.f32 %v4426, %v1603
        %v4453 = vmul.f32 %v4431, %v1609
        %v4454 = vmul.f32 %v4436, %v1613
        %v4455 = vadd.f32 %v4214, %v4439
        %v4456 = vadd.f32 %v4215, %v4440
        %v4457 = vadd.f32 %v4216, %v4441
        %v4458 = vadd.f32 %v4217, %v4442
        %v4459 = vadd.f32 %v4218, %v4443
        %v4460 = vadd.f32 %v4219, %v4444
        %v4461 = vadd.f32 %v4220, %v4445
        %v4462 = vadd.f32 %v4221, %v4446
        %v4463 = vadd.f32 %v4222, %v4447
        %v4464 = vadd.f32 %v4223, %v4448
        %v4465 = vadd.f32 %v4224, %v4449
        %v4466 = vadd.f32 %v4225, %v4450
        %v4467 = vadd.f32 %v4226, %v4451
        %v4468 = vadd.f32 %v4227, %v4452
        %v4469 = vadd.f32 %v4228, %v4453
        %v4470 = vadd.f32 %v4229, %v4454
        %v4471 = vld [vmem:[%s5] sm:$0xff]
        %v4472 = vld [vmem:[%s5 + $0x10] sm:$0xff]
        %v4473 = vld [vmem:[%s5 + $0x20] sm:$0xff]
        %v4474 = vld [vmem:[%s5 + $0x30] sm:$0xff]
        %v4475 = vld [vmem:[%s5 + $0x40] sm:$0xff]
        %v4476 = vld [vmem:[%s5 + $0x50] sm:$0xff]
        %v4477 = vld [vmem:[%s5 + $0x60] sm:$0xff]
        %v4478 = vld [vmem:[%s5 + $0x70] sm:$0xff]
        %v4479 = vld [vmem:[%s5 + $0x8] sm:$0xff]
        %v4480 = vld [vmem:[%s5 + $0x18] sm:$0xff]
        %v4481 = vld [vmem:[%s5 + $0x28] sm:$0xff]
        %v4482 = vld [vmem:[%s5 + $0x38] sm:$0xff]
        %v4483 = vld [vmem:[%s5 + $0x48] sm:$0xff]
        %v4484 = vld [vmem:[%s5 + $0x58] sm:$0xff]
        %v4485 = vld [vmem:[%s5 + $0x68] sm:$0xff]
        %v4486 = vld [vmem:[%s5 + $0x78] sm:$0xff]
        %v4487 = vld [vmem:[%s6] sm:$0x1]
        %v4488 = vld [vmem:[%s6 + $0x1] sm:$0x1]
        %v4489 = vld [vmem:[%s7] sm:$0x1]
        %v4490 = vld [vmem:[%s7 + $0x1] sm:$0x1]
        %v4492 = vlaneseq
        %v4493 = vshrl.u32 %v4492, 7
        %v4494 = vsub.s32 0, %v4493
        %v4495 = vrot.slane %v4487, %v4494
        %v4498 = vsel %vm1061, %v4455, 0
        %v4501 = vsel %vm1061, %v4456, 0
        %v4504 = vsel %vm1061, %v4457, 0
        %v4507 = vsel %vm1061, %v4458, 0
        %v4510 = vsel %vm1061, %v4459, 0
        %v4513 = vsel %vm1061, %v4460, 0
        %v4516 = vsel %vm1061, %v4461, 0
        %v4519 = vsel %vm1061, %v4462, 0
        %v4522 = vsel %vm1061, %v4463, 0
        %v4525 = vsel %vm1061, %v4464, 0
        %v4528 = vsel %vm1061, %v4465, 0
        %v4531 = vsel %vm1061, %v4466, 0
        %v4534 = vsel %vm1061, %v4467, 0
        %v4537 = vsel %vm1061, %v4468, 0
        %v4540 = vsel %vm1061, %v4469, 0
        %v4543 = vsel %vm1061, %v4470, 0
        %4545 = vmatprep.subr.mxu0 0.0
        %4546 = vmatpush1.msra.mxu0 %v4471
        %4547 = vmatprep.subr.mxu0 0.0
        %4548 = vmatpush1.msra.mxu0 %v4472
        %4549 = vmatprep.subr.mxu0 0.0
        %4550 = vmatpush1.msra.mxu0 %v4473
        %4551 = vmatprep.subr.mxu0 0.0
        %4552 = vmatpush1.msra.mxu0 %v4474
        %4553 = vmatprep.subr.mxu0 0.0
        %4554 = vmatpush1.msra.mxu0 %v4475
        %4555 = vmatprep.subr.mxu0 0.0
        %4556 = vmatpush1.msra.mxu0 %v4476
        %4557 = vmatprep.subr.mxu0 0.0
        %4558 = vmatpush1.msra.mxu0 %v4477
        %4559 = vmatprep.subr.mxu0 0.0
        %4560 = vmatpush1.msra.mxu0 %v4478
        %4561 = vmatprep.subr.mxu0 0.0
        %4562 = vmatpush1.msra.mxu0 0.0
        %4563 = vmatprep.subr.mxu0 0.0
        %4564 = vmatpush1.msra.mxu0 0.0
        %4565 = vmatprep.subr.mxu0 0.0
        %4566 = vmatpush1.msra.mxu0 0.0
        %4567 = vmatprep.subr.mxu0 0.0
        %4568 = vmatpush1.msra.mxu0 0.0
        %4569 = vmatprep.subr.mxu0 0.0
        %4570 = vmatpush1.msra.mxu0 0.0
        %4571 = vmatprep.subr.mxu0 0.0
        %4572 = vmatpush1.msra.mxu0 0.0
        %4573 = vmatprep.subr.mxu0 0.0
        %4574 = vmatpush1.msra.mxu0 0.0
        %4575 = vmatprep.subr.mxu0 0.0
        %4576 = vmatpush1.msra.mxu0 0.0
        %4577 = vmatprep.subr.mxu0 0.0
        %4578 = vmatpush1.msra.mxu0 0.0
        %4579 = vmatprep.subr.mxu0 0.0
        %4580 = vmatpush1.msra.mxu0 0.0
        %4581 = vmatprep.subr.mxu0 0.0
        %4582 = vmatpush1.msra.mxu0 0.0
        %4583 = vmatprep.subr.mxu0 0.0
        %4584 = vmatpush1.msra.mxu0 0.0
        %4585 = vmatprep.subr.mxu0 0.0
        %4586 = vmatpush1.msra.mxu0 0.0
        %4587 = vmatprep.subr.mxu0 0.0
        %4588 = vmatpush1.msra.mxu0 0.0
        %4589 = vmatprep.subr.mxu0 0.0
        %4590 = vmatpush1.msra.mxu0 0.0
        %4591 = vmatprep.subr.mxu0 0.0
        %4592 = vmatpush1.msra.mxu0 0.0
        %4593 = vmatprep.subr.mxu0 0.0
        %4594 = vmatpush1.msra.mxu0 0.0
        %4595 = vmatprep.subr.mxu0 0.0
        %4596 = vmatpush1.msra.mxu0 0.0
        %4597 = vmatprep.subr.mxu0 0.0
        %4598 = vmatpush1.msra.mxu0 0.0
        %4599 = vmatprep.subr.mxu0 0.0
        %4600 = vmatpush1.msra.mxu0 0.0
        %4601 = vmatprep.subr.mxu0 0.0
        %4602 = vmatpush1.msra.mxu0 0.0
        %4603 = vmatprep.subr.mxu0 0.0
        %4604 = vmatpush1.msra.mxu0 0.0
        %4605 = vmatprep.subr.mxu0 0.0
        %4606 = vmatpush1.msra.mxu0 0.0
        %4607 = vmatprep.subr.mxu0 0.0
        %4608 = vmatpush1.msra.mxu0 0.0
        %4609 = vmatprep.mubr.f32.mxu0 0.0
        %4610 = vmatmul.mubr.f32.gmra.mrb[0].mxu0 %v4498
        %v4611 = vpop.f32.mrb[0].mxu0
        %v4612 = vadd.f32 %v4495, %v4611
        %v4613 = vpop.f32.mrb[0].mxu0
        %4614 = vmatprep.mubr.f32.mxu0 0.0
        %4615 = vmatmul.mubr.f32.gmra.mrb[0].mxu0 %v4501
        %v4616 = vpop.f32.mrb[0].mxu0
        %v4617 = vadd.f32 %v4495, %v4616
        %v4618 = vpop.f32.mrb[0].mxu0
        %4619 = vmatprep.mubr.f32.mxu0 0.0
        %4620 = vmatmul.mubr.f32.gmra.mrb[0].mxu0 %v4504
        %v4621 = vpop.f32.mrb[0].mxu0
        %v4622 = vadd.f32 %v4495, %v4621
        %v4623 = vpop.f32.mrb[0].mxu0
        %4624 = vmatprep.mubr.f32.mxu0 0.0
        %4625 = vmatmul.mubr.f32.gmra.mrb[0].mxu0 %v4507
        %v4626 = vpop.f32.mrb[0].mxu0
        %v4627 = vadd.f32 %v4495, %v4626
        %v4628 = vpop.f32.mrb[0].mxu0
        %4629 = vmatprep.mubr.f32.mxu0 0.0
        %4630 = vmatmul.mubr.f32.gmra.mrb[0].mxu0 %v4510
        %v4631 = vpop.f32.mrb[0].mxu0
        %v4632 = vadd.f32 %v4495, %v4631
        %v4633 = vpop.f32.mrb[0].mxu0
        %4634 = vmatprep.mubr.f32.mxu0 0.0
        %4635 = vmatmul.mubr.f32.gmra.mrb[0].mxu0 %v4513
        %v4636 = vpop.f32.mrb[0].mxu0
        %v4637 = vadd.f32 %v4495, %v4636
        %v4638 = vpop.f32.mrb[0].mxu0
        %4639 = vmatprep.mubr.f32.mxu0 0.0
        %4640 = vmatmul.mubr.f32.gmra.mrb[0].mxu0 %v4516
        %v4641 = vpop.f32.mrb[0].mxu0
        %v4642 = vadd.f32 %v4495, %v4641
        %v4643 = vpop.f32.mrb[0].mxu0
        %4644 = vmatprep.mubr.f32.mxu0 0.0
        %4645 = vmatmul.mubr.f32.gmra.mrb[0].mxu0 %v4519
        %v4646 = vpop.f32.mrb[0].mxu0
        %v4647 = vadd.f32 %v4495, %v4646
        %v4648 = vpop.f32.mrb[0].mxu0
        %4649 = vmatprep.mubr.f32.mxu0 0.0
        %4650 = vmatmul.mubr.f32.gmra.mrb[0].mxu0 %v4522
        %v4651 = vpop.f32.mrb[0].mxu0
        %v4652 = vadd.f32 %v4495, %v4651
        %v4653 = vpop.f32.mrb[0].mxu0
        %4654 = vmatprep.mubr.f32.mxu0 0.0
        %4655 = vmatmul.mubr.f32.gmra.mrb[0].mxu0 %v4525
        %v4656 = vpop.f32.mrb[0].mxu0
        %v4657 = vadd.f32 %v4495, %v4656
        %v4658 = vpop.f32.mrb[0].mxu0
        %4659 = vmatprep.mubr.f32.mxu0 0.0
        %4660 = vmatmul.mubr.f32.gmra.mrb[0].mxu0 %v4528
        %v4661 = vpop.f32.mrb[0].mxu0
        %v4662 = vadd.f32 %v4495, %v4661
        %v4663 = vpop.f32.mrb[0].mxu0
        %4664 = vmatprep.mubr.f32.mxu0 0.0
        %4665 = vmatmul.mubr.f32.gmra.mrb[0].mxu0 %v4531
        %v4666 = vpop.f32.mrb[0].mxu0
        %v4667 = vadd.f32 %v4495, %v4666
        %v4668 = vpop.f32.mrb[0].mxu0
        %4669 = vmatprep.mubr.f32.mxu0 0.0
        %4670 = vmatmul.mubr.f32.gmra.mrb[0].mxu0 %v4534
        %v4671 = vpop.f32.mrb[0].mxu0
        %v4672 = vadd.f32 %v4495, %v4671
        %v4673 = vpop.f32.mrb[0].mxu0
        %4674 = vmatprep.mubr.f32.mxu0 0.0
        %4675 = vmatmul.mubr.f32.gmra.mrb[0].mxu0 %v4537
        %v4676 = vpop.f32.mrb[0].mxu0
        %v4677 = vadd.f32 %v4495, %v4676
        %v4678 = vpop.f32.mrb[0].mxu0
        %4679 = vmatprep.mubr.f32.mxu0 0.0
        %4680 = vmatmul.mubr.f32.gmra.mrb[0].mxu0 %v4540
        %v4681 = vpop.f32.mrb[0].mxu0
        %v4682 = vadd.f32 %v4495, %v4681
        %v4683 = vpop.f32.mrb[0].mxu0
        %4684 = vmatprep.mubr.f32.mxu0 0.0
        %4685 = vmatmul.mubr.f32.gmra.mrb[0].mxu0 %v4543
        %v4686 = vpop.f32.mrb[0].mxu0
        %v4687 = vadd.f32 %v4495, %v4686
        %v4688 = vpop.f32.mrb[0].mxu0
        %4689 = vdwg.mxu0
        %s4690 = scalar_lea.vmem %s678, 128 [#allocation2]
        %v4691 = vld [vmem:[%s4690] sm:$0xf]
        %v4692 = vld [vmem:[%s4690 + $0x4] sm:$0xf]
        %v4693 = vld [vmem:[%s4690 + $0x8] sm:$0xf]
        %v4694 = vld [vmem:[%s4690 + $0xc] sm:$0xf]
        %v4695 = vld [vmem:[%s4690 + $0x10] sm:$0xf]
        %v4696 = vld [vmem:[%s4690 + $0x14] sm:$0xf]
        %v4697 = vld [vmem:[%s4690 + $0x18] sm:$0xf]
        %v4698 = vld [vmem:[%s4690 + $0x1c] sm:$0xf]
        %v4699 = vld [vmem:[%s4690 + $0x20] sm:$0xf]
        %v4700 = vld [vmem:[%s4690 + $0x24] sm:$0xf]
        %v4701 = vld [vmem:[%s4690 + $0x28] sm:$0xf]
        %v4702 = vld [vmem:[%s4690 + $0x2c] sm:$0xf]
        %v4703 = vld [vmem:[%s4690 + $0x30] sm:$0xf]
        %v4704 = vld [vmem:[%s4690 + $0x34] sm:$0xf]
        %v4705 = vld [vmem:[%s4690 + $0x38] sm:$0xf]
        %v4706 = vld [vmem:[%s4690 + $0x3c] sm:$0xf]
        %v4707 = vunpack.c.l.bf16 %v4691
        %v4708 = vunpack.c.l.bf16 %v4692
        %v4709 = vunpack.c.l.bf16 %v4693
        %v4710 = vunpack.c.l.bf16 %v4694
        %v4711 = vunpack.c.l.bf16 %v4695
        %v4712 = vunpack.c.l.bf16 %v4696
        %v4713 = vunpack.c.l.bf16 %v4697
        %v4714 = vunpack.c.l.bf16 %v4698
        %v4715 = vunpack.c.l.bf16 %v4699
        %v4716 = vunpack.c.l.bf16 %v4700
        %v4717 = vunpack.c.l.bf16 %v4701
        %v4718 = vunpack.c.l.bf16 %v4702
        %v4719 = vunpack.c.l.bf16 %v4703
        %v4720 = vunpack.c.l.bf16 %v4704
        %v4721 = vunpack.c.l.bf16 %v4705
        %v4722 = vunpack.c.l.bf16 %v4706
        %v4723 = vadd.f32 %v4707, %v4612
        %v4724 = vadd.f32 %v4708, %v4617
        %v4725 = vadd.f32 %v4709, %v4622
        %v4726 = vadd.f32 %v4710, %v4627
        %v4727 = vadd.f32 %v4711, %v4632
        %v4728 = vadd.f32 %v4712, %v4637
        %v4729 = vadd.f32 %v4713, %v4642
        %v4730 = vadd.f32 %v4714, %v4647
        %v4731 = vadd.f32 %v4715, %v4652
        %v4732 = vadd.f32 %v4716, %v4657
        %v4733 = vadd.f32 %v4717, %v4662
        %v4734 = vadd.f32 %v4718, %v4667
        %v4735 = vadd.f32 %v4719, %v4672
        %v4736 = vadd.f32 %v4720, %v4677
        %v4737 = vadd.f32 %v4721, %v4682
        %v4738 = vadd.f32 %v4722, %v4687
        %v4739 = vsel %vm1061, %v4723, 0.0
        %4740 = vadd.xlane.f32.xlu0 %v4739
        %v4741 = vpop.xlane.xlu0 %4740
        %v4742 = vsel %vm1061, %v4724, 0.0
        %4743 = vadd.xlane.f32.xlu0 %v4742
        %v4744 = vpop.xlane.xlu0 %4743
        %v4745 = vsel %vm1061, %v4725, 0.0
        %4746 = vadd.xlane.f32.xlu0 %v4745
        %v4747 = vpop.xlane.xlu0 %4746
        %v4748 = vsel %vm1061, %v4726, 0.0
        %4749 = vadd.xlane.f32.xlu0 %v4748
        %v4750 = vpop.xlane.xlu0 %4749
        %v4751 = vsel %vm1061, %v4727, 0.0
        %4752 = vadd.xlane.f32.xlu0 %v4751
        %v4753 = vpop.xlane.xlu0 %4752
        %v4754 = vsel %vm1061, %v4728, 0.0
        %4755 = vadd.xlane.f32.xlu0 %v4754
        %v4756 = vpop.xlane.xlu0 %4755
        %v4757 = vsel %vm1061, %v4729, 0.0
        %4758 = vadd.xlane.f32.xlu0 %v4757
        %v4759 = vpop.xlane.xlu0 %4758
        %v4760 = vsel %vm1061, %v4730, 0.0
        %4761 = vadd.xlane.f32.xlu0 %v4760
        %v4762 = vpop.xlane.xlu0 %4761
        %v4763 = vsel %vm1061, %v4731, 0.0
        %4764 = vadd.xlane.f32.xlu0 %v4763
        %v4765 = vpop.xlane.xlu0 %4764
        %v4766 = vsel %vm1061, %v4732, 0.0
        %4767 = vadd.xlane.f32.xlu0 %v4766
        %v4768 = vpop.xlane.xlu0 %4767
        %v4769 = vsel %vm1061, %v4733, 0.0
        %4770 = vadd.xlane.f32.xlu0 %v4769
        %v4771 = vpop.xlane.xlu0 %4770
        %v4772 = vsel %vm1061, %v4734, 0.0
        %4773 = vadd.xlane.f32.xlu0 %v4772
        %v4774 = vpop.xlane.xlu0 %4773
        %v4775 = vsel %vm1061, %v4735, 0.0
        %4776 = vadd.xlane.f32.xlu0 %v4775
        %v4777 = vpop.xlane.xlu0 %4776
        %v4778 = vsel %vm1061, %v4736, 0.0
        %4779 = vadd.xlane.f32.xlu0 %v4778
        %v4780 = vpop.xlane.xlu0 %4779
        %v4781 = vsel %vm1061, %v4737, 0.0
        %4782 = vadd.xlane.f32.xlu0 %v4781
        %v4783 = vpop.xlane.xlu0 %4782
        %v4784 = vsel %vm1061, %v4738, 0.0
        %4785 = vadd.xlane.f32.xlu0 %v4784
        %v4786 = vpop.xlane.xlu0 %4785
        %v4787 = vrcp.pop 64.0
        %v4788 = vmul.f32 %v4741, %v4787
        %v4789 = vmul.f32 %v4744, %v4787
        %v4790 = vmul.f32 %v4747, %v4787
        %v4791 = vmul.f32 %v4750, %v4787
        %v4792 = vmul.f32 %v4753, %v4787
        %v4793 = vmul.f32 %v4756, %v4787
        %v4794 = vmul.f32 %v4759, %v4787
        %v4795 = vmul.f32 %v4762, %v4787
        %v4796 = vmul.f32 %v4765, %v4787
        %v4797 = vmul.f32 %v4768, %v4787
        %v4798 = vmul.f32 %v4771, %v4787
        %v4799 = vmul.f32 %v4774, %v4787
        %v4800 = vmul.f32 %v4777, %v4787
        %v4801 = vmul.f32 %v4780, %v4787
        %v4802 = vmul.f32 %v4783, %v4787
        %v4803 = vmul.f32 %v4786, %v4787
        %v4804 = vsub.f32 %v4723, %v4788
        %v4805 = vsub.f32 %v4724, %v4789
        %v4806 = vsub.f32 %v4725, %v4790
        %v4807 = vsub.f32 %v4726, %v4791
        %v4808 = vsub.f32 %v4727, %v4792
        %v4809 = vsub.f32 %v4728, %v4793
        %v4810 = vsub.f32 %v4729, %v4794
        %v4811 = vsub.f32 %v4730, %v4795
        %v4812 = vsub.f32 %v4731, %v4796
        %v4813 = vsub.f32 %v4732, %v4797
        %v4814 = vsub.f32 %v4733, %v4798
        %v4815 = vsub.f32 %v4734, %v4799
        %v4816 = vsub.f32 %v4735, %v4800
        %v4817 = vsub.f32 %v4736, %v4801
        %v4818 = vsub.f32 %v4737, %v4802
        %v4819 = vsub.f32 %v4738, %v4803
        %v4820 = vmul.f32 %v4804, %v4804
        %v4821 = vmul.f32 %v4805, %v4805
        %v4822 = vmul.f32 %v4806, %v4806
        %v4823 = vmul.f32 %v4807, %v4807
        %v4824 = vmul.f32 %v4808, %v4808
        %v4825 = vmul.f32 %v4809, %v4809
        %v4826 = vmul.f32 %v4810, %v4810
        %v4827 = vmul.f32 %v4811, %v4811
        %v4828 = vmul.f32 %v4812, %v4812
        %v4829 = vmul.f32 %v4813, %v4813
        %v4830 = vmul.f32 %v4814, %v4814
        %v4831 = vmul.f32 %v4815, %v4815
        %v4832 = vmul.f32 %v4816, %v4816
        %v4833 = vmul.f32 %v4817, %v4817
        %v4834 = vmul.f32 %v4818, %v4818
        %v4835 = vmul.f32 %v4819, %v4819
        %v4836 = vsel %vm1061, %v4820, 0.0
        %4837 = vadd.xlane.f32.xlu0 %v4836
        %v4838 = vpop.xlane.xlu0 %4837
        %v4839 = vsel %vm1061, %v4821, 0.0
        %4840 = vadd.xlane.f32.xlu0 %v4839
        %v4841 = vpop.xlane.xlu0 %4840
        %v4842 = vsel %vm1061, %v4822, 0.0
        %4843 = vadd.xlane.f32.xlu0 %v4842
        %v4844 = vpop.xlane.xlu0 %4843
        %v4845 = vsel %vm1061, %v4823, 0.0
        %4846 = vadd.xlane.f32.xlu0 %v4845
        %v4847 = vpop.xlane.xlu0 %4846
        %v4848 = vsel %vm1061, %v4824, 0.0
        %4849 = vadd.xlane.f32.xlu0 %v4848
        %v4850 = vpop.xlane.xlu0 %4849
        %v4851 = vsel %vm1061, %v4825, 0.0
        %4852 = vadd.xlane.f32.xlu0 %v4851
        %v4853 = vpop.xlane.xlu0 %4852
        %v4854 = vsel %vm1061, %v4826, 0.0
        %4855 = vadd.xlane.f32.xlu0 %v4854
        %v4856 = vpop.xlane.xlu0 %4855
        %v4857 = vsel %vm1061, %v4827, 0.0
        %4858 = vadd.xlane.f32.xlu0 %v4857
        %v4859 = vpop.xlane.xlu0 %4858
        %v4860 = vsel %vm1061, %v4828, 0.0
        %4861 = vadd.xlane.f32.xlu0 %v4860
        %v4862 = vpop.xlane.xlu0 %4861
        %v4863 = vsel %vm1061, %v4829, 0.0
        %4864 = vadd.xlane.f32.xlu0 %v4863
        %v4865 = vpop.xlane.xlu0 %4864
        %v4866 = vsel %vm1061, %v4830, 0.0
        %4867 = vadd.xlane.f32.xlu0 %v4866
        %v4868 = vpop.xlane.xlu0 %4867
        %v4869 = vsel %vm1061, %v4831, 0.0
        %4870 = vadd.xlane.f32.xlu0 %v4869
        %v4871 = vpop.xlane.xlu0 %4870
        %v4872 = vsel %vm1061, %v4832, 0.0
        %4873 = vadd.xlane.f32.xlu0 %v4872
        %v4874 = vpop.xlane.xlu0 %4873
        %v4875 = vsel %vm1061, %v4833, 0.0
        %4876 = vadd.xlane.f32.xlu0 %v4875
        %v4877 = vpop.xlane.xlu0 %4876
        %v4878 = vsel %vm1061, %v4834, 0.0
        %4879 = vadd.xlane.f32.xlu0 %v4878
        %v4880 = vpop.xlane.xlu0 %4879
        %v4881 = vsel %vm1061, %v4835, 0.0
        %4882 = vadd.xlane.f32.xlu0 %v4881
        %v4883 = vpop.xlane.xlu0 %4882
        %v4884 = vmul.f32 %v4838, 0.015873017
        %v4885 = vmul.f32 %v4841, 0.015873017
        %v4886 = vmul.f32 %v4844, 0.015873017
        %v4887 = vmul.f32 %v4847, 0.015873017
        %v4888 = vmul.f32 %v4850, 0.015873017
        %v4889 = vmul.f32 %v4853, 0.015873017
        %v4890 = vmul.f32 %v4856, 0.015873017
        %v4891 = vmul.f32 %v4859, 0.015873017
        %v4892 = vmul.f32 %v4862, 0.015873017
        %v4893 = vmul.f32 %v4865, 0.015873017
        %v4894 = vmul.f32 %v4868, 0.015873017
        %v4895 = vmul.f32 %v4871, 0.015873017
        %v4896 = vmul.f32 %v4874, 0.015873017
        %v4897 = vmul.f32 %v4877, 0.015873017
        %v4898 = vmul.f32 %v4880, 0.015873017
        %v4899 = vmul.f32 %v4883, 0.015873017
        %v4900 = vrsqrt.pop %v4884
        %v4901 = vmul.f32 %v4884, %v4900
        %vm4902 = vcmp.eq.f32.partialorder %v4884, inf
        %v4903 = vsel %vm4902, %v4884, %v4901
        %vm4904 = vcmp.eq.f32.partialorder %v4884, 0.0
        %v4905 = vand.u32 %v4884, 2147483648
        %v4906 = vsel %vm4904, %v4905, %v4903
        %v4907 = vrsqrt.pop %v4885
        %v4908 = vmul.f32 %v4885, %v4907
        %vm4909 = vcmp.eq.f32.partialorder %v4885, inf
        %v4910 = vsel %vm4909, %v4885, %v4908
        %vm4911 = vcmp.eq.f32.partialorder %v4885, 0.0
        %v4912 = vand.u32 %v4885, 2147483648
        %v4913 = vsel %vm4911, %v4912, %v4910
        %v4914 = vrsqrt.pop %v4886
        %v4915 = vmul.f32 %v4886, %v4914
        %vm4916 = vcmp.eq.f32.partialorder %v4886, inf
        %v4917 = vsel %vm4916, %v4886, %v4915
        %vm4918 = vcmp.eq.f32.partialorder %v4886, 0.0
        %v4919 = vand.u32 %v4886, 2147483648
        %v4920 = vsel %vm4918, %v4919, %v4917
        %v4921 = vrsqrt.pop %v4887
        %v4922 = vmul.f32 %v4887, %v4921
        %vm4923 = vcmp.eq.f32.partialorder %v4887, inf
        %v4924 = vsel %vm4923, %v4887, %v4922
        %vm4925 = vcmp.eq.f32.partialorder %v4887, 0.0
        %v4926 = vand.u32 %v4887, 2147483648
        %v4927 = vsel %vm4925, %v4926, %v4924
        %v4928 = vrsqrt.pop %v4888
        %v4929 = vmul.f32 %v4888, %v4928
        %vm4930 = vcmp.eq.f32.partialorder %v4888, inf
        %v4931 = vsel %vm4930, %v4888, %v4929
        %vm4932 = vcmp.eq.f32.partialorder %v4888, 0.0
        %v4933 = vand.u32 %v4888, 2147483648
        %v4934 = vsel %vm4932, %v4933, %v4931
        %v4935 = vrsqrt.pop %v4889
        %v4936 = vmul.f32 %v4889, %v4935
        %vm4937 = vcmp.eq.f32.partialorder %v4889, inf
        %v4938 = vsel %vm4937, %v4889, %v4936
        %vm4939 = vcmp.eq.f32.partialorder %v4889, 0.0
        %v4940 = vand.u32 %v4889, 2147483648
        %v4941 = vsel %vm4939, %v4940, %v4938
        %v4942 = vrsqrt.pop %v4890
        %v4943 = vmul.f32 %v4890, %v4942
        %vm4944 = vcmp.eq.f32.partialorder %v4890, inf
        %v4945 = vsel %vm4944, %v4890, %v4943
        %vm4946 = vcmp.eq.f32.partialorder %v4890, 0.0
        %v4947 = vand.u32 %v4890, 2147483648
        %v4948 = vsel %vm4946, %v4947, %v4945
        %v4949 = vrsqrt.pop %v4891
        %v4950 = vmul.f32 %v4891, %v4949
        %vm4951 = vcmp.eq.f32.partialorder %v4891, inf
        %v4952 = vsel %vm4951, %v4891, %v4950
        %vm4953 = vcmp.eq.f32.partialorder %v4891, 0.0
        %v4954 = vand.u32 %v4891, 2147483648
        %v4955 = vsel %vm4953, %v4954, %v4952
        %v4956 = vrsqrt.pop %v4892
        %v4957 = vmul.f32 %v4892, %v4956
        %vm4958 = vcmp.eq.f32.partialorder %v4892, inf
        %v4959 = vsel %vm4958, %v4892, %v4957
        %vm4960 = vcmp.eq.f32.partialorder %v4892, 0.0
        %v4961 = vand.u32 %v4892, 2147483648
        %v4962 = vsel %vm4960, %v4961, %v4959
        %v4963 = vrsqrt.pop %v4893
        %v4964 = vmul.f32 %v4893, %v4963
        %vm4965 = vcmp.eq.f32.partialorder %v4893, inf
        %v4966 = vsel %vm4965, %v4893, %v4964
        %vm4967 = vcmp.eq.f32.partialorder %v4893, 0.0
        %v4968 = vand.u32 %v4893, 2147483648
        %v4969 = vsel %vm4967, %v4968, %v4966
        %v4970 = vrsqrt.pop %v4894
        %v4971 = vmul.f32 %v4894, %v4970
        %vm4972 = vcmp.eq.f32.partialorder %v4894, inf
        %v4973 = vsel %vm4972, %v4894, %v4971
        %vm4974 = vcmp.eq.f32.partialorder %v4894, 0.0
        %v4975 = vand.u32 %v4894, 2147483648
        %v4976 = vsel %vm4974, %v4975, %v4973
        %v4977 = vrsqrt.pop %v4895
        %v4978 = vmul.f32 %v4895, %v4977
        %vm4979 = vcmp.eq.f32.partialorder %v4895, inf
        %v4980 = vsel %vm4979, %v4895, %v4978
        %vm4981 = vcmp.eq.f32.partialorder %v4895, 0.0
        %v4982 = vand.u32 %v4895, 2147483648
        %v4983 = vsel %vm4981, %v4982, %v4980
        %v4984 = vrsqrt.pop %v4896
        %v4985 = vmul.f32 %v4896, %v4984
        %vm4986 = vcmp.eq.f32.partialorder %v4896, inf
        %v4987 = vsel %vm4986, %v4896, %v4985
        %vm4988 = vcmp.eq.f32.partialorder %v4896, 0.0
        %v4989 = vand.u32 %v4896, 2147483648
        %v4990 = vsel %vm4988, %v4989, %v4987
        %v4991 = vrsqrt.pop %v4897
        %v4992 = vmul.f32 %v4897, %v4991
        %vm4993 = vcmp.eq.f32.partialorder %v4897, inf
        %v4994 = vsel %vm4993, %v4897, %v4992
        %vm4995 = vcmp.eq.f32.partialorder %v4897, 0.0
        %v4996 = vand.u32 %v4897, 2147483648
        %v4997 = vsel %vm4995, %v4996, %v4994
        %v4998 = vrsqrt.pop %v4898
        %v4999 = vmul.f32 %v4898, %v4998
        %vm5000 = vcmp.eq.f32.partialorder %v4898, inf
        %v5001 = vsel %vm5000, %v4898, %v4999
        %vm5002 = vcmp.eq.f32.partialorder %v4898, 0.0
        %v5003 = vand.u32 %v4898, 2147483648
        %v5004 = vsel %vm5002, %v5003, %v5001
        %v5005 = vrsqrt.pop %v4899
        %v5006 = vmul.f32 %v4899, %v5005
        %vm5007 = vcmp.eq.f32.partialorder %v4899, inf
        %v5008 = vsel %vm5007, %v4899, %v5006
        %vm5009 = vcmp.eq.f32.partialorder %v4899, 0.0
        %v5010 = vand.u32 %v4899, 2147483648
        %v5011 = vsel %vm5009, %v5010, %v5008
        %v5012 = vlaneseq
        %v5013 = vshrl.u32 %v5012, 7
        %v5014 = vsub.s32 0, %v5013
        %v5015 = vrot.slane %v4489, %v5014
        %v5016 = vmul.f32 %v5015, %v4804
        %v5017 = vmul.f32 %v5015, %v4805
        %v5018 = vmul.f32 %v5015, %v4806
        %v5019 = vmul.f32 %v5015, %v4807
        %v5020 = vmul.f32 %v5015, %v4808
        %v5021 = vmul.f32 %v5015, %v4809
        %v5022 = vmul.f32 %v5015, %v4810
        %v5023 = vmul.f32 %v5015, %v4811
        %v5024 = vmul.f32 %v5015, %v4812
        %v5025 = vmul.f32 %v5015, %v4813
        %v5026 = vmul.f32 %v5015, %v4814
        %v5027 = vmul.f32 %v5015, %v4815
        %v5028 = vmul.f32 %v5015, %v4816
        %v5029 = vmul.f32 %v5015, %v4817
        %v5030 = vmul.f32 %v5015, %v4818
        %v5031 = vmul.f32 %v5015, %v4819
        %v5032 = vadd.f32 %v4906, 1e-06
        %v5033 = vadd.f32 %v4913, 1e-06
        %v5034 = vadd.f32 %v4920, 1e-06
        %v5035 = vadd.f32 %v4927, 1e-06
        %v5036 = vadd.f32 %v4934, 1e-06
        %v5037 = vadd.f32 %v4941, 1e-06
        %v5038 = vadd.f32 %v4948, 1e-06
        %v5039 = vadd.f32 %v4955, 1e-06
        %v5040 = vadd.f32 %v4962, 1e-06
        %v5041 = vadd.f32 %v4969, 1e-06
        %v5042 = vadd.f32 %v4976, 1e-06
        %v5043 = vadd.f32 %v4983, 1e-06
        %v5044 = vadd.f32 %v4990, 1e-06
        %v5045 = vadd.f32 %v4997, 1e-06
        %v5046 = vadd.f32 %v5004, 1e-06
        %v5047 = vadd.f32 %v5011, 1e-06
        %v5048 = vrcp.pop %v5032
        %v5049 = vmul.f32 %v5016, %v5048
        %v5050 = vrcp.pop %v5033
        %v5051 = vmul.f32 %v5017, %v5050
        %v5052 = vrcp.pop %v5034
        %v5053 = vmul.f32 %v5018, %v5052
        %v5054 = vrcp.pop %v5035
        %v5055 = vmul.f32 %v5019, %v5054
        %v5056 = vrcp.pop %v5036
        %v5057 = vmul.f32 %v5020, %v5056
        %v5058 = vrcp.pop %v5037
        %v5059 = vmul.f32 %v5021, %v5058
        %v5060 = vrcp.pop %v5038
        %v5061 = vmul.f32 %v5022, %v5060
        %v5062 = vrcp.pop %v5039
        %v5063 = vmul.f32 %v5023, %v5062
        %v5064 = vrcp.pop %v5040
        %v5065 = vmul.f32 %v5024, %v5064
        %v5066 = vrcp.pop %v5041
        %v5067 = vmul.f32 %v5025, %v5066
        %v5068 = vrcp.pop %v5042
        %v5069 = vmul.f32 %v5026, %v5068
        %v5070 = vrcp.pop %v5043
        %v5071 = vmul.f32 %v5027, %v5070
        %v5072 = vrcp.pop %v5044
        %v5073 = vmul.f32 %v5028, %v5072
        %v5074 = vrcp.pop %v5045
        %v5075 = vmul.f32 %v5029, %v5074
        %v5076 = vrcp.pop %v5046
        %v5077 = vmul.f32 %v5030, %v5076
        %v5078 = vrcp.pop %v5047
        %v5079 = vmul.f32 %v5031, %v5078
        %v5080 = vlaneseq
        %v5081 = vshrl.u32 %v5080, 7
        %v5082 = vsub.s32 0, %v5081
        %v5083 = vrot.slane %v4490, %v5082
        %v5084 = vadd.f32 %v5049, %v5083
        %v5085 = vadd.f32 %v5051, %v5083
        %v5086 = vadd.f32 %v5053, %v5083
        %v5087 = vadd.f32 %v5055, %v5083
        %v5088 = vadd.f32 %v5057, %v5083
        %v5089 = vadd.f32 %v5059, %v5083
        %v5090 = vadd.f32 %v5061, %v5083
        %v5091 = vadd.f32 %v5063, %v5083
        %v5092 = vadd.f32 %v5065, %v5083
        %v5093 = vadd.f32 %v5067, %v5083
        %v5094 = vadd.f32 %v5069, %v5083
        %v5095 = vadd.f32 %v5071, %v5083
        %v5096 = vadd.f32 %v5073, %v5083
        %v5097 = vadd.f32 %v5075, %v5083
        %v5098 = vadd.f32 %v5077, %v5083
        %v5099 = vadd.f32 %v5079, %v5083
        %5108 = vrot.lane.b32.xlu0 %v4471, 64
        %v5109 = vpop.permute.xlu0 %5108
        %5110 = vrot.lane.b32.xlu0 %v4472, 64
        %v5111 = vpop.permute.xlu0 %5110
        %5112 = vrot.lane.b32.xlu0 %v4473, 64
        %v5113 = vpop.permute.xlu0 %5112
        %5114 = vrot.lane.b32.xlu0 %v4474, 64
        %v5115 = vpop.permute.xlu0 %5114
        %5116 = vrot.lane.b32.xlu0 %v4475, 64
        %v5117 = vpop.permute.xlu0 %5116
        %5118 = vrot.lane.b32.xlu0 %v4476, 64
        %v5119 = vpop.permute.xlu0 %5118
        %5120 = vrot.lane.b32.xlu0 %v4477, 64
        %v5121 = vpop.permute.xlu0 %5120
        %5122 = vrot.lane.b32.xlu0 %v4478, 64
        %v5123 = vpop.permute.xlu0 %5122
        %5132 = vrot.lane.b32.xlu0 %v4495, 64
        %v5133 = vpop.permute.xlu0 %5132
        %v5136 = vsel %vm1061, %v5084, 0
        %v5139 = vsel %vm1061, %v5085, 0
        %v5142 = vsel %vm1061, %v5086, 0
        %v5145 = vsel %vm1061, %v5087, 0
        %v5148 = vsel %vm1061, %v5088, 0
        %v5151 = vsel %vm1061, %v5089, 0
        %v5154 = vsel %vm1061, %v5090, 0
        %v5157 = vsel %vm1061, %v5091, 0
        %v5160 = vsel %vm1061, %v5092, 0
        %v5163 = vsel %vm1061, %v5093, 0
        %v5166 = vsel %vm1061, %v5094, 0
        %v5169 = vsel %vm1061, %v5095, 0
        %v5172 = vsel %vm1061, %v5096, 0
        %v5175 = vsel %vm1061, %v5097, 0
        %v5178 = vsel %vm1061, %v5098, 0
        %v5181 = vsel %vm1061, %v5099, 0
        %5183 = vmatprep.subr.mxu0 0.0
        %5184 = vmatpush1.msra.mxu0 %v5109
        %5185 = vmatprep.subr.mxu0 0.0
        %5186 = vmatpush1.msra.mxu0 %v5111
        %5187 = vmatprep.subr.mxu0 0.0
        %5188 = vmatpush1.msra.mxu0 %v5113
        %5189 = vmatprep.subr.mxu0 0.0
        %5190 = vmatpush1.msra.mxu0 %v5115
        %5191 = vmatprep.subr.mxu0 0.0
        %5192 = vmatpush1.msra.mxu0 %v5117
        %5193 = vmatprep.subr.mxu0 0.0
        %5194 = vmatpush1.msra.mxu0 %v5119
        %5195 = vmatprep.subr.mxu0 0.0
        %5196 = vmatpush1.msra.mxu0 %v5121
        %5197 = vmatprep.subr.mxu0 0.0
        %5198 = vmatpush1.msra.mxu0 %v5123
        %5199 = vmatprep.subr.mxu0 0.0
        %5200 = vmatpush1.msra.mxu0 0.0
        %5201 = vmatprep.subr.mxu0 0.0
        %5202 = vmatpush1.msra.mxu0 0.0
        %5203 = vmatprep.subr.mxu0 0.0
        %5204 = vmatpush1.msra.mxu0 0.0
        %5205 = vmatprep.subr.mxu0 0.0
        %5206 = vmatpush1.msra.mxu0 0.0
        %5207 = vmatprep.subr.mxu0 0.0
        %5208 = vmatpush1.msra.mxu0 0.0
        %5209 = vmatprep.subr.mxu0 0.0
        %5210 = vmatpush1.msra.mxu0 0.0
        %5211 = vmatprep.subr.mxu0 0.0
        %5212 = vmatpush1.msra.mxu0 0.0
        %5213 = vmatprep.subr.mxu0 0.0
        %5214 = vmatpush1.msra.mxu0 0.0
        %5215 = vmatprep.subr.mxu0 0.0
        %5216 = vmatpush1.msra.mxu0 0.0
        %5217 = vmatprep.subr.mxu0 0.0
        %5218 = vmatpush1.msra.mxu0 0.0
        %5219 = vmatprep.subr.mxu0 0.0
        %5220 = vmatpush1.msra.mxu0 0.0
        %5221 = vmatprep.subr.mxu0 0.0
        %5222 = vmatpush1.msra.mxu0 0.0
        %5223 = vmatprep.subr.mxu0 0.0
        %5224 = vmatpush1.msra.mxu0 0.0
        %5225 = vmatprep.subr.mxu0 0.0
        %5226 = vmatpush1.msra.mxu0 0.0
        %5227 = vmatprep.subr.mxu0 0.0
        %5228 = vmatpush1.msra.mxu0 0.0
        %5229 = vmatprep.subr.mxu0 0.0
        %5230 = vmatpush1.msra.mxu0 0.0
        %5231 = vmatprep.subr.mxu0 0.0
        %5232 = vmatpush1.msra.mxu0 0.0
        %5233 = vmatprep.subr.mxu0 0.0
        %5234 = vmatpush1.msra.mxu0 0.0
        %5235 = vmatprep.subr.mxu0 0.0
        %5236 = vmatpush1.msra.mxu0 0.0
        %5237 = vmatprep.subr.mxu0 0.0
        %5238 = vmatpush1.msra.mxu0 0.0
        %5239 = vmatprep.subr.mxu0 0.0
        %5240 = vmatpush1.msra.mxu0 0.0
        %5241 = vmatprep.subr.mxu0 0.0
        %5242 = vmatpush1.msra.mxu0 0.0
        %5243 = vmatprep.subr.mxu0 0.0
        %5244 = vmatpush1.msra.mxu0 0.0
        %5245 = vmatprep.subr.mxu0 0.0
        %5246 = vmatpush1.msra.mxu0 0.0
        %5247 = vmatprep.mubr.f32.mxu0 0.0
        %5248 = vmatmul.mubr.f32.gmra.mrb[0].mxu0 %v5136
        %v5249 = vpop.f32.mrb[0].mxu0
        %v5250 = vadd.f32 %v5133, %v5249
        %v5251 = vpop.f32.mrb[0].mxu0
        %5252 = vmatprep.mubr.f32.mxu0 0.0
        %5253 = vmatmul.mubr.f32.gmra.mrb[0].mxu0 %v5139
        %v5254 = vpop.f32.mrb[0].mxu0
        %v5255 = vadd.f32 %v5133, %v5254
        %v5256 = vpop.f32.mrb[0].mxu0
        %5257 = vmatprep.mubr.f32.mxu0 0.0
        %5258 = vmatmul.mubr.f32.gmra.mrb[0].mxu0 %v5142
        %v5259 = vpop.f32.mrb[0].mxu0
        %v5260 = vadd.f32 %v5133, %v5259
        %v5261 = vpop.f32.mrb[0].mxu0
        %5262 = vmatprep.mubr.f32.mxu0 0.0
        %5263 = vmatmul.mubr.f32.gmra.mrb[0].mxu0 %v5145
        %v5264 = vpop.f32.mrb[0].mxu0
        %v5265 = vadd.f32 %v5133, %v5264
        %v5266 = vpop.f32.mrb[0].mxu0
        %5267 = vmatprep.mubr.f32.mxu0 0.0
        %5268 = vmatmul.mubr.f32.gmra.mrb[0].mxu0 %v5148
        %v5269 = vpop.f32.mrb[0].mxu0
        %v5270 = vadd.f32 %v5133, %v5269
        %v5271 = vpop.f32.mrb[0].mxu0
        %5272 = vmatprep.mubr.f32.mxu0 0.0
        %5273 = vmatmul.mubr.f32.gmra.mrb[0].mxu0 %v5151
        %v5274 = vpop.f32.mrb[0].mxu0
        %v5275 = vadd.f32 %v5133, %v5274
        %v5276 = vpop.f32.mrb[0].mxu0
        %5277 = vmatprep.mubr.f32.mxu0 0.0
        %5278 = vmatmul.mubr.f32.gmra.mrb[0].mxu0 %v5154
        %v5279 = vpop.f32.mrb[0].mxu0
        %v5280 = vadd.f32 %v5133, %v5279
        %v5281 = vpop.f32.mrb[0].mxu0
        %5282 = vmatprep.mubr.f32.mxu0 0.0
        %5283 = vmatmul.mubr.f32.gmra.mrb[0].mxu0 %v5157
        %v5284 = vpop.f32.mrb[0].mxu0
        %v5285 = vadd.f32 %v5133, %v5284
        %v5286 = vpop.f32.mrb[0].mxu0
        %5287 = vmatprep.mubr.f32.mxu0 0.0
        %5288 = vmatmul.mubr.f32.gmra.mrb[0].mxu0 %v5160
        %v5289 = vpop.f32.mrb[0].mxu0
        %v5290 = vadd.f32 %v5133, %v5289
        %v5291 = vpop.f32.mrb[0].mxu0
        %5292 = vmatprep.mubr.f32.mxu0 0.0
        %5293 = vmatmul.mubr.f32.gmra.mrb[0].mxu0 %v5163
        %v5294 = vpop.f32.mrb[0].mxu0
        %v5295 = vadd.f32 %v5133, %v5294
        %v5296 = vpop.f32.mrb[0].mxu0
        %5297 = vmatprep.mubr.f32.mxu0 0.0
        %5298 = vmatmul.mubr.f32.gmra.mrb[0].mxu0 %v5166
        %v5299 = vpop.f32.mrb[0].mxu0
        %v5300 = vadd.f32 %v5133, %v5299
        %v5301 = vpop.f32.mrb[0].mxu0
        %5302 = vmatprep.mubr.f32.mxu0 0.0
        %5303 = vmatmul.mubr.f32.gmra.mrb[0].mxu0 %v5169
        %v5304 = vpop.f32.mrb[0].mxu0
        %v5305 = vadd.f32 %v5133, %v5304
        %v5306 = vpop.f32.mrb[0].mxu0
        %5307 = vmatprep.mubr.f32.mxu0 0.0
        %5308 = vmatmul.mubr.f32.gmra.mrb[0].mxu0 %v5172
        %v5309 = vpop.f32.mrb[0].mxu0
        %v5310 = vadd.f32 %v5133, %v5309
        %v5311 = vpop.f32.mrb[0].mxu0
        %5312 = vmatprep.mubr.f32.mxu0 0.0
        %5313 = vmatmul.mubr.f32.gmra.mrb[0].mxu0 %v5175
        %v5314 = vpop.f32.mrb[0].mxu0
        %v5315 = vadd.f32 %v5133, %v5314
        %v5316 = vpop.f32.mrb[0].mxu0
        %5317 = vmatprep.mubr.f32.mxu0 0.0
        %5318 = vmatmul.mubr.f32.gmra.mrb[0].mxu0 %v5178
        %v5319 = vpop.f32.mrb[0].mxu0
        %v5320 = vadd.f32 %v5133, %v5319
        %v5321 = vpop.f32.mrb[0].mxu0
        %5322 = vmatprep.mubr.f32.mxu0 0.0
        %5323 = vmatmul.mubr.f32.gmra.mrb[0].mxu0 %v5181
        %v5324 = vpop.f32.mrb[0].mxu0
        %v5325 = vadd.f32 %v5133, %v5324
        %v5326 = vpop.f32.mrb[0].mxu0
        %5327 = vdwg.mxu0
        %v5328 = vmax.f32 %v5250, 0.0
        %v5329 = vmax.f32 %v5255, 0.0
        %v5330 = vmax.f32 %v5260, 0.0
        %v5331 = vmax.f32 %v5265, 0.0
        %v5332 = vmax.f32 %v5270, 0.0
        %v5333 = vmax.f32 %v5275, 0.0
        %v5334 = vmax.f32 %v5280, 0.0
        %v5335 = vmax.f32 %v5285, 0.0
        %v5336 = vmax.f32 %v5290, 0.0
        %v5337 = vmax.f32 %v5295, 0.0
        %v5338 = vmax.f32 %v5300, 0.0
        %v5339 = vmax.f32 %v5305, 0.0
        %v5340 = vmax.f32 %v5310, 0.0
        %v5341 = vmax.f32 %v5315, 0.0
        %v5342 = vmax.f32 %v5320, 0.0
        %v5343 = vmax.f32 %v5325, 0.0
        %v5345 = vlaneseq
        %v5346 = vshrl.u32 %v5345, 7
        %v5347 = vsub.s32 0, %v5346
        %v5348 = vrot.slane %v4488, %v5347
        %v5351 = vsel %vm1061, %v5328, 0
        %v5354 = vsel %vm1061, %v5329, 0
        %v5357 = vsel %vm1061, %v5330, 0
        %v5360 = vsel %vm1061, %v5331, 0
        %v5363 = vsel %vm1061, %v5332, 0
        %v5366 = vsel %vm1061, %v5333, 0
        %v5369 = vsel %vm1061, %v5334, 0
        %v5372 = vsel %vm1061, %v5335, 0
        %v5375 = vsel %vm1061, %v5336, 0
        %v5378 = vsel %vm1061, %v5337, 0
        %v5381 = vsel %vm1061, %v5338, 0
        %v5384 = vsel %vm1061, %v5339, 0
        %v5387 = vsel %vm1061, %v5340, 0
        %v5390 = vsel %vm1061, %v5341, 0
        %v5393 = vsel %vm1061, %v5342, 0
        %v5396 = vsel %vm1061, %v5343, 0
        %5398 = vmatprep.subr.mxu0 0.0
        %5399 = vmatpush1.msra.mxu0 %v4479
        %5400 = vmatprep.subr.mxu0 0.0
        %5401 = vmatpush1.msra.mxu0 %v4480
        %5402 = vmatprep.subr.mxu0 0.0
        %5403 = vmatpush1.msra.mxu0 %v4481
        %5404 = vmatprep.subr.mxu0 0.0
        %5405 = vmatpush1.msra.mxu0 %v4482
        %5406 = vmatprep.subr.mxu0 0.0
        %5407 = vmatpush1.msra.mxu0 %v4483
        %5408 = vmatprep.subr.mxu0 0.0
        %5409 = vmatpush1.msra.mxu0 %v4484
        %5410 = vmatprep.subr.mxu0 0.0
        %5411 = vmatpush1.msra.mxu0 %v4485
        %5412 = vmatprep.subr.mxu0 0.0
        %5413 = vmatpush1.msra.mxu0 %v4486
        %5414 = vmatprep.subr.mxu0 0.0
        %5415 = vmatpush1.msra.mxu0 0.0
        %5416 = vmatprep.subr.mxu0 0.0
        %5417 = vmatpush1.msra.mxu0 0.0
        %5418 = vmatprep.subr.mxu0 0.0
        %5419 = vmatpush1.msra.mxu0 0.0
        %5420 = vmatprep.subr.mxu0 0.0
        %5421 = vmatpush1.msra.mxu0 0.0
        %5422 = vmatprep.subr.mxu0 0.0
        %5423 = vmatpush1.msra.mxu0 0.0
        %5424 = vmatprep.subr.mxu0 0.0
        %5425 = vmatpush1.msra.mxu0 0.0
        %5426 = vmatprep.subr.mxu0 0.0
        %5427 = vmatpush1.msra.mxu0 0.0
        %5428 = vmatprep.subr.mxu0 0.0
        %5429 = vmatpush1.msra.mxu0 0.0
        %5430 = vmatprep.subr.mxu0 0.0
        %5431 = vmatpush1.msra.mxu0 0.0
        %5432 = vmatprep.subr.mxu0 0.0
        %5433 = vmatpush1.msra.mxu0 0.0
        %5434 = vmatprep.subr.mxu0 0.0
        %5435 = vmatpush1.msra.mxu0 0.0
        %5436 = vmatprep.subr.mxu0 0.0
        %5437 = vmatpush1.msra.mxu0 0.0
        %5438 = vmatprep.subr.mxu0 0.0
        %5439 = vmatpush1.msra.mxu0 0.0
        %5440 = vmatprep.subr.mxu0 0.0
        %5441 = vmatpush1.msra.mxu0 0.0
        %5442 = vmatprep.subr.mxu0 0.0
        %5443 = vmatpush1.msra.mxu0 0.0
        %5444 = vmatprep.subr.mxu0 0.0
        %5445 = vmatpush1.msra.mxu0 0.0
        %5446 = vmatprep.subr.mxu0 0.0
        %5447 = vmatpush1.msra.mxu0 0.0
        %5448 = vmatprep.subr.mxu0 0.0
        %5449 = vmatpush1.msra.mxu0 0.0
        %5450 = vmatprep.subr.mxu0 0.0
        %5451 = vmatpush1.msra.mxu0 0.0
        %5452 = vmatprep.subr.mxu0 0.0
        %5453 = vmatpush1.msra.mxu0 0.0
        %5454 = vmatprep.subr.mxu0 0.0
        %5455 = vmatpush1.msra.mxu0 0.0
        %5456 = vmatprep.subr.mxu0 0.0
        %5457 = vmatpush1.msra.mxu0 0.0
        %5458 = vmatprep.subr.mxu0 0.0
        %5459 = vmatpush1.msra.mxu0 0.0
        %5460 = vmatprep.subr.mxu0 0.0
        %5461 = vmatpush1.msra.mxu0 0.0
        %5462 = vmatprep.mubr.f32.mxu0 0.0
        %5463 = vmatmul.mubr.f32.gmra.mrb[0].mxu0 %v5351
        %v5464 = vpop.f32.mrb[0].mxu0
        %v5465 = vadd.f32 %v5348, %v5464
        %v5466 = vpop.f32.mrb[0].mxu0
        %5467 = vmatprep.mubr.f32.mxu0 0.0
        %5468 = vmatmul.mubr.f32.gmra.mrb[0].mxu0 %v5354
        %v5469 = vpop.f32.mrb[0].mxu0
        %v5470 = vadd.f32 %v5348, %v5469
        %v5471 = vpop.f32.mrb[0].mxu0
        %5472 = vmatprep.mubr.f32.mxu0 0.0
        %5473 = vmatmul.mubr.f32.gmra.mrb[0].mxu0 %v5357
        %v5474 = vpop.f32.mrb[0].mxu0
        %v5475 = vadd.f32 %v5348, %v5474
        %v5476 = vpop.f32.mrb[0].mxu0
        %5477 = vmatprep.mubr.f32.mxu0 0.0
        %5478 = vmatmul.mubr.f32.gmra.mrb[0].mxu0 %v5360
        %v5479 = vpop.f32.mrb[0].mxu0
        %v5480 = vadd.f32 %v5348, %v5479
        %v5481 = vpop.f32.mrb[0].mxu0
        %5482 = vmatprep.mubr.f32.mxu0 0.0
        %5483 = vmatmul.mubr.f32.gmra.mrb[0].mxu0 %v5363
        %v5484 = vpop.f32.mrb[0].mxu0
        %v5485 = vadd.f32 %v5348, %v5484
        %v5486 = vpop.f32.mrb[0].mxu0
        %5487 = vmatprep.mubr.f32.mxu0 0.0
        %5488 = vmatmul.mubr.f32.gmra.mrb[0].mxu0 %v5366
        %v5489 = vpop.f32.mrb[0].mxu0
        %v5490 = vadd.f32 %v5348, %v5489
        %v5491 = vpop.f32.mrb[0].mxu0
        %5492 = vmatprep.mubr.f32.mxu0 0.0
        %5493 = vmatmul.mubr.f32.gmra.mrb[0].mxu0 %v5369
        %v5494 = vpop.f32.mrb[0].mxu0
        %v5495 = vadd.f32 %v5348, %v5494
        %v5496 = vpop.f32.mrb[0].mxu0
        %5497 = vmatprep.mubr.f32.mxu0 0.0
        %5498 = vmatmul.mubr.f32.gmra.mrb[0].mxu0 %v5372
        %v5499 = vpop.f32.mrb[0].mxu0
        %v5500 = vadd.f32 %v5348, %v5499
        %v5501 = vpop.f32.mrb[0].mxu0
        %5502 = vmatprep.mubr.f32.mxu0 0.0
        %5503 = vmatmul.mubr.f32.gmra.mrb[0].mxu0 %v5375
        %v5504 = vpop.f32.mrb[0].mxu0
        %v5505 = vadd.f32 %v5348, %v5504
        %v5506 = vpop.f32.mrb[0].mxu0
        %5507 = vmatprep.mubr.f32.mxu0 0.0
        %5508 = vmatmul.mubr.f32.gmra.mrb[0].mxu0 %v5378
        %v5509 = vpop.f32.mrb[0].mxu0
        %v5510 = vadd.f32 %v5348, %v5509
        %v5511 = vpop.f32.mrb[0].mxu0
        %5512 = vmatprep.mubr.f32.mxu0 0.0
        %5513 = vmatmul.mubr.f32.gmra.mrb[0].mxu0 %v5381
        %v5514 = vpop.f32.mrb[0].mxu0
        %v5515 = vadd.f32 %v5348, %v5514
        %v5516 = vpop.f32.mrb[0].mxu0
        %5517 = vmatprep.mubr.f32.mxu0 0.0
        %5518 = vmatmul.mubr.f32.gmra.mrb[0].mxu0 %v5384
        %v5519 = vpop.f32.mrb[0].mxu0
        %v5520 = vadd.f32 %v5348, %v5519
        %v5521 = vpop.f32.mrb[0].mxu0
        %5522 = vmatprep.mubr.f32.mxu0 0.0
        %5523 = vmatmul.mubr.f32.gmra.mrb[0].mxu0 %v5387
        %v5524 = vpop.f32.mrb[0].mxu0
        %v5525 = vadd.f32 %v5348, %v5524
        %v5526 = vpop.f32.mrb[0].mxu0
        %5527 = vmatprep.mubr.f32.mxu0 0.0
        %5528 = vmatmul.mubr.f32.gmra.mrb[0].mxu0 %v5390
        %v5529 = vpop.f32.mrb[0].mxu0
        %v5530 = vadd.f32 %v5348, %v5529
        %v5531 = vpop.f32.mrb[0].mxu0
        %5532 = vmatprep.mubr.f32.mxu0 0.0
        %5533 = vmatmul.mubr.f32.gmra.mrb[0].mxu0 %v5393
        %v5534 = vpop.f32.mrb[0].mxu0
        %v5535 = vadd.f32 %v5348, %v5534
        %v5536 = vpop.f32.mrb[0].mxu0
        %5537 = vmatprep.mubr.f32.mxu0 0.0
        %5538 = vmatmul.mubr.f32.gmra.mrb[0].mxu0 %v5396
        %v5539 = vpop.f32.mrb[0].mxu0
        %v5540 = vadd.f32 %v5348, %v5539
        %v5541 = vpop.f32.mrb[0].mxu0
        %5542 = vdwg.mxu0
        %v5543 = vadd.f32 %v5084, %v5465
        %v5544 = vadd.f32 %v5085, %v5470
        %v5545 = vadd.f32 %v5086, %v5475
        %v5546 = vadd.f32 %v5087, %v5480
        %v5547 = vadd.f32 %v5088, %v5485
        %v5548 = vadd.f32 %v5089, %v5490
        %v5549 = vadd.f32 %v5090, %v5495
        %v5550 = vadd.f32 %v5091, %v5500
        %v5551 = vadd.f32 %v5092, %v5505
        %v5552 = vadd.f32 %v5093, %v5510
        %v5553 = vadd.f32 %v5094, %v5515
        %v5554 = vadd.f32 %v5095, %v5520
        %v5555 = vadd.f32 %v5096, %v5525
        %v5556 = vadd.f32 %v5097, %v5530
        %v5557 = vadd.f32 %v5098, %v5535
        %v5558 = vadd.f32 %v5099, %v5540
        %v5559 = vsel %vm1061, %v5543, 0.0
        %5560 = vadd.xlane.f32.xlu0 %v5559
        %v5561 = vpop.xlane.xlu0 %5560
        %v5562 = vsel %vm1061, %v5544, 0.0
        %5563 = vadd.xlane.f32.xlu0 %v5562
        %v5564 = vpop.xlane.xlu0 %5563
        %v5565 = vsel %vm1061, %v5545, 0.0
        %5566 = vadd.xlane.f32.xlu0 %v5565
        %v5567 = vpop.xlane.xlu0 %5566
        %v5568 = vsel %vm1061, %v5546, 0.0
        %5569 = vadd.xlane.f32.xlu0 %v5568
        %v5570 = vpop.xlane.xlu0 %5569
        %v5571 = vsel %vm1061, %v5547, 0.0
        %5572 = vadd.xlane.f32.xlu0 %v5571
        %v5573 = vpop.xlane.xlu0 %5572
        %v5574 = vsel %vm1061, %v5548, 0.0
        %5575 = vadd.xlane.f32.xlu0 %v5574
        %v5576 = vpop.xlane.xlu0 %5575
        %v5577 = vsel %vm1061, %v5549, 0.0
        %5578 = vadd.xlane.f32.xlu0 %v5577
        %v5579 = vpop.xlane.xlu0 %5578
        %v5580 = vsel %vm1061, %v5550, 0.0
        %5581 = vadd.xlane.f32.xlu0 %v5580
        %v5582 = vpop.xlane.xlu0 %5581
        %v5583 = vsel %vm1061, %v5551, 0.0
        %5584 = vadd.xlane.f32.xlu0 %v5583
        %v5585 = vpop.xlane.xlu0 %5584
        %v5586 = vsel %vm1061, %v5552, 0.0
        %5587 = vadd.xlane.f32.xlu0 %v5586
        %v5588 = vpop.xlane.xlu0 %5587
        %v5589 = vsel %vm1061, %v5553, 0.0
        %5590 = vadd.xlane.f32.xlu0 %v5589
        %v5591 = vpop.xlane.xlu0 %5590
        %v5592 = vsel %vm1061, %v5554, 0.0
        %5593 = vadd.xlane.f32.xlu0 %v5592
        %v5594 = vpop.xlane.xlu0 %5593
        %v5595 = vsel %vm1061, %v5555, 0.0
        %5596 = vadd.xlane.f32.xlu0 %v5595
        %v5597 = vpop.xlane.xlu0 %5596
        %v5598 = vsel %vm1061, %v5556, 0.0
        %5599 = vadd.xlane.f32.xlu0 %v5598
        %v5600 = vpop.xlane.xlu0 %5599
        %v5601 = vsel %vm1061, %v5557, 0.0
        %5602 = vadd.xlane.f32.xlu0 %v5601
        %v5603 = vpop.xlane.xlu0 %5602
        %v5604 = vsel %vm1061, %v5558, 0.0
        %5605 = vadd.xlane.f32.xlu0 %v5604
        %v5606 = vpop.xlane.xlu0 %5605
        %v5607 = vmul.f32 %v5561, %v4787
        %v5608 = vmul.f32 %v5564, %v4787
        %v5609 = vmul.f32 %v5567, %v4787
        %v5610 = vmul.f32 %v5570, %v4787
        %v5611 = vmul.f32 %v5573, %v4787
        %v5612 = vmul.f32 %v5576, %v4787
        %v5613 = vmul.f32 %v5579, %v4787
        %v5614 = vmul.f32 %v5582, %v4787
        %v5615 = vmul.f32 %v5585, %v4787
        %v5616 = vmul.f32 %v5588, %v4787
        %v5617 = vmul.f32 %v5591, %v4787
        %v5618 = vmul.f32 %v5594, %v4787
        %v5619 = vmul.f32 %v5597, %v4787
        %v5620 = vmul.f32 %v5600, %v4787
        %v5621 = vmul.f32 %v5603, %v4787
        %v5622 = vmul.f32 %v5606, %v4787
        %v5623 = vsub.f32 %v5543, %v5607
        %v5624 = vsub.f32 %v5544, %v5608
        %v5625 = vsub.f32 %v5545, %v5609
        %v5626 = vsub.f32 %v5546, %v5610
        %v5627 = vsub.f32 %v5547, %v5611
        %v5628 = vsub.f32 %v5548, %v5612
        %v5629 = vsub.f32 %v5549, %v5613
        %v5630 = vsub.f32 %v5550, %v5614
        %v5631 = vsub.f32 %v5551, %v5615
        %v5632 = vsub.f32 %v5552, %v5616
        %v5633 = vsub.f32 %v5553, %v5617
        %v5634 = vsub.f32 %v5554, %v5618
        %v5635 = vsub.f32 %v5555, %v5619
        %v5636 = vsub.f32 %v5556, %v5620
        %v5637 = vsub.f32 %v5557, %v5621
        %v5638 = vsub.f32 %v5558, %v5622
        %v5639 = vmul.f32 %v5623, %v5623
        %v5640 = vmul.f32 %v5624, %v5624
        %v5641 = vmul.f32 %v5625, %v5625
        %v5642 = vmul.f32 %v5626, %v5626
        %v5643 = vmul.f32 %v5627, %v5627
        %v5644 = vmul.f32 %v5628, %v5628
        %v5645 = vmul.f32 %v5629, %v5629
        %v5646 = vmul.f32 %v5630, %v5630
        %v5647 = vmul.f32 %v5631, %v5631
        %v5648 = vmul.f32 %v5632, %v5632
        %v5649 = vmul.f32 %v5633, %v5633
        %v5650 = vmul.f32 %v5634, %v5634
        %v5651 = vmul.f32 %v5635, %v5635
        %v5652 = vmul.f32 %v5636, %v5636
        %v5653 = vmul.f32 %v5637, %v5637
        %v5654 = vmul.f32 %v5638, %v5638
        %v5655 = vsel %vm1061, %v5639, 0.0
        %5656 = vadd.xlane.f32.xlu0 %v5655
        %v5657 = vpop.xlane.xlu0 %5656
        %v5658 = vsel %vm1061, %v5640, 0.0
        %5659 = vadd.xlane.f32.xlu0 %v5658
        %v5660 = vpop.xlane.xlu0 %5659
        %v5661 = vsel %vm1061, %v5641, 0.0
        %5662 = vadd.xlane.f32.xlu0 %v5661
        %v5663 = vpop.xlane.xlu0 %5662
        %v5664 = vsel %vm1061, %v5642, 0.0
        %5665 = vadd.xlane.f32.xlu0 %v5664
        %v5666 = vpop.xlane.xlu0 %5665
        %v5667 = vsel %vm1061, %v5643, 0.0
        %5668 = vadd.xlane.f32.xlu0 %v5667
        %v5669 = vpop.xlane.xlu0 %5668
        %v5670 = vsel %vm1061, %v5644, 0.0
        %5671 = vadd.xlane.f32.xlu0 %v5670
        %v5672 = vpop.xlane.xlu0 %5671
        %v5673 = vsel %vm1061, %v5645, 0.0
        %5674 = vadd.xlane.f32.xlu0 %v5673
        %v5675 = vpop.xlane.xlu0 %5674
        %v5676 = vsel %vm1061, %v5646, 0.0
        %5677 = vadd.xlane.f32.xlu0 %v5676
        %v5678 = vpop.xlane.xlu0 %5677
        %v5679 = vsel %vm1061, %v5647, 0.0
        %5680 = vadd.xlane.f32.xlu0 %v5679
        %v5681 = vpop.xlane.xlu0 %5680
        %v5682 = vsel %vm1061, %v5648, 0.0
        %5683 = vadd.xlane.f32.xlu0 %v5682
        %v5684 = vpop.xlane.xlu0 %5683
        %v5685 = vsel %vm1061, %v5649, 0.0
        %5686 = vadd.xlane.f32.xlu0 %v5685
        %v5687 = vpop.xlane.xlu0 %5686
        %v5688 = vsel %vm1061, %v5650, 0.0
        %5689 = vadd.xlane.f32.xlu0 %v5688
        %v5690 = vpop.xlane.xlu0 %5689
        %v5691 = vsel %vm1061, %v5651, 0.0
        %5692 = vadd.xlane.f32.xlu0 %v5691
        %v5693 = vpop.xlane.xlu0 %5692
        %v5694 = vsel %vm1061, %v5652, 0.0
        %5695 = vadd.xlane.f32.xlu0 %v5694
        %v5696 = vpop.xlane.xlu0 %5695
        %v5697 = vsel %vm1061, %v5653, 0.0
        %5698 = vadd.xlane.f32.xlu0 %v5697
        %v5699 = vpop.xlane.xlu0 %5698
        %v5700 = vsel %vm1061, %v5654, 0.0
        %5701 = vadd.xlane.f32.xlu0 %v5700
        %v5702 = vpop.xlane.xlu0 %5701
        %v5703 = vmul.f32 %v5657, 0.015873017
        %v5704 = vmul.f32 %v5660, 0.015873017
        %v5705 = vmul.f32 %v5663, 0.015873017
        %v5706 = vmul.f32 %v5666, 0.015873017
        %v5707 = vmul.f32 %v5669, 0.015873017
        %v5708 = vmul.f32 %v5672, 0.015873017
        %v5709 = vmul.f32 %v5675, 0.015873017
        %v5710 = vmul.f32 %v5678, 0.015873017
        %v5711 = vmul.f32 %v5681, 0.015873017
        %v5712 = vmul.f32 %v5684, 0.015873017
        %v5713 = vmul.f32 %v5687, 0.015873017
        %v5714 = vmul.f32 %v5690, 0.015873017
        %v5715 = vmul.f32 %v5693, 0.015873017
        %v5716 = vmul.f32 %v5696, 0.015873017
        %v5717 = vmul.f32 %v5699, 0.015873017
        %v5718 = vmul.f32 %v5702, 0.015873017
        %v5719 = vrsqrt.pop %v5703
        %v5720 = vmul.f32 %v5703, %v5719
        %vm5721 = vcmp.eq.f32.partialorder %v5703, inf
        %v5722 = vsel %vm5721, %v5703, %v5720
        %vm5723 = vcmp.eq.f32.partialorder %v5703, 0.0
        %v5724 = vand.u32 %v5703, 2147483648
        %v5725 = vsel %vm5723, %v5724, %v5722
        %v5726 = vrsqrt.pop %v5704
        %v5727 = vmul.f32 %v5704, %v5726
        %vm5728 = vcmp.eq.f32.partialorder %v5704, inf
        %v5729 = vsel %vm5728, %v5704, %v5727
        %vm5730 = vcmp.eq.f32.partialorder %v5704, 0.0
        %v5731 = vand.u32 %v5704, 2147483648
        %v5732 = vsel %vm5730, %v5731, %v5729
        %v5733 = vrsqrt.pop %v5705
        %v5734 = vmul.f32 %v5705, %v5733
        %vm5735 = vcmp.eq.f32.partialorder %v5705, inf
        %v5736 = vsel %vm5735, %v5705, %v5734
        %vm5737 = vcmp.eq.f32.partialorder %v5705, 0.0
        %v5738 = vand.u32 %v5705, 2147483648
        %v5739 = vsel %vm5737, %v5738, %v5736
        %v5740 = vrsqrt.pop %v5706
        %v5741 = vmul.f32 %v5706, %v5740
        %vm5742 = vcmp.eq.f32.partialorder %v5706, inf
        %v5743 = vsel %vm5742, %v5706, %v5741
        %vm5744 = vcmp.eq.f32.partialorder %v5706, 0.0
        %v5745 = vand.u32 %v5706, 2147483648
        %v5746 = vsel %vm5744, %v5745, %v5743
        %v5747 = vrsqrt.pop %v5707
        %v5748 = vmul.f32 %v5707, %v5747
        %vm5749 = vcmp.eq.f32.partialorder %v5707, inf
        %v5750 = vsel %vm5749, %v5707, %v5748
        %vm5751 = vcmp.eq.f32.partialorder %v5707, 0.0
        %v5752 = vand.u32 %v5707, 2147483648
        %v5753 = vsel %vm5751, %v5752, %v5750
        %v5754 = vrsqrt.pop %v5708
        %v5755 = vmul.f32 %v5708, %v5754
        %vm5756 = vcmp.eq.f32.partialorder %v5708, inf
        %v5757 = vsel %vm5756, %v5708, %v5755
        %vm5758 = vcmp.eq.f32.partialorder %v5708, 0.0
        %v5759 = vand.u32 %v5708, 2147483648
        %v5760 = vsel %vm5758, %v5759, %v5757
        %v5761 = vrsqrt.pop %v5709
        %v5762 = vmul.f32 %v5709, %v5761
        %vm5763 = vcmp.eq.f32.partialorder %v5709, inf
        %v5764 = vsel %vm5763, %v5709, %v5762
        %vm5765 = vcmp.eq.f32.partialorder %v5709, 0.0
        %v5766 = vand.u32 %v5709, 2147483648
        %v5767 = vsel %vm5765, %v5766, %v5764
        %v5768 = vrsqrt.pop %v5710
        %v5769 = vmul.f32 %v5710, %v5768
        %vm5770 = vcmp.eq.f32.partialorder %v5710, inf
        %v5771 = vsel %vm5770, %v5710, %v5769
        %vm5772 = vcmp.eq.f32.partialorder %v5710, 0.0
        %v5773 = vand.u32 %v5710, 2147483648
        %v5774 = vsel %vm5772, %v5773, %v5771
        %v5775 = vrsqrt.pop %v5711
        %v5776 = vmul.f32 %v5711, %v5775
        %vm5777 = vcmp.eq.f32.partialorder %v5711, inf
        %v5778 = vsel %vm5777, %v5711, %v5776
        %vm5779 = vcmp.eq.f32.partialorder %v5711, 0.0
        %v5780 = vand.u32 %v5711, 2147483648
        %v5781 = vsel %vm5779, %v5780, %v5778
        %v5782 = vrsqrt.pop %v5712
        %v5783 = vmul.f32 %v5712, %v5782
        %vm5784 = vcmp.eq.f32.partialorder %v5712, inf
        %v5785 = vsel %vm5784, %v5712, %v5783
        %vm5786 = vcmp.eq.f32.partialorder %v5712, 0.0
        %v5787 = vand.u32 %v5712, 2147483648
        %v5788 = vsel %vm5786, %v5787, %v5785
        %v5789 = vrsqrt.pop %v5713
        %v5790 = vmul.f32 %v5713, %v5789
        %vm5791 = vcmp.eq.f32.partialorder %v5713, inf
        %v5792 = vsel %vm5791, %v5713, %v5790
        %vm5793 = vcmp.eq.f32.partialorder %v5713, 0.0
        %v5794 = vand.u32 %v5713, 2147483648
        %v5795 = vsel %vm5793, %v5794, %v5792
        %v5796 = vrsqrt.pop %v5714
        %v5797 = vmul.f32 %v5714, %v5796
        %vm5798 = vcmp.eq.f32.partialorder %v5714, inf
        %v5799 = vsel %vm5798, %v5714, %v5797
        %vm5800 = vcmp.eq.f32.partialorder %v5714, 0.0
        %v5801 = vand.u32 %v5714, 2147483648
        %v5802 = vsel %vm5800, %v5801, %v5799
        %v5803 = vrsqrt.pop %v5715
        %v5804 = vmul.f32 %v5715, %v5803
        %vm5805 = vcmp.eq.f32.partialorder %v5715, inf
        %v5806 = vsel %vm5805, %v5715, %v5804
        %vm5807 = vcmp.eq.f32.partialorder %v5715, 0.0
        %v5808 = vand.u32 %v5715, 2147483648
        %v5809 = vsel %vm5807, %v5808, %v5806
        %v5810 = vrsqrt.pop %v5716
        %v5811 = vmul.f32 %v5716, %v5810
        %vm5812 = vcmp.eq.f32.partialorder %v5716, inf
        %v5813 = vsel %vm5812, %v5716, %v5811
        %vm5814 = vcmp.eq.f32.partialorder %v5716, 0.0
        %v5815 = vand.u32 %v5716, 2147483648
        %v5816 = vsel %vm5814, %v5815, %v5813
        %v5817 = vrsqrt.pop %v5717
        %v5818 = vmul.f32 %v5717, %v5817
        %vm5819 = vcmp.eq.f32.partialorder %v5717, inf
        %v5820 = vsel %vm5819, %v5717, %v5818
        %vm5821 = vcmp.eq.f32.partialorder %v5717, 0.0
        %v5822 = vand.u32 %v5717, 2147483648
        %v5823 = vsel %vm5821, %v5822, %v5820
        %v5824 = vrsqrt.pop %v5718
        %v5825 = vmul.f32 %v5718, %v5824
        %vm5826 = vcmp.eq.f32.partialorder %v5718, inf
        %v5827 = vsel %vm5826, %v5718, %v5825
        %vm5828 = vcmp.eq.f32.partialorder %v5718, 0.0
        %v5829 = vand.u32 %v5718, 2147483648
        %v5830 = vsel %vm5828, %v5829, %v5827
        %v5831 = vmul.f32 %v5015, %v5623
        %v5832 = vmul.f32 %v5015, %v5624
        %v5833 = vmul.f32 %v5015, %v5625
        %v5834 = vmul.f32 %v5015, %v5626
        %v5835 = vmul.f32 %v5015, %v5627
        %v5836 = vmul.f32 %v5015, %v5628
        %v5837 = vmul.f32 %v5015, %v5629
        %v5838 = vmul.f32 %v5015, %v5630
        %v5839 = vmul.f32 %v5015, %v5631
        %v5840 = vmul.f32 %v5015, %v5632
        %v5841 = vmul.f32 %v5015, %v5633
        %v5842 = vmul.f32 %v5015, %v5634
        %v5843 = vmul.f32 %v5015, %v5635
        %v5844 = vmul.f32 %v5015, %v5636
        %v5845 = vmul.f32 %v5015, %v5637
        %v5846 = vmul.f32 %v5015, %v5638
        %v5847 = vadd.f32 %v5725, 1e-06
        %v5848 = vadd.f32 %v5732, 1e-06
        %v5849 = vadd.f32 %v5739, 1e-06
        %v5850 = vadd.f32 %v5746, 1e-06
        %v5851 = vadd.f32 %v5753, 1e-06
        %v5852 = vadd.f32 %v5760, 1e-06
        %v5853 = vadd.f32 %v5767, 1e-06
        %v5854 = vadd.f32 %v5774, 1e-06
        %v5855 = vadd.f32 %v5781, 1e-06
        %v5856 = vadd.f32 %v5788, 1e-06
        %v5857 = vadd.f32 %v5795, 1e-06
        %v5858 = vadd.f32 %v5802, 1e-06
        %v5859 = vadd.f32 %v5809, 1e-06
        %v5860 = vadd.f32 %v5816, 1e-06
        %v5861 = vadd.f32 %v5823, 1e-06
        %v5862 = vadd.f32 %v5830, 1e-06
        %v5863 = vrcp.pop %v5847
        %v5864 = vmul.f32 %v5831, %v5863
        %v5865 = vrcp.pop %v5848
        %v5866 = vmul.f32 %v5832, %v5865
        %v5867 = vrcp.pop %v5849
        %v5868 = vmul.f32 %v5833, %v5867
        %v5869 = vrcp.pop %v5850
        %v5870 = vmul.f32 %v5834, %v5869
        %v5871 = vrcp.pop %v5851
        %v5872 = vmul.f32 %v5835, %v5871
        %v5873 = vrcp.pop %v5852
        %v5874 = vmul.f32 %v5836, %v5873
        %v5875 = vrcp.pop %v5853
        %v5876 = vmul.f32 %v5837, %v5875
        %v5877 = vrcp.pop %v5854
        %v5878 = vmul.f32 %v5838, %v5877
        %v5879 = vrcp.pop %v5855
        %v5880 = vmul.f32 %v5839, %v5879
        %v5881 = vrcp.pop %v5856
        %v5882 = vmul.f32 %v5840, %v5881
        %v5883 = vrcp.pop %v5857
        %v5884 = vmul.f32 %v5841, %v5883
        %v5885 = vrcp.pop %v5858
        %v5886 = vmul.f32 %v5842, %v5885
        %v5887 = vrcp.pop %v5859
        %v5888 = vmul.f32 %v5843, %v5887
        %v5889 = vrcp.pop %v5860
        %v5890 = vmul.f32 %v5844, %v5889
        %v5891 = vrcp.pop %v5861
        %v5892 = vmul.f32 %v5845, %v5891
        %v5893 = vrcp.pop %v5862
        %v5894 = vmul.f32 %v5846, %v5893
        %v5895 = vadd.f32 %v5864, %v5083
        %v5896 = vadd.f32 %v5866, %v5083
        %v5897 = vadd.f32 %v5868, %v5083
        %v5898 = vadd.f32 %v5870, %v5083
        %v5899 = vadd.f32 %v5872, %v5083
        %v5900 = vadd.f32 %v5874, %v5083
        %v5901 = vadd.f32 %v5876, %v5083
        %v5902 = vadd.f32 %v5878, %v5083
        %v5903 = vadd.f32 %v5880, %v5083
        %v5904 = vadd.f32 %v5882, %v5083
        %v5905 = vadd.f32 %v5884, %v5083
        %v5906 = vadd.f32 %v5886, %v5083
        %v5907 = vadd.f32 %v5888, %v5083
        %v5908 = vadd.f32 %v5890, %v5083
        %v5909 = vadd.f32 %v5892, %v5083
        %v5910 = vadd.f32 %v5894, %v5083
        %v5911 = vld [vmem:[%s8] sm:$0xff]
        %v5912 = vld [vmem:[%s8 + $0x8] sm:$0xff]
        %v5913 = vld [vmem:[%s8 + $0x10] sm:$0xff]
        %v5914 = vld [vmem:[%s8 + $0x18] sm:$0xff]
        %v5915 = vld [vmem:[%s8 + $0x20] sm:$0xff]
        %v5916 = vld [vmem:[%s8 + $0x28] sm:$0xff]
        %v5917 = vld [vmem:[%s8 + $0x30] sm:$0xff]
        %v5918 = vld [vmem:[%s8 + $0x38] sm:$0xff]
        %v5919 = vld [vmem:[%s9] sm:$0x1]
        %v5921 = vlaneseq
        %v5922 = vshrl.u32 %v5921, 7
        %v5923 = vsub.s32 0, %v5922
        %v5924 = vrot.slane %v5919, %v5923
        %v5927 = vsel %vm1061, %v5895, 0
        %v5930 = vsel %vm1061, %v5896, 0
        %v5933 = vsel %vm1061, %v5897, 0
        %v5936 = vsel %vm1061, %v5898, 0
        %v5939 = vsel %vm1061, %v5899, 0
        %v5942 = vsel %vm1061, %v5900, 0
        %v5945 = vsel %vm1061, %v5901, 0
        %v5948 = vsel %vm1061, %v5902, 0
        %v5951 = vsel %vm1061, %v5903, 0
        %v5954 = vsel %vm1061, %v5904, 0
        %v5957 = vsel %vm1061, %v5905, 0
        %v5960 = vsel %vm1061, %v5906, 0
        %v5963 = vsel %vm1061, %v5907, 0
        %v5966 = vsel %vm1061, %v5908, 0
        %v5969 = vsel %vm1061, %v5909, 0
        %v5972 = vsel %vm1061, %v5910, 0
        %5974 = vmatprep.subr.mxu0 0.0
        %5975 = vmatpush1.msra.mxu0 %v5911
        %5976 = vmatprep.subr.mxu0 0.0
        %5977 = vmatpush1.msra.mxu0 %v5912
        %5978 = vmatprep.subr.mxu0 0.0
        %5979 = vmatpush1.msra.mxu0 %v5913
        %5980 = vmatprep.subr.mxu0 0.0
        %5981 = vmatpush1.msra.mxu0 %v5914
        %5982 = vmatprep.subr.mxu0 0.0
        %5983 = vmatpush1.msra.mxu0 %v5915
        %5984 = vmatprep.subr.mxu0 0.0
        %5985 = vmatpush1.msra.mxu0 %v5916
        %5986 = vmatprep.subr.mxu0 0.0
        %5987 = vmatpush1.msra.mxu0 %v5917
        %5988 = vmatprep.subr.mxu0 0.0
        %5989 = vmatpush1.msra.mxu0 %v5918
        %5990 = vmatprep.subr.mxu0 0.0
        %5991 = vmatpush1.msra.mxu0 0.0
        %5992 = vmatprep.subr.mxu0 0.0
        %5993 = vmatpush1.msra.mxu0 0.0
        %5994 = vmatprep.subr.mxu0 0.0
        %5995 = vmatpush1.msra.mxu0 0.0
        %5996 = vmatprep.subr.mxu0 0.0
        %5997 = vmatpush1.msra.mxu0 0.0
        %5998 = vmatprep.subr.mxu0 0.0
        %5999 = vmatpush1.msra.mxu0 0.0
        %6000 = vmatprep.subr.mxu0 0.0
        %6001 = vmatpush1.msra.mxu0 0.0
        %6002 = vmatprep.subr.mxu0 0.0
        %6003 = vmatpush1.msra.mxu0 0.0
        %6004 = vmatprep.subr.mxu0 0.0
        %6005 = vmatpush1.msra.mxu0 0.0
        %6006 = vmatprep.subr.mxu0 0.0
        %6007 = vmatpush1.msra.mxu0 0.0
        %6008 = vmatprep.subr.mxu0 0.0
        %6009 = vmatpush1.msra.mxu0 0.0
        %6010 = vmatprep.subr.mxu0 0.0
        %6011 = vmatpush1.msra.mxu0 0.0
        %6012 = vmatprep.subr.mxu0 0.0
        %6013 = vmatpush1.msra.mxu0 0.0
        %6014 = vmatprep.subr.mxu0 0.0
        %6015 = vmatpush1.msra.mxu0 0.0
        %6016 = vmatprep.subr.mxu0 0.0
        %6017 = vmatpush1.msra.mxu0 0.0
        %6018 = vmatprep.subr.mxu0 0.0
        %6019 = vmatpush1.msra.mxu0 0.0
        %6020 = vmatprep.subr.mxu0 0.0
        %6021 = vmatpush1.msra.mxu0 0.0
        %6022 = vmatprep.subr.mxu0 0.0
        %6023 = vmatpush1.msra.mxu0 0.0
        %6024 = vmatprep.subr.mxu0 0.0
        %6025 = vmatpush1.msra.mxu0 0.0
        %6026 = vmatprep.subr.mxu0 0.0
        %6027 = vmatpush1.msra.mxu0 0.0
        %6028 = vmatprep.subr.mxu0 0.0
        %6029 = vmatpush1.msra.mxu0 0.0
        %6030 = vmatprep.subr.mxu0 0.0
        %6031 = vmatpush1.msra.mxu0 0.0
        %6032 = vmatprep.subr.mxu0 0.0
        %6033 = vmatpush1.msra.mxu0 0.0
        %6034 = vmatprep.subr.mxu0 0.0
        %6035 = vmatpush1.msra.mxu0 0.0
        %6036 = vmatprep.subr.mxu0 0.0
        %6037 = vmatpush1.msra.mxu0 0.0
        %6038 = vmatprep.mubr.f32.mxu0 0.0
        %6039 = vmatmul.mubr.f32.gmra.mrb[0].mxu0 %v5927
        %v6040 = vpop.f32.mrb[0].mxu0
        %v6041 = vadd.f32 %v5924, %v6040
        %v6042 = vpop.f32.mrb[0].mxu0
        %6043 = vmatprep.mubr.f32.mxu0 0.0
        %6044 = vmatmul.mubr.f32.gmra.mrb[0].mxu0 %v5930
        %v6045 = vpop.f32.mrb[0].mxu0
        %v6046 = vadd.f32 %v5924, %v6045
        %v6047 = vpop.f32.mrb[0].mxu0
        %6048 = vmatprep.mubr.f32.mxu0 0.0
        %6049 = vmatmul.mubr.f32.gmra.mrb[0].mxu0 %v5933
        %v6050 = vpop.f32.mrb[0].mxu0
        %v6051 = vadd.f32 %v5924, %v6050
        %v6052 = vpop.f32.mrb[0].mxu0
        %6053 = vmatprep.mubr.f32.mxu0 0.0
        %6054 = vmatmul.mubr.f32.gmra.mrb[0].mxu0 %v5936
        %v6055 = vpop.f32.mrb[0].mxu0
        %v6056 = vadd.f32 %v5924, %v6055
        %v6057 = vpop.f32.mrb[0].mxu0
        %6058 = vmatprep.mubr.f32.mxu0 0.0
        %6059 = vmatmul.mubr.f32.gmra.mrb[0].mxu0 %v5939
        %v6060 = vpop.f32.mrb[0].mxu0
        %v6061 = vadd.f32 %v5924, %v6060
        %v6062 = vpop.f32.mrb[0].mxu0
        %6063 = vmatprep.mubr.f32.mxu0 0.0
        %6064 = vmatmul.mubr.f32.gmra.mrb[0].mxu0 %v5942
        %v6065 = vpop.f32.mrb[0].mxu0
        %v6066 = vadd.f32 %v5924, %v6065
        %v6067 = vpop.f32.mrb[0].mxu0
        %6068 = vmatprep.mubr.f32.mxu0 0.0
        %6069 = vmatmul.mubr.f32.gmra.mrb[0].mxu0 %v5945
        %v6070 = vpop.f32.mrb[0].mxu0
        %v6071 = vadd.f32 %v5924, %v6070
        %v6072 = vpop.f32.mrb[0].mxu0
        %6073 = vmatprep.mubr.f32.mxu0 0.0
        %6074 = vmatmul.mubr.f32.gmra.mrb[0].mxu0 %v5948
        %v6075 = vpop.f32.mrb[0].mxu0
        %v6076 = vadd.f32 %v5924, %v6075
        %v6077 = vpop.f32.mrb[0].mxu0
        %6078 = vmatprep.mubr.f32.mxu0 0.0
        %6079 = vmatmul.mubr.f32.gmra.mrb[0].mxu0 %v5951
        %v6080 = vpop.f32.mrb[0].mxu0
        %v6081 = vadd.f32 %v5924, %v6080
        %v6082 = vpop.f32.mrb[0].mxu0
        %6083 = vmatprep.mubr.f32.mxu0 0.0
        %6084 = vmatmul.mubr.f32.gmra.mrb[0].mxu0 %v5954
        %v6085 = vpop.f32.mrb[0].mxu0
        %v6086 = vadd.f32 %v5924, %v6085
        %v6087 = vpop.f32.mrb[0].mxu0
        %6088 = vmatprep.mubr.f32.mxu0 0.0
        %6089 = vmatmul.mubr.f32.gmra.mrb[0].mxu0 %v5957
        %v6090 = vpop.f32.mrb[0].mxu0
        %v6091 = vadd.f32 %v5924, %v6090
        %v6092 = vpop.f32.mrb[0].mxu0
        %6093 = vmatprep.mubr.f32.mxu0 0.0
        %6094 = vmatmul.mubr.f32.gmra.mrb[0].mxu0 %v5960
        %v6095 = vpop.f32.mrb[0].mxu0
        %v6096 = vadd.f32 %v5924, %v6095
        %v6097 = vpop.f32.mrb[0].mxu0
        %6098 = vmatprep.mubr.f32.mxu0 0.0
        %6099 = vmatmul.mubr.f32.gmra.mrb[0].mxu0 %v5963
        %v6100 = vpop.f32.mrb[0].mxu0
        %v6101 = vadd.f32 %v5924, %v6100
        %v6102 = vpop.f32.mrb[0].mxu0
        %6103 = vmatprep.mubr.f32.mxu0 0.0
        %6104 = vmatmul.mubr.f32.gmra.mrb[0].mxu0 %v5966
        %v6105 = vpop.f32.mrb[0].mxu0
        %v6106 = vadd.f32 %v5924, %v6105
        %v6107 = vpop.f32.mrb[0].mxu0
        %6108 = vmatprep.mubr.f32.mxu0 0.0
        %6109 = vmatmul.mubr.f32.gmra.mrb[0].mxu0 %v5969
        %v6110 = vpop.f32.mrb[0].mxu0
        %v6111 = vadd.f32 %v5924, %v6110
        %v6112 = vpop.f32.mrb[0].mxu0
        %6113 = vmatprep.mubr.f32.mxu0 0.0
        %6114 = vmatmul.mubr.f32.gmra.mrb[0].mxu0 %v5972
        %v6115 = vpop.f32.mrb[0].mxu0
        %v6116 = vadd.f32 %v5924, %v6115
        %v6117 = vpop.f32.mrb[0].mxu0
        %6118 = vdwg.mxu0
        %v6119 = vmax.f32 %v6041, 0.0
        %v6120 = vmax.f32 %v6046, 0.0
        %v6121 = vmax.f32 %v6051, 0.0
        %v6122 = vmax.f32 %v6056, 0.0
        %v6123 = vmax.f32 %v6061, 0.0
        %v6124 = vmax.f32 %v6066, 0.0
        %v6125 = vmax.f32 %v6071, 0.0
        %v6126 = vmax.f32 %v6076, 0.0
        %v6127 = vmax.f32 %v6081, 0.0
        %v6128 = vmax.f32 %v6086, 0.0
        %v6129 = vmax.f32 %v6091, 0.0
        %v6130 = vmax.f32 %v6096, 0.0
        %v6131 = vmax.f32 %v6101, 0.0
        %v6132 = vmax.f32 %v6106, 0.0
        %v6133 = vmax.f32 %v6111, 0.0
        %v6134 = vmax.f32 %v6116, 0.0
        %v6135 = vand.u32 2147483647, %v6041
        %v6136 = vand.u32 2147483647, %v6046
        %v6137 = vand.u32 2147483647, %v6051
        %v6138 = vand.u32 2147483647, %v6056
        %v6139 = vand.u32 2147483647, %v6061
        %v6140 = vand.u32 2147483647, %v6066
        %v6141 = vand.u32 2147483647, %v6071
        %v6142 = vand.u32 2147483647, %v6076
        %v6143 = vand.u32 2147483647, %v6081
        %v6144 = vand.u32 2147483647, %v6086
        %v6145 = vand.u32 2147483647, %v6091
        %v6146 = vand.u32 2147483647, %v6096
        %v6147 = vand.u32 2147483647, %v6101
        %v6148 = vand.u32 2147483647, %v6106
        %v6149 = vand.u32 2147483647, %v6111
        %v6150 = vand.u32 2147483647, %v6116
        %v6151 = vsub.f32 0.0, %v6135
        %v6152 = vsub.f32 0.0, %v6136
        %v6153 = vsub.f32 0.0, %v6137
        %v6154 = vsub.f32 0.0, %v6138
        %v6155 = vsub.f32 0.0, %v6139
        %v6156 = vsub.f32 0.0, %v6140
        %v6157 = vsub.f32 0.0, %v6141
        %v6158 = vsub.f32 0.0, %v6142
        %v6159 = vsub.f32 0.0, %v6143
        %v6160 = vsub.f32 0.0, %v6144
        %v6161 = vsub.f32 0.0, %v6145
        %v6162 = vsub.f32 0.0, %v6146
        %v6163 = vsub.f32 0.0, %v6147
        %v6164 = vsub.f32 0.0, %v6148
        %v6165 = vsub.f32 0.0, %v6149
        %v6166 = vsub.f32 0.0, %v6150
        %v6167 = vmul.f32 %v6151, 1.442695
        %v6168 = vpow.pop %v6167
        %v6169 = vmul.f32 %v6152, 1.442695
        %v6170 = vpow.pop %v6169
        %v6171 = vmul.f32 %v6153, 1.442695
        %v6172 = vpow.pop %v6171
        %v6173 = vmul.f32 %v6154, 1.442695
        %v6174 = vpow.pop %v6173
        %v6175 = vmul.f32 %v6155, 1.442695
        %v6176 = vpow.pop %v6175
        %v6177 = vmul.f32 %v6156, 1.442695
        %v6178 = vpow.pop %v6177
        %v6179 = vmul.f32 %v6157, 1.442695
        %v6180 = vpow.pop %v6179
        %v6181 = vmul.f32 %v6158, 1.442695
        %v6182 = vpow.pop %v6181
        %v6183 = vmul.f32 %v6159, 1.442695
        %v6184 = vpow.pop %v6183
        %v6185 = vmul.f32 %v6160, 1.442695
        %v6186 = vpow.pop %v6185
        %v6187 = vmul.f32 %v6161, 1.442695
        %v6188 = vpow.pop %v6187
        %v6189 = vmul.f32 %v6162, 1.442695
        %v6190 = vpow.pop %v6189
        %v6191 = vmul.f32 %v6163, 1.442695
        %v6192 = vpow.pop %v6191
        %v6193 = vmul.f32 %v6164, 1.442695
        %v6194 = vpow.pop %v6193
        %v6195 = vmul.f32 %v6165, 1.442695
        %v6196 = vpow.pop %v6195
        %v6197 = vmul.f32 %v6166, 1.442695
        %v6198 = vpow.pop %v6197
        %v6199 = vadd.f32 %v6168, 1.0
        %v6200 = vadd.f32 %v6170, 1.0
        %v6201 = vadd.f32 %v6172, 1.0
        %v6202 = vadd.f32 %v6174, 1.0
        %v6203 = vadd.f32 %v6176, 1.0
        %v6204 = vadd.f32 %v6178, 1.0
        %v6205 = vadd.f32 %v6180, 1.0
        %v6206 = vadd.f32 %v6182, 1.0
        %v6207 = vadd.f32 %v6184, 1.0
        %v6208 = vadd.f32 %v6186, 1.0
        %v6209 = vadd.f32 %v6188, 1.0
        %v6210 = vadd.f32 %v6190, 1.0
        %v6211 = vadd.f32 %v6192, 1.0
        %v6212 = vadd.f32 %v6194, 1.0
        %v6213 = vadd.f32 %v6196, 1.0
        %v6214 = vadd.f32 %v6198, 1.0
        %v6215 = vlog2.pop %v6199
        %v6216 = vmul.f32 %v6215, 0.6931472
        %v6217 = vlog2.pop %v6200
        %v6218 = vmul.f32 %v6217, 0.6931472
        %v6219 = vlog2.pop %v6201
        %v6220 = vmul.f32 %v6219, 0.6931472
        %v6221 = vlog2.pop %v6202
        %v6222 = vmul.f32 %v6221, 0.6931472
        %v6223 = vlog2.pop %v6203
        %v6224 = vmul.f32 %v6223, 0.6931472
        %v6225 = vlog2.pop %v6204
        %v6226 = vmul.f32 %v6225, 0.6931472
        %v6227 = vlog2.pop %v6205
        %v6228 = vmul.f32 %v6227, 0.6931472
        %v6229 = vlog2.pop %v6206
        %v6230 = vmul.f32 %v6229, 0.6931472
        %v6231 = vlog2.pop %v6207
        %v6232 = vmul.f32 %v6231, 0.6931472
        %v6233 = vlog2.pop %v6208
        %v6234 = vmul.f32 %v6233, 0.6931472
        %v6235 = vlog2.pop %v6209
        %v6236 = vmul.f32 %v6235, 0.6931472
        %v6237 = vlog2.pop %v6210
        %v6238 = vmul.f32 %v6237, 0.6931472
        %v6239 = vlog2.pop %v6211
        %v6240 = vmul.f32 %v6239, 0.6931472
        %v6241 = vlog2.pop %v6212
        %v6242 = vmul.f32 %v6241, 0.6931472
        %v6243 = vlog2.pop %v6213
        %v6244 = vmul.f32 %v6243, 0.6931472
        %v6245 = vlog2.pop %v6214
        %v6246 = vmul.f32 %v6245, 0.6931472
        %v6247 = vadd.f32 %v6119, %v6216
        %v6248 = vadd.f32 %v6120, %v6218
        %v6249 = vadd.f32 %v6121, %v6220
        %v6250 = vadd.f32 %v6122, %v6222
        %v6251 = vadd.f32 %v6123, %v6224
        %v6252 = vadd.f32 %v6124, %v6226
        %v6253 = vadd.f32 %v6125, %v6228
        %v6254 = vadd.f32 %v6126, %v6230
        %v6255 = vadd.f32 %v6127, %v6232
        %v6256 = vadd.f32 %v6128, %v6234
        %v6257 = vadd.f32 %v6129, %v6236
        %v6258 = vadd.f32 %v6130, %v6238
        %v6259 = vadd.f32 %v6131, %v6240
        %v6260 = vadd.f32 %v6132, %v6242
        %v6261 = vadd.f32 %v6133, %v6244
        %v6262 = vadd.f32 %v6134, %v6246
        %vm6263 = vcmask 64512
        %6264 = vst.msk [vmem:[%s718] sm:$0xff] %vm6263, %v6247
        %6265 = vst.msk [vmem:[%s718 + $0x8] sm:$0xff] %vm6263, %v6248
        %6266 = vst.msk [vmem:[%s718 + $0x10] sm:$0xff] %vm6263, %v6249
        %6267 = vst.msk [vmem:[%s718 + $0x18] sm:$0xff] %vm6263, %v6250
        %6268 = vst.msk [vmem:[%s718 + $0x20] sm:$0xff] %vm6263, %v6251
        %6269 = vst.msk [vmem:[%s718 + $0x28] sm:$0xff] %vm6263, %v6252
        %6270 = vst.msk [vmem:[%s718 + $0x30] sm:$0xff] %vm6263, %v6253
        %6271 = vst.msk [vmem:[%s718 + $0x38] sm:$0xff] %vm6263, %v6254
        %6272 = vst.msk [vmem:[%s718 + $0x40] sm:$0xff] %vm6263, %v6255
        %6273 = vst.msk [vmem:[%s718 + $0x48] sm:$0xff] %vm6263, %v6256
        %6274 = vst.msk [vmem:[%s718 + $0x50] sm:$0xff] %vm6263, %v6257
        %6275 = vst.msk [vmem:[%s718 + $0x58] sm:$0xff] %vm6263, %v6258
        %6276 = vst.msk [vmem:[%s718 + $0x60] sm:$0xff] %vm6263, %v6259
        %6277 = vst.msk [vmem:[%s718 + $0x68] sm:$0xff] %vm6263, %v6260
        %6278 = vst.msk [vmem:[%s718 + $0x70] sm:$0xff] %vm6263, %v6261
        %6279 = vst.msk [vmem:[%s718 + $0x78] sm:$0xff] %vm6263, %v6262
        %s6280 = smul.u32 16, %s21
        %p6281 = scmp.lt.s32.totalorder %s6280, 47
        %s6282 = scalar_select %p6281, %s6280, 47
        %s6283 = smul.addr %s6282, 8
        %s6284 = scalar_lea.vmem %s10, %s6283
        // Predicated region
        $region102: #{tpu_custom_call.1} parent=96 // pred_check
          %p6285 = pneg %p254
        $region103: #{tpu_custom_call.1} parent=96 // pred_check_branch
          %6287 = sbr.rel (%p6285) target = $region105
        $region104: #{tpu_custom_call.1} parent=96 // pred_region
          %s6288 = smul.u32 16, %s21
        $region105: #{tpu_custom_call.1} parent=96 // pred_fallthru
          _
      $region97: #{tpu_custom_call.1} parent=5 // pred_fallthru
        _
      %p6289 = scmp.le.s32.totalorder 2, %s16
      // Predicated region
      $region106: #{tpu_custom_call.1} parent=5 // pred_check
        %p6290 = pneg %p6289
      $region107: #{tpu_custom_call.1} parent=5 // pred_check_branch
        %6292 = sbr.rel (%p6290) target = $region109
      $region108: #{tpu_custom_call.1} parent=5 // pred_region
        %s6293 = ssub.s32 %s16, 2
        // Predicated region
        $region110: #{tpu_custom_call.1} parent=108 // pred_check
          %p6294 = pneg %p260
        $region111: #{tpu_custom_call.1} parent=108 // pred_check_branch
          %6296 = sbr.rel (%p6294) target = $region113
        $region112: #{tpu_custom_call.1} parent=108 // pred_region
          %s6297 = smul.u32 16, %s22
          %p6298 = scmp.lt.s32.totalorder %s6297, 47
          %s6299 = scalar_select %p6298, %s6297, 47
          %s6300 = smul.addr %s6299, 8
          %s6301 = scalar_lea.vmem %s10, %s6300
        $region113: #{tpu_custom_call.1} parent=108 // pred_fallthru
          _
      $region109: #{tpu_custom_call.1} parent=5 // pred_fallthru
        _
    $region6: #{tpu_custom_call.1} parent=1 // loop_footer
      %s20 = sadd.s32 1, %s16
    $region7: #{tpu_custom_call.1} parent=1 // loop_footer_branch
      %15 = sbr.rel target = $region3
    $region8: #{tpu_custom_call.1} parent=1 // loop_exit
      _

</llo_original>
